<compile_context>
chip_gen: v5e
topology: v5e:2x2
jax: 0.10.0
libtpu: 0.0.40
codegen_flags: <defaults>
</compile_context>

<pallas_src>
import functools

import jax
import jax.numpy as jnp
from jax import lax
from jax.experimental import pallas as pl
from jax.experimental.pallas import tpu as pltpu


def _basic_block_kernel(x_ref, w1_ref, w2_ref, b_ref, out_ref, xpad, col,
                        *, H, W, C):
    """Fused: relu(bn2(conv2(relu(bn1(conv1(x))))) + x) for one batch element."""
    cdtype = xpad.dtype
    x_raw = x_ref[0]                                   # (H, W, C), input dtype

    # Zero the padded scratch; only the interior is rewritten afterwards, so the
    # 1-pixel halo stays zero for both convolutions.
    xpad[...] = jnp.zeros((H + 2, W + 2, C), cdtype)

    def conv_bn(w_ref, bias_row):
        # im2col: col[h, w, (dh*3+dw)*C + ci] = xpad[h+dh, w+dw, ci]
        for dh in range(3):
            for dw in range(3):
                t = dh * 3 + dw
                col[:, :, t * C:(t + 1) * C] = xpad[dh:dh + H, dw:dw + W, :]
        # Single deep-K contraction (K = 9*C) on the MXU, f32 accumulation.
        y = jnp.einsum('hwk,kc->hwc', col[...], w_ref[...],
                       preferred_element_type=jnp.float32)
        # BN scale is already folded into the weights; add the folded bias.
        return y + b_ref[bias_row]

    # ---- conv1 -> bn1 -> relu (intermediate never leaves VMEM) ----
    xpad[1:H + 1, 1:W + 1, :] = x_raw.astype(cdtype)
    y1 = jnp.maximum(conv_bn(w1_ref, 0), 0.0)

    # ---- conv2 -> bn2 -> (+identity) -> relu ----
    xpad[1:H + 1, 1:W + 1, :] = y1.astype(cdtype)
    y2 = conv_bn(w2_ref, 1) + x_raw.astype(jnp.float32)
    y2 = jnp.maximum(y2, 0.0)

    out_ref[0] = y2.astype(out_ref.dtype)


def _basic_block_pallas(x_nhwc, w1_eff, w2_eff, bias2):
    """Single pallas_call for the full BasicBlock (identity shortcut)."""
    N, H, W, C = x_nhwc.shape
    K = w1_eff.shape[0]                                # 9 * C

    kernel = functools.partial(_basic_block_kernel, H=H, W=W, C=C)

    return pl.pallas_call(
        kernel,
        out_shape=jax.ShapeDtypeStruct((N, H, W, C), x_nhwc.dtype),
        grid=(N,),
        in_specs=[
            pl.BlockSpec((1, H, W, C), lambda n: (n, 0, 0, 0)),   # x
            pl.BlockSpec((K, C), lambda n: (0, 0)),               # w1 (scale-folded)
            pl.BlockSpec((K, C), lambda n: (0, 0)),               # w2 (scale-folded)
            pl.BlockSpec((2, C), lambda n: (0, 0)),               # [bias1; bias2]
        ],
        out_specs=pl.BlockSpec((1, H, W, C), lambda n: (n, 0, 0, 0)),
        scratch_shapes=[
            pltpu.VMEM((H + 2, W + 2, C), x_nhwc.dtype),          # padded activation
            pltpu.VMEM((H, W, 9 * C), x_nhwc.dtype),              # im2col buffer
        ],
        compiler_params=pltpu.CompilerParams(
            dimension_semantics=("parallel",)),
    )(x_nhwc, w1_eff, w2_eff, bias2)


def _bn_fold(gamma, beta, mean, var, eps=1e-5):
    scale = gamma / jnp.sqrt(var + eps)
    bias = beta - mean * scale
    return scale, bias


def basic_block_forward(x_nchw, params):
    """BasicBlock forward (stride=1, downsample=None), NCHW in/out like PyTorch."""
    x = jnp.transpose(x_nchw, (0, 2, 3, 1))            # NCHW -> NHWC
    N, H, W, C = x.shape
    assert params['w1'].shape == (3, 3, C, C), "identity shortcut needs Cin == Cout"

    s1, b1 = _bn_fold(params['gamma1'], params['beta1'],
                      params['mean1'], params['var1'])
    s2, b2 = _bn_fold(params['gamma2'], params['beta2'],
                      params['mean2'], params['var2'])

    # Fold BN scale into conv weights and flatten to the im2col layout
    # (row index = (dh*3 + dw)*Cin + ci, matching the in-kernel col ordering).
    w1_eff = (params['w1'] * s1).reshape(9 * C, C).astype(x.dtype)
    w2_eff = (params['w2'] * s2).reshape(9 * C, C).astype(x.dtype)
    bias2 = jnp.stack([b1, b2]).astype(jnp.float32)    # (2, C)

    out = _basic_block_pallas(x, w1_eff, w2_eff, bias2)
    return jnp.transpose(out, (0, 3, 1, 2))            # NHWC -> NCHW


def _reference_forward(x_nchw, params):
    """Pure-JAX reference (lax.conv) for correctness check."""
    def conv(x_nhwc, w_hwio):
        return lax.conv_general_dilated(
            x_nhwc, w_hwio, window_strides=(1, 1), padding=((1, 1), (1, 1)),
            dimension_numbers=('NHWC', 'HWIO', 'NHWC'))

    x = jnp.transpose(x_nchw, (0, 2, 3, 1))
    s1, b1 = _bn_fold(params['gamma1'], params['beta1'],
                      params['mean1'], params['var1'])
    s2, b2 = _bn_fold(params['gamma2'], params['beta2'],
                      params['mean2'], params['var2'])
    out = jnp.maximum(conv(x, params['w1']) * s1 + b1, 0.0)
    out = conv(out, params['w2']) * s2 + b2 + x
    out = jnp.maximum(out, 0.0)
    return jnp.transpose(out, (0, 3, 1, 2))


def _init_params(key, planes):
    ks = jax.random.split(key, 8)
    return {
        # conv weights stored directly in HWIO layout.
        'w1': jax.random.normal(ks[0], (3, 3, planes, planes), jnp.float32) * 0.1,
        'w2': jax.random.normal(ks[1], (3, 3, planes, planes), jnp.float32) * 0.1,
        # BatchNorm (inference mode: running stats folded into scale/bias).
        'gamma1': 1.0 + 0.1 * jax.random.normal(ks[2], (planes,), jnp.float32),
        'beta1': 0.1 * jax.random.normal(ks[3], (planes,), jnp.float32),
        'mean1': 0.05 * jax.random.normal(ks[4], (planes,), jnp.float32),
        'var1': 1.0 + 0.1 * jnp.abs(jax.random.normal(ks[5], (planes,), jnp.float32)),
        'gamma2': 1.0 + 0.1 * jax.random.normal(ks[6], (planes,), jnp.float32),
        'beta2': 0.1 * jax.random.normal(ks[7], (planes,), jnp.float32),
        'mean2': 0.05 * jax.random.normal(ks[2], (planes,), jnp.float32),
        'var2': 1.0 + 0.1 * jnp.abs(jax.random.normal(ks[3], (planes,), jnp.float32)),
    }


if __name__ == "__main__":
    key = jax.random.PRNGKey(0)
    k_x, k_p = jax.random.split(key)

    N, C, H, W = 2, 4, 16, 16            # inplanes == planes == 4, stride=1
    x = jax.random.normal(k_x, (N, C, H, W), jnp.float32)
    params = _init_params(k_p, C)

    out = basic_block_forward(x, params)
    out = jax.block_until_ready(out)

    ref = _reference_forward(x, params)
    assert out.shape == (N, C, H, W)
    assert jnp.allclose(out, ref, atol=1e-4, rtol=1e-4), "mismatch vs reference"

    print("KERNEL_OK")
</pallas_src>

<mosaic_0001>
module attributes {stable_mosaic.version = 11 : i64} {
  func.func @_basic_block_kernel(%arg0: i32, %arg1: memref<1x16x16x4xf32, #tpu.memory_space<vmem>>, %arg2: memref<36x4xf32, #tpu.memory_space<vmem>>, %arg3: memref<36x4xf32, #tpu.memory_space<vmem>>, %arg4: memref<2x4xf32, #tpu.memory_space<vmem>>, %arg5: memref<1x16x16x4xf32, #tpu.memory_space<vmem>>, %arg6: memref<18x18x4xf32, #tpu.memory_space<vmem>>, %arg7: memref<16x16x36xf32, #tpu.memory_space<vmem>>) attributes {dimension_semantics = [#tpu.dimension_semantics<parallel>], iteration_bounds = array<i64: 2>, scalar_prefetch = 0 : i64, scratch_operands = 2 : i64, tpu.core_type = #tpu.core_type<tc>, window_params = [{transform_indices = @transform_0, window_bounds = array<i64: 1, 16, 16, 4>}, {pipeline_mode = #tpu.pipeline_mode<synchronous>, transform_indices = @transform_1, window_bounds = array<i64: 36, 4>}, {pipeline_mode = #tpu.pipeline_mode<synchronous>, transform_indices = @transform_2, window_bounds = array<i64: 36, 4>}, {pipeline_mode = #tpu.pipeline_mode<synchronous>, transform_indices = @transform_3, window_bounds = array<i64: 2, 4>}, {transform_indices = @transform_4, window_bounds = array<i64: 1, 16, 16, 4>}]} {
    %c0 = arith.constant 0 : index
    %c0_0 = arith.constant 0 : index
    %c0_1 = arith.constant 0 : index
    %c0_2 = arith.constant 0 : index
    %0 = vector.load %arg1[%c0, %c0_0, %c0_1, %c0_2] : memref<1x16x16x4xf32, #tpu.memory_space<vmem>>, vector<1x16x16x4xf32>
    %1 = vector.shape_cast %0 : vector<1x16x16x4xf32> to vector<16x16x4xf32>
    %cst = arith.constant 0.000000e+00 : f32
    %2 = vector.broadcast %cst : f32 to vector<18x18x4xf32>
    %c0_3 = arith.constant 0 : index
    %c0_4 = arith.constant 0 : index
    %c0_5 = arith.constant 0 : index
    %3 = vector.load %arg6[%c0_3, %c0_4, %c0_5] : memref<18x18x4xf32, #tpu.memory_space<vmem>>, vector<18x18x4xf32>
    tpu.vector_store %arg6[%c0_3, %c0_4, %c0_5], %2 {strides = array<i32>} : memref<18x18x4xf32, #tpu.memory_space<vmem>>, vector<18x18x4xf32>,
    %c1 = arith.constant 1 : index
    %c1_6 = arith.constant 1 : index
    %c0_7 = arith.constant 0 : index
    %4 = vector.load %arg6[%c1, %c1_6, %c0_7] : memref<18x18x4xf32, #tpu.memory_space<vmem>>, vector<16x16x4xf32>
    tpu.vector_store %arg6[%c1, %c1_6, %c0_7], %1 {strides = array<i32>} : memref<18x18x4xf32, #tpu.memory_space<vmem>>, vector<16x16x4xf32>,
    %c0_8 = arith.constant 0 : index
    %c0_9 = arith.constant 0 : index
    %c0_10 = arith.constant 0 : index
    %5 = vector.load %arg6[%c0_8, %c0_9, %c0_10] : memref<18x18x4xf32, #tpu.memory_space<vmem>>, vector<16x16x4xf32>
    %c0_11 = arith.constant 0 : index
    %c0_12 = arith.constant 0 : index
    %c0_13 = arith.constant 0 : index
    %6 = vector.load %arg7[%c0_11, %c0_12, %c0_13] : memref<16x16x36xf32, #tpu.memory_space<vmem>>, vector<16x16x4xf32>
    tpu.vector_store %arg7[%c0_11, %c0_12, %c0_13], %5 {strides = array<i32>} : memref<16x16x36xf32, #tpu.memory_space<vmem>>, vector<16x16x4xf32>,
    %c0_14 = arith.constant 0 : index
    %c1_15 = arith.constant 1 : index
    %c0_16 = arith.constant 0 : index
    %7 = vector.load %arg6[%c0_14, %c1_15, %c0_16] : memref<18x18x4xf32, #tpu.memory_space<vmem>>, vector<16x16x4xf32>
    %c0_17 = arith.constant 0 : index
    %c0_18 = arith.constant 0 : index
    %c4 = arith.constant 4 : index
    %8 = vector.load %arg7[%c0_17, %c0_18, %c4] : memref<16x16x36xf32, #tpu.memory_space<vmem>>, vector<16x16x4xf32>
    tpu.vector_store %arg7[%c0_17, %c0_18, %c4], %7 {strides = array<i32>} : memref<16x16x36xf32, #tpu.memory_space<vmem>>, vector<16x16x4xf32>,
    %c0_19 = arith.constant 0 : index
    %c2 = arith.constant 2 : index
    %c0_20 = arith.constant 0 : index
    %9 = vector.load %arg6[%c0_19, %c2, %c0_20] : memref<18x18x4xf32, #tpu.memory_space<vmem>>, vector<16x16x4xf32>
    %c0_21 = arith.constant 0 : index
    %c0_22 = arith.constant 0 : index
    %c8 = arith.constant 8 : index
    %10 = vector.load %arg7[%c0_21, %c0_22, %c8] : memref<16x16x36xf32, #tpu.memory_space<vmem>>, vector<16x16x4xf32>
    tpu.vector_store %arg7[%c0_21, %c0_22, %c8], %9 {strides = array<i32>} : memref<16x16x36xf32, #tpu.memory_space<vmem>>, vector<16x16x4xf32>,
    %c1_23 = arith.constant 1 : index
    %c0_24 = arith.constant 0 : index
    %c0_25 = arith.constant 0 : index
    %11 = vector.load %arg6[%c1_23, %c0_24, %c0_25] : memref<18x18x4xf32, #tpu.memory_space<vmem>>, vector<16x16x4xf32>
    %c0_26 = arith.constant 0 : index
    %c0_27 = arith.constant 0 : index
    %c12 = arith.constant 12 : index
    %12 = vector.load %arg7[%c0_26, %c0_27, %c12] : memref<16x16x36xf32, #tpu.memory_space<vmem>>, vector<16x16x4xf32>
    tpu.vector_store %arg7[%c0_26, %c0_27, %c12], %11 {strides = array<i32>} : memref<16x16x36xf32, #tpu.memory_space<vmem>>, vector<16x16x4xf32>,
    %c1_28 = arith.constant 1 : index
    %c1_29 = arith.constant 1 : index
    %c0_30 = arith.constant 0 : index
    %13 = vector.load %arg6[%c1_28, %c1_29, %c0_30] : memref<18x18x4xf32, #tpu.memory_space<vmem>>, vector<16x16x4xf32>
    %c0_31 = arith.constant 0 : index
    %c0_32 = arith.constant 0 : index
    %c16 = arith.constant 16 : index
    %14 = vector.load %arg7[%c0_31, %c0_32, %c16] : memref<16x16x36xf32, #tpu.memory_space<vmem>>, vector<16x16x4xf32>
    tpu.vector_store %arg7[%c0_31, %c0_32, %c16], %13 {strides = array<i32>} : memref<16x16x36xf32, #tpu.memory_space<vmem>>, vector<16x16x4xf32>,
    %c1_33 = arith.constant 1 : index
    %c2_34 = arith.constant 2 : index
    %c0_35 = arith.constant 0 : index
    %15 = vector.load %arg6[%c1_33, %c2_34, %c0_35] : memref<18x18x4xf32, #tpu.memory_space<vmem>>, vector<16x16x4xf32>
    %c0_36 = arith.constant 0 : index
    %c0_37 = arith.constant 0 : index
    %c20 = arith.constant 20 : index
    %16 = vector.load %arg7[%c0_36, %c0_37, %c20] : memref<16x16x36xf32, #tpu.memory_space<vmem>>, vector<16x16x4xf32>
    tpu.vector_store %arg7[%c0_36, %c0_37, %c20], %15 {strides = array<i32>} : memref<16x16x36xf32, #tpu.memory_space<vmem>>, vector<16x16x4xf32>,
    %c2_38 = arith.constant 2 : index
    %c0_39 = arith.constant 0 : index
    %c0_40 = arith.constant 0 : index
    %17 = vector.load %arg6[%c2_38, %c0_39, %c0_40] : memref<18x18x4xf32, #tpu.memory_space<vmem>>, vector<16x16x4xf32>
    %c0_41 = arith.constant 0 : index
    %c0_42 = arith.constant 0 : index
    %c24 = arith.constant 24 : index
    %18 = vector.load %arg7[%c0_41, %c0_42, %c24] : memref<16x16x36xf32, #tpu.memory_space<vmem>>, vector<16x16x4xf32>
    tpu.vector_store %arg7[%c0_41, %c0_42, %c24], %17 {strides = array<i32>} : memref<16x16x36xf32, #tpu.memory_space<vmem>>, vector<16x16x4xf32>,
    %c2_43 = arith.constant 2 : index
    %c1_44 = arith.constant 1 : index
    %c0_45 = arith.constant 0 : index
    %19 = vector.load %arg6[%c2_43, %c1_44, %c0_45] : memref<18x18x4xf32, #tpu.memory_space<vmem>>, vector<16x16x4xf32>
    %c0_46 = arith.constant 0 : index
    %c0_47 = arith.constant 0 : index
    %c28 = arith.constant 28 : index
    %20 = vector.load %arg7[%c0_46, %c0_47, %c28] : memref<16x16x36xf32, #tpu.memory_space<vmem>>, vector<16x16x4xf32>
    tpu.vector_store %arg7[%c0_46, %c0_47, %c28], %19 {strides = array<i32>} : memref<16x16x36xf32, #tpu.memory_space<vmem>>, vector<16x16x4xf32>,
    %c2_48 = arith.constant 2 : index
    %c2_49 = arith.constant 2 : index
    %c0_50 = arith.constant 0 : index
    %21 = vector.load %arg6[%c2_48, %c2_49, %c0_50] : memref<18x18x4xf32, #tpu.memory_space<vmem>>, vector<16x16x4xf32>
    %c0_51 = arith.constant 0 : index
    %c0_52 = arith.constant 0 : index
    %c32 = arith.constant 32 : index
    %22 = vector.load %arg7[%c0_51, %c0_52, %c32] : memref<16x16x36xf32, #tpu.memory_space<vmem>>, vector<16x16x4xf32>
    tpu.vector_store %arg7[%c0_51, %c0_52, %c32], %21 {strides = array<i32>} : memref<16x16x36xf32, #tpu.memory_space<vmem>>, vector<16x16x4xf32>,
    %c0_53 = arith.constant 0 : index
    %c0_54 = arith.constant 0 : index
    %c0_55 = arith.constant 0 : index
    %23 = vector.load %arg7[%c0_53, %c0_54, %c0_55] : memref<16x16x36xf32, #tpu.memory_space<vmem>>, vector<16x16x36xf32>
    %c0_56 = arith.constant 0 : index
    %c0_57 = arith.constant 0 : index
    %24 = vector.load %arg2[%c0_56, %c0_57] : memref<36x4xf32, #tpu.memory_space<vmem>>, vector<36x4xf32>
    "tpu.trace_start"() <{level = 10 : i32, message = "hwk,kc->hwc"}> : () -> ()
    %cst_58 = arith.constant dense<0.000000e+00> : vector<16x16x4xf32>
    %25 = tpu.matmul %23, %24, %cst_58 {dimension_numbers = #tpu.dot_dimension_numbers<[2], [0], [0, 1], [1], [0, 0, 0, 1, 1, 1], [], []>} : vector<16x16x36xf32>, vector<36x4xf32>, vector<16x16x4xf32> -> vector<16x16x4xf32>
    "tpu.trace_stop"() : () -> ()
    %c0_59 = arith.constant 0 : index
    %c0_60 = arith.constant 0 : index
    %26 = vector.load %arg4[%c0_59, %c0_60] : memref<2x4xf32, #tpu.memory_space<vmem>>, vector<1x4xf32>
    %27 = vector.shape_cast %26 : vector<1x4xf32> to vector<4xf32>
    %28 = vector.shape_cast %27 : vector<4xf32> to vector<1x1x4xf32>
    %29 = vector.broadcast %28 : vector<1x1x4xf32> to vector<16x16x4xf32>
    %30 = arith.addf %25, %29 : vector<16x16x4xf32>
    %cst_61 = arith.constant 0.000000e+00 : f32
    %31 = vector.broadcast %cst_61 : f32 to vector<16x16x4xf32>
    %32 = arith.maximumf %30, %31 : vector<16x16x4xf32>
    %c1_62 = arith.constant 1 : index
    %c1_63 = arith.constant 1 : index
    %c0_64 = arith.constant 0 : index
    %33 = vector.load %arg6[%c1_62, %c1_63, %c0_64] : memref<18x18x4xf32, #tpu.memory_space<vmem>>, vector<16x16x4xf32>
    tpu.vector_store %arg6[%c1_62, %c1_63, %c0_64], %32 {strides = array<i32>} : memref<18x18x4xf32, #tpu.memory_space<vmem>>, vector<16x16x4xf32>,
    %c0_65 = arith.constant 0 : index
    %c0_66 = arith.constant 0 : index
    %c0_67 = arith.constant 0 : index
    %34 = vector.load %arg6[%c0_65, %c0_66, %c0_67] : memref<18x18x4xf32, #tpu.memory_space<vmem>>, vector<16x16x4xf32>
    %c0_68 = arith.constant 0 : index
    %c0_69 = arith.constant 0 : index
    %c0_70 = arith.constant 0 : index
    %35 = vector.load %arg7[%c0_68, %c0_69, %c0_70] : memref<16x16x36xf32, #tpu.memory_space<vmem>>, vector<16x16x4xf32>
    tpu.vector_store %arg7[%c0_68, %c0_69, %c0_70], %34 {strides = array<i32>} : memref<16x16x36xf32, #tpu.memory_space<vmem>>, vector<16x16x4xf32>,
    %c0_71 = arith.constant 0 : index
    %c1_72 = arith.constant 1 : index
    %c0_73 = arith.constant 0 : index
    %36 = vector.load %arg6[%c0_71, %c1_72, %c0_73] : memref<18x18x4xf32, #tpu.memory_space<vmem>>, vector<16x16x4xf32>
    %c0_74 = arith.constant 0 : index
    %c0_75 = arith.constant 0 : index
    %c4_76 = arith.constant 4 : index
    %37 = vector.load %arg7[%c0_74, %c0_75, %c4_76] : memref<16x16x36xf32, #tpu.memory_space<vmem>>, vector<16x16x4xf32>
    tpu.vector_store %arg7[%c0_74, %c0_75, %c4_76], %36 {strides = array<i32>} : memref<16x16x36xf32, #tpu.memory_space<vmem>>, vector<16x16x4xf32>,
    %c0_77 = arith.constant 0 : index
    %c2_78 = arith.constant 2 : index
    %c0_79 = arith.constant 0 : index
    %38 = vector.load %arg6[%c0_77, %c2_78, %c0_79] : memref<18x18x4xf32, #tpu.memory_space<vmem>>, vector<16x16x4xf32>
    %c0_80 = arith.constant 0 : index
    %c0_81 = arith.constant 0 : index
    %c8_82 = arith.constant 8 : index
    %39 = vector.load %arg7[%c0_80, %c0_81, %c8_82] : memref<16x16x36xf32, #tpu.memory_space<vmem>>, vector<16x16x4xf32>
    tpu.vector_store %arg7[%c0_80, %c0_81, %c8_82], %38 {strides = array<i32>} : memref<16x16x36xf32, #tpu.memory_space<vmem>>, vector<16x16x4xf32>,
    %c1_83 = arith.constant 1 : index
    %c0_84 = arith.constant 0 : index
    %c0_85 = arith.constant 0 : index
    %40 = vector.load %arg6[%c1_83, %c0_84, %c0_85] : memref<18x18x4xf32, #tpu.memory_space<vmem>>, vector<16x16x4xf32>
    %c0_86 = arith.constant 0 : index
    %c0_87 = arith.constant 0 : index
    %c12_88 = arith.constant 12 : index
    %41 = vector.load %arg7[%c0_86, %c0_87, %c12_88] : memref<16x16x36xf32, #tpu.memory_space<vmem>>, vector<16x16x4xf32>
    tpu.vector_store %arg7[%c0_86, %c0_87, %c12_88], %40 {strides = array<i32>} : memref<16x16x36xf32, #tpu.memory_space<vmem>>, vector<16x16x4xf32>,
    %c1_89 = arith.constant 1 : index
    %c1_90 = arith.constant 1 : index
    %c0_91 = arith.constant 0 : index
    %42 = vector.load %arg6[%c1_89, %c1_90, %c0_91] : memref<18x18x4xf32, #tpu.memory_space<vmem>>, vector<16x16x4xf32>
    %c0_92 = arith.constant 0 : index
    %c0_93 = arith.constant 0 : index
    %c16_94 = arith.constant 16 : index
    %43 = vector.load %arg7[%c0_92, %c0_93, %c16_94] : memref<16x16x36xf32, #tpu.memory_space<vmem>>, vector<16x16x4xf32>
    tpu.vector_store %arg7[%c0_92, %c0_93, %c16_94], %42 {strides = array<i32>} : memref<16x16x36xf32, #tpu.memory_space<vmem>>, vector<16x16x4xf32>,
    %c1_95 = arith.constant 1 : index
    %c2_96 = arith.constant 2 : index
    %c0_97 = arith.constant 0 : index
    %44 = vector.load %arg6[%c1_95, %c2_96, %c0_97] : memref<18x18x4xf32, #tpu.memory_space<vmem>>, vector<16x16x4xf32>
    %c0_98 = arith.constant 0 : index
    %c0_99 = arith.constant 0 : index
    %c20_100 = arith.constant 20 : index
    %45 = vector.load %arg7[%c0_98, %c0_99, %c20_100] : memref<16x16x36xf32, #tpu.memory_space<vmem>>, vector<16x16x4xf32>
    tpu.vector_store %arg7[%c0_98, %c0_99, %c20_100], %44 {strides = array<i32>} : memref<16x16x36xf32, #tpu.memory_space<vmem>>, vector<16x16x4xf32>,
    %c2_101 = arith.constant 2 : index
    %c0_102 = arith.constant 0 : index
    %c0_103 = arith.constant 0 : index
    %46 = vector.load %arg6[%c2_101, %c0_102, %c0_103] : memref<18x18x4xf32, #tpu.memory_space<vmem>>, vector<16x16x4xf32>
    %c0_104 = arith.constant 0 : index
    %c0_105 = arith.constant 0 : index
    %c24_106 = arith.constant 24 : index
    %47 = vector.load %arg7[%c0_104, %c0_105, %c24_106] : memref<16x16x36xf32, #tpu.memory_space<vmem>>, vector<16x16x4xf32>
    tpu.vector_store %arg7[%c0_104, %c0_105, %c24_106], %46 {strides = array<i32>} : memref<16x16x36xf32, #tpu.memory_space<vmem>>, vector<16x16x4xf32>,
    %c2_107 = arith.constant 2 : index
    %c1_108 = arith.constant 1 : index
    %c0_109 = arith.constant 0 : index
    %48 = vector.load %arg6[%c2_107, %c1_108, %c0_109] : memref<18x18x4xf32, #tpu.memory_space<vmem>>, vector<16x16x4xf32>
    %c0_110 = arith.constant 0 : index
    %c0_111 = arith.constant 0 : index
    %c28_112 = arith.constant 28 : index
    %49 = vector.load %arg7[%c0_110, %c0_111, %c28_112] : memref<16x16x36xf32, #tpu.memory_space<vmem>>, vector<16x16x4xf32>
    tpu.vector_store %arg7[%c0_110, %c0_111, %c28_112], %48 {strides = array<i32>} : memref<16x16x36xf32, #tpu.memory_space<vmem>>, vector<16x16x4xf32>,
    %c2_113 = arith.constant 2 : index
    %c2_114 = arith.constant 2 : index
    %c0_115 = arith.constant 0 : index
    %50 = vector.load %arg6[%c2_113, %c2_114, %c0_115] : memref<18x18x4xf32, #tpu.memory_space<vmem>>, vector<16x16x4xf32>
    %c0_116 = arith.constant 0 : index
    %c0_117 = arith.constant 0 : index
    %c32_118 = arith.constant 32 : index
    %51 = vector.load %arg7[%c0_116, %c0_117, %c32_118] : memref<16x16x36xf32, #tpu.memory_space<vmem>>, vector<16x16x4xf32>
    tpu.vector_store %arg7[%c0_116, %c0_117, %c32_118], %50 {strides = array<i32>} : memref<16x16x36xf32, #tpu.memory_space<vmem>>, vector<16x16x4xf32>,
    %c0_119 = arith.constant 0 : index
    %c0_120 = arith.constant 0 : index
    %c0_121 = arith.constant 0 : index
    %52 = vector.load %arg7[%c0_119, %c0_120, %c0_121] : memref<16x16x36xf32, #tpu.memory_space<vmem>>, vector<16x16x36xf32>
    %c0_122 = arith.constant 0 : index
    %c0_123 = arith.constant 0 : index
    %53 = vector.load %arg3[%c0_122, %c0_123] : memref<36x4xf32, #tpu.memory_space<vmem>>, vector<36x4xf32>
    "tpu.trace_start"() <{level = 10 : i32, message = "hwk,kc->hwc"}> : () -> ()
    %cst_124 = arith.constant dense<0.000000e+00> : vector<16x16x4xf32>
    %54 = tpu.matmul %52, %53, %cst_124 {dimension_numbers = #tpu.dot_dimension_numbers<[2], [0], [0, 1], [1], [0, 0, 0, 1, 1, 1], [], []>} : vector<16x16x36xf32>, vector<36x4xf32>, vector<16x16x4xf32> -> vector<16x16x4xf32>
    "tpu.trace_stop"() : () -> ()
    %c1_125 = arith.constant 1 : index
    %c0_126 = arith.constant 0 : index
    %55 = vector.load %arg4[%c1_125, %c0_126] : memref<2x4xf32, #tpu.memory_space<vmem>>, vector<1x4xf32>
    %56 = vector.shape_cast %55 : vector<1x4xf32> to vector<4xf32>
    %57 = vector.shape_cast %56 : vector<4xf32> to vector<1x1x4xf32>
    %58 = vector.broadcast %57 : vector<1x1x4xf32> to vector<16x16x4xf32>
    %59 = arith.addf %54, %58 : vector<16x16x4xf32>
    %60 = arith.addf %59, %1 : vector<16x16x4xf32>
    %cst_127 = arith.constant 0.000000e+00 : f32
    %61 = vector.broadcast %cst_127 : f32 to vector<16x16x4xf32>
    %62 = arith.maximumf %60, %61 : vector<16x16x4xf32>
    %c0_128 = arith.constant 0 : index
    %c0_129 = arith.constant 0 : index
    %c0_130 = arith.constant 0 : index
    %c0_131 = arith.constant 0 : index
    %63 = vector.load %arg5[%c0_128, %c0_129, %c0_130, %c0_131] : memref<1x16x16x4xf32, #tpu.memory_space<vmem>>, vector<1x16x16x4xf32>
    %64 = vector.shape_cast %63 : vector<1x16x16x4xf32> to vector<16x16x4xf32>
    %65 = vector.shape_cast %62 : vector<16x16x4xf32> to vector<1x16x16x4xf32>
    tpu.vector_store %arg5[%c0_128, %c0_129, %c0_130, %c0_131], %65 {strides = array<i32>} : memref<1x16x16x4xf32, #tpu.memory_space<vmem>>, vector<1x16x16x4xf32>,
    return
  }
  func.func @transform_0(%arg0: i32) -> (i32, i32, i32, i32) {
    %c0_i32 = arith.constant 0 : i32
    %c0_i32_0 = arith.constant 0 : i32
    %c0_i32_1 = arith.constant 0 : i32
    %c0_i32_2 = arith.constant 0 : i32
    return %arg0, %c0_i32, %c0_i32_0, %c0_i32_1 : i32, i32, i32, i32
  }
  func.func @transform_1(%arg0: i32) -> (i32, i32) {
    %c0_i32 = arith.constant 0 : i32
    %c0_i32_0 = arith.constant 0 : i32
    %c0_i32_1 = arith.constant 0 : i32
    return %c0_i32, %c0_i32_0 : i32, i32
  }
  func.func @transform_2(%arg0: i32) -> (i32, i32) {
    %c0_i32 = arith.constant 0 : i32
    %c0_i32_0 = arith.constant 0 : i32
    %c0_i32_1 = arith.constant 0 : i32
    return %c0_i32, %c0_i32_0 : i32, i32
  }
  func.func @transform_3(%arg0: i32) -> (i32, i32) {
    %c0_i32 = arith.constant 0 : i32
    %c0_i32_0 = arith.constant 0 : i32
    %c0_i32_1 = arith.constant 0 : i32
    return %c0_i32, %c0_i32_0 : i32, i32
  }
  func.func @transform_4(%arg0: i32) -> (i32, i32, i32, i32) {
    %c0_i32 = arith.constant 0 : i32
    %c0_i32_0 = arith.constant 0 : i32
    %c0_i32_1 = arith.constant 0 : i32
    %c0_i32_2 = arith.constant 0 : i32
    return %arg0, %c0_i32, %c0_i32_0, %c0_i32_1 : i32, i32, i32, i32
  }
}

</mosaic_0001>

<llo_original>
// kernel: tpu_custom_call.1
$region0: #{tpu_custom_call.1}
  #allocation0 [shape = 'u32[]', space=smem, size = 0x4, offset = 0x4, fixed_abs, tag = 'smem constant byte address 0x4 - core index']
  #allocation1 [shape = 'u32[72,128]{1,0:T(1,128)}', space=vmem, size = 0x9000, scoped, tag = 'internal scratch']
  #allocation2 [shape = 'f32[18,18,4]{2,1,0:T(8,128)}', space=vmem, size = 0x36000, scoped, tag = 'scratch operand']
  #allocation3 [shape = 'f32[16,16,36]{2,1,0:T(8,128)}', space=vmem, size = 0x20000, scoped, tag = 'scratch operand']
  %s0 = inlined_call_operand.vmem [shape: f32[2,16,16,4], index: 0, kind: input, shape index: {}]
  %s1 = inlined_call_operand.vmem [shape: f32[36,4], index: 1, kind: input, shape index: {}]
  %s2 = inlined_call_operand.vmem [shape: f32[36,4], index: 2, kind: input, shape index: {}]
  %s3 = inlined_call_operand.vmem [shape: f32[2,4], index: 3, kind: input, shape index: {}]
  %s4 = inlined_call_operand.vmem [shape: f32[2,16,16,4], index: 4, kind: output, shape index: {}]
  %s5 = sld [smem:[#allocation0]]
  $region49: #{tpu_custom_call.1} parent=0
    _
  %s7 = ssub.s32 1, %s5
  %s8 = scalar_select 0, %s7, %s5
  loop: start=0, step=1, limit=4
  $region2: #{tpu_custom_call.1} parent=0 // loop_pre_header
    _
  $region3: #{tpu_custom_call.1} parent=0 // loop_header
    %s10 = sphi 0, %s14
    %p11 = scmp.ge.s32.totalorder %s10, 4
    %s20 = sphi 0, %s22
    %s23 = sphi 0, %s20
    %s24 = sphi 0, %s23
    %s40 = sphi 0, %s24
    %s44 = sphi 0, %s44
    %s46 = sphi 0, %s44
    %s47 = sphi 0, %s46
    %s61 = sphi 0, %s47
    %s65 = sphi 0, %s65
    %s67 = sphi 0, %s65
    %s68 = sphi 0, %s67
    %s82 = sphi 0, %s68
    %s86 = sphi 0, %s86
    %s88 = sphi 0, %s86
    %s89 = sphi 0, %s88
    %s103 = sphi 0, %s89
    %s109 = sphi 0, %s111
    %s112 = sphi 0, %s109
    %s113 = sphi 0, %s112
    %s129 = sphi 0, %s113
  $region4: #{tpu_custom_call.1} parent=0 // loop_header_branch
    %13 = sbr.rel (%p11) target = $region8
  $region5: #{tpu_custom_call.1} parent=0 // loop_body
    %s15 = ssub.s32 %s10, 1
    %s16 = ssub.s32 %s10, 2
    %s17 = sadd.s32 %s10, 1
    %s18 = ssub.s32 %s10, %s17
    %p19 = scmp.eq.s32.totalorder %s18, 0
    %s21 = sadd.s32 %s20, 1
    %s22 = scalar_select %p19, %s20, %s21
    %p25 = pneg %p19
    %p26 = scmp.eq.s32.totalorder %s10, 1
    %p27 = por %p25, %p26
    %p28 = scmp.ne.s32.totalorder %s20, %s23
    %p29 = scmp.eq.s32.totalorder %s10, 0
    %p30 = por %p28, %p29
    %p31 = scmp.ne.s32.totalorder %s20, %s23
    %p32 = scmp.eq.s32.totalorder %s15, 1
    %p33 = por %p31, %p32
    %p34 = scmp.ne.s32.totalorder %s23, %s24
    %p35 = scmp.eq.s32.totalorder %s15, 0
    %p36 = por %p34, %p35
    %p37 = scmp.ne.s32.totalorder %s23, %s24
    %p38 = scmp.eq.s32.totalorder %s16, 1
    %p39 = por %p37, %p38
    %p41 = scmp.ne.s32.totalorder %s24, %s40
    %p42 = scmp.eq.s32.totalorder %s16, 0
    %p43 = por %p41, %p42
    %s45 = sadd.s32 %s44, 1
    %p48 = scmp.eq.s32.totalorder %s10, 1
    %p49 = scmp.ne.s32.totalorder %s44, %s46
    %p50 = scmp.eq.s32.totalorder %s10, 0
    %p51 = por %p49, %p50
    %p52 = scmp.ne.s32.totalorder %s44, %s46
    %p53 = scmp.eq.s32.totalorder %s15, 1
    %p54 = por %p52, %p53
    %p55 = scmp.ne.s32.totalorder %s46, %s47
    %p56 = scmp.eq.s32.totalorder %s15, 0
    %p57 = por %p55, %p56
    %p58 = scmp.ne.s32.totalorder %s46, %s47
    %p59 = scmp.eq.s32.totalorder %s16, 1
    %p60 = por %p58, %p59
    %p62 = scmp.ne.s32.totalorder %s47, %s61
    %p63 = scmp.eq.s32.totalorder %s16, 0
    %p64 = por %p62, %p63
    %s66 = sadd.s32 %s65, 1
    %p69 = scmp.eq.s32.totalorder %s10, 1
    %p70 = scmp.ne.s32.totalorder %s65, %s67
    %p71 = scmp.eq.s32.totalorder %s10, 0
    %p72 = por %p70, %p71
    %p73 = scmp.ne.s32.totalorder %s65, %s67
    %p74 = scmp.eq.s32.totalorder %s15, 1
    %p75 = por %p73, %p74
    %p76 = scmp.ne.s32.totalorder %s67, %s68
    %p77 = scmp.eq.s32.totalorder %s15, 0
    %p78 = por %p76, %p77
    %p79 = scmp.ne.s32.totalorder %s67, %s68
    %p80 = scmp.eq.s32.totalorder %s16, 1
    %p81 = por %p79, %p80
    %p83 = scmp.ne.s32.totalorder %s68, %s82
    %p84 = scmp.eq.s32.totalorder %s16, 0
    %p85 = por %p83, %p84
    %s87 = sadd.s32 %s86, 1
    %p90 = scmp.eq.s32.totalorder %s10, 1
    %p91 = scmp.ne.s32.totalorder %s86, %s88
    %p92 = scmp.eq.s32.totalorder %s10, 0
    %p93 = por %p91, %p92
    %p94 = scmp.ne.s32.totalorder %s86, %s88
    %p95 = scmp.eq.s32.totalorder %s15, 1
    %p96 = por %p94, %p95
    %p97 = scmp.ne.s32.totalorder %s88, %s89
    %p98 = scmp.eq.s32.totalorder %s15, 0
    %p99 = por %p97, %p98
    %p100 = scmp.ne.s32.totalorder %s88, %s89
    %p101 = scmp.eq.s32.totalorder %s16, 1
    %p102 = por %p100, %p101
    %p104 = scmp.ne.s32.totalorder %s89, %s103
    %p105 = scmp.eq.s32.totalorder %s16, 0
    %p106 = por %p104, %p105
    %s107 = ssub.s32 %s10, %s17
    %p108 = scmp.eq.s32.totalorder %s107, 0
    %s110 = sadd.s32 %s109, 1
    %s111 = scalar_select %p108, %s109, %s110
    %p114 = pneg %p108
    %p115 = scmp.eq.s32.totalorder %s10, 1
    %p116 = por %p114, %p115
    %p117 = scmp.ne.s32.totalorder %s109, %s112
    %p118 = scmp.eq.s32.totalorder %s10, 0
    %p119 = por %p117, %p118
    %p120 = scmp.ne.s32.totalorder %s109, %s112
    %p121 = scmp.eq.s32.totalorder %s15, 1
    %p122 = por %p120, %p121
    %p123 = scmp.ne.s32.totalorder %s112, %s113
    %p124 = scmp.eq.s32.totalorder %s15, 0
    %p125 = por %p123, %p124
    %p126 = scmp.ne.s32.totalorder %s112, %s113
    %p127 = scmp.eq.s32.totalorder %s16, 1
    %p128 = por %p126, %p127
    %p130 = scmp.ne.s32.totalorder %s113, %s129
    %p131 = scmp.eq.s32.totalorder %s16, 0
    %p132 = por %p130, %p131
    %p133 = scmp.le.s32.totalorder 1, %s10
    %p134 = scmp.lt.s32.totalorder %s10, 3
    %p135 = pnand %p133, %p134
    %p136 = pneg %p135
    // Predicated region
    $region9: #{tpu_custom_call.1} parent=5 // pred_check
      _
    $region10: #{tpu_custom_call.1} parent=5 // pred_check_branch
      %138 = sbr.rel (%p135) target = $region12
    $region11: #{tpu_custom_call.1} parent=5 // pred_region
      %s139 = ssub.s32 %s10, 1
      // Predicated region
      $region13: #{tpu_custom_call.1} parent=11 // pred_check
        %p140 = pneg %p57
      $region14: #{tpu_custom_call.1} parent=11 // pred_check_branch
        %142 = sbr.rel (%p140) target = $region16
      $region15: #{tpu_custom_call.1} parent=11 // pred_region
        _
      $region16: #{tpu_custom_call.1} parent=11 // pred_fallthru
        _
      // Predicated region
      $region17: #{tpu_custom_call.1} parent=11 // pred_check
        %p143 = pneg %p78
      $region18: #{tpu_custom_call.1} parent=11 // pred_check_branch
        %145 = sbr.rel (%p143) target = $region20
      $region19: #{tpu_custom_call.1} parent=11 // pred_region
        _
      $region20: #{tpu_custom_call.1} parent=11 // pred_fallthru
        _
      // Predicated region
      $region21: #{tpu_custom_call.1} parent=11 // pred_check
        %p146 = pneg %p99
      $region22: #{tpu_custom_call.1} parent=11 // pred_check_branch
        %148 = sbr.rel (%p146) target = $region24
      $region23: #{tpu_custom_call.1} parent=11 // pred_region
        _
      $region24: #{tpu_custom_call.1} parent=11 // pred_fallthru
        _
    $region12: #{tpu_custom_call.1} parent=5 // pred_fallthru
      _
    %p149 = scmp.lt.s32.totalorder %s10, 2
    // Predicated region
    $region25: #{tpu_custom_call.1} parent=5 // pred_check
      %p150 = pneg %p149
    $region26: #{tpu_custom_call.1} parent=5 // pred_check_branch
      %152 = sbr.rel (%p150) target = $region28
    $region27: #{tpu_custom_call.1} parent=5 // pred_region
      // Predicated region
      $region29: #{tpu_custom_call.1} parent=27 // pred_check
        %p153 = pneg %p30
      $region30: #{tpu_custom_call.1} parent=27 // pred_check_branch
        %155 = sbr.rel (%p153) target = $region32
      $region31: #{tpu_custom_call.1} parent=27 // pred_region
        %p156 = scmp.lt.s32.totalorder %s10, 1
        %s157 = scalar_select %p156, %s10, 1
        %s158 = smul.addr %s157, 32
        %s159 = smul.addr %s158, 8
        %s160 = scalar_lea.vmem %s0, %s159
      $region32: #{tpu_custom_call.1} parent=27 // pred_fallthru
        _
    $region28: #{tpu_custom_call.1} parent=5 // pred_fallthru
      _
    %p161 = scmp.le.s32.totalorder 1, %s10
    %p162 = scmp.lt.s32.totalorder %s10, 3
    %p163 = pnand %p161, %p162
    %p164 = pneg %p163
    // Predicated region
    $region33: #{tpu_custom_call.1} parent=5 // pred_check
      _
    $region34: #{tpu_custom_call.1} parent=5 // pred_check_branch
      %166 = sbr.rel (%p163) target = $region36
    $region35: #{tpu_custom_call.1} parent=5 // pred_region
      %s167 = ssub.s32 %s10, 1
      %p168 = scmp.lt.s32.totalorder %s15, 1
      %s169 = scalar_select %p168, %s15, 1
      %s170 = smul.addr %s169, 32
      %s171 = smul.addr %s170, 8
      %s172 = scalar_lea.vmem %s0, %s171
      %p173 = pneg %p36
      %p174 = pneg %p33
      %p175 = pneg %p57
      %p176 = pneg %p54
      %p177 = pneg %p78
      %p178 = pneg %p75
      %p179 = pneg %p99
      %p180 = pneg %p96
      %p181 = pneg %p125
      %p182 = pneg %p122
      %p183 = scmp.lt.s32.totalorder %s15, 1
      %s184 = scalar_select %p183, %s15, 1
      %s185 = smul.addr %s184, 32
      %s186 = smul.addr %s185, 8
      %s187 = scalar_lea.vmem %s4, %s186
      %p188 = scmp.lt.s32.totalorder %s15, 1
      %s189 = scalar_select %p188, %s15, 1
      %s190 = smul.addr %s189, 32
      %s191 = smul.addr %s190, 8
      %s192 = scalar_lea.vmem %s0, %s191
      %p193 = scmp.lt.s32.totalorder %s15, 1
      %s194 = scalar_select %p193, %s15, 1
      %s195 = smul.addr %s194, 32
      %s196 = smul.addr %s195, 8
      %s197 = scalar_lea.vmem %s4, %s196
      %v198 = vld [vmem:[%s192] sm:$0xff]
      %v199 = vld [vmem:[%s192 + $0x8] sm:$0xff]
      %v200 = vld [vmem:[%s192 + $0x10] sm:$0xff]
      %v201 = vld [vmem:[%s192 + $0x18] sm:$0xff]
      %v202 = vld [vmem:[%s192 + $0x20] sm:$0xff]
      %v203 = vld [vmem:[%s192 + $0x28] sm:$0xff]
      %v204 = vld [vmem:[%s192 + $0x30] sm:$0xff]
      %v205 = vld [vmem:[%s192 + $0x38] sm:$0xff]
      %v206 = vld [vmem:[%s192 + $0x40] sm:$0xff]
      %v207 = vld [vmem:[%s192 + $0x48] sm:$0xff]
      %v208 = vld [vmem:[%s192 + $0x50] sm:$0xff]
      %v209 = vld [vmem:[%s192 + $0x58] sm:$0xff]
      %v210 = vld [vmem:[%s192 + $0x60] sm:$0xff]
      %v211 = vld [vmem:[%s192 + $0x68] sm:$0xff]
      %v212 = vld [vmem:[%s192 + $0x70] sm:$0xff]
      %v213 = vld [vmem:[%s192 + $0x78] sm:$0xff]
      %v214 = vld [vmem:[%s192 + $0x80] sm:$0xff]
      %v215 = vld [vmem:[%s192 + $0x88] sm:$0xff]
      %v216 = vld [vmem:[%s192 + $0x90] sm:$0xff]
      %v217 = vld [vmem:[%s192 + $0x98] sm:$0xff]
      %v218 = vld [vmem:[%s192 + $0xa0] sm:$0xff]
      %v219 = vld [vmem:[%s192 + $0xa8] sm:$0xff]
      %v220 = vld [vmem:[%s192 + $0xb0] sm:$0xff]
      %v221 = vld [vmem:[%s192 + $0xb8] sm:$0xff]
      %v222 = vld [vmem:[%s192 + $0xc0] sm:$0xff]
      %v223 = vld [vmem:[%s192 + $0xc8] sm:$0xff]
      %v224 = vld [vmem:[%s192 + $0xd0] sm:$0xff]
      %v225 = vld [vmem:[%s192 + $0xd8] sm:$0xff]
      %v226 = vld [vmem:[%s192 + $0xe0] sm:$0xff]
      %v227 = vld [vmem:[%s192 + $0xe8] sm:$0xff]
      %v228 = vld [vmem:[%s192 + $0xf0] sm:$0xff]
      %v229 = vld [vmem:[%s192 + $0xf8] sm:$0xff]
      %vm230 = vcmask 31744
      %231 = vst.msk [vmem:[#allocation2] sm:$0xff] %vm230, 0.0
      %232 = vst.msk [vmem:[#allocation2 + $0x8] sm:$0xff] %vm230, 0.0
      %vm233 = vcmask 25600
      %234 = vst.msk [vmem:[#allocation2 + $0x10] sm:$0x3] %vm233, 0.0
      %235 = vst.msk [vmem:[#allocation2 + $0x18] sm:$0xff] %vm230, 0.0
      %236 = vst.msk [vmem:[#allocation2 + $0x20] sm:$0xff] %vm230, 0.0
      %237 = vst.msk [vmem:[#allocation2 + $0x28] sm:$0x3] %vm233, 0.0
      %238 = vst.msk [vmem:[#allocation2 + $0x30] sm:$0xff] %vm230, 0.0
      %239 = vst.msk [vmem:[#allocation2 + $0x38] sm:$0xff] %vm230, 0.0
      %240 = vst.msk [vmem:[#allocation2 + $0x40] sm:$0x3] %vm233, 0.0
      %241 = vst.msk [vmem:[#allocation2 + $0x48] sm:$0xff] %vm230, 0.0
      %242 = vst.msk [vmem:[#allocation2 + $0x50] sm:$0xff] %vm230, 0.0
      %243 = vst.msk [vmem:[#allocation2 + $0x58] sm:$0x3] %vm233, 0.0
      %244 = vst.msk [vmem:[#allocation2 + $0x60] sm:$0xff] %vm230, 0.0
      %245 = vst.msk [vmem:[#allocation2 + $0x68] sm:$0xff] %vm230, 0.0
      %246 = vst.msk [vmem:[#allocation2 + $0x70] sm:$0x3] %vm233, 0.0
      %247 = vst.msk [vmem:[#allocation2 + $0x78] sm:$0xff] %vm230, 0.0
      %248 = vst.msk [vmem:[#allocation2 + $0x80] sm:$0xff] %vm230, 0.0
      %249 = vst.msk [vmem:[#allocation2 + $0x88] sm:$0x3] %vm233, 0.0
      %250 = vst.msk [vmem:[#allocation2 + $0x90] sm:$0xff] %vm230, 0.0
      %251 = vst.msk [vmem:[#allocation2 + $0x98] sm:$0xff] %vm230, 0.0
      %252 = vst.msk [vmem:[#allocation2 + $0xa0] sm:$0x3] %vm233, 0.0
      %253 = vst.msk [vmem:[#allocation2 + $0xa8] sm:$0xff] %vm230, 0.0
      %254 = vst.msk [vmem:[#allocation2 + $0xb0] sm:$0xff] %vm230, 0.0
      %255 = vst.msk [vmem:[#allocation2 + $0xb8] sm:$0x3] %vm233, 0.0
      %256 = vst.msk [vmem:[#allocation2 + $0xc0] sm:$0xff] %vm230, 0.0
      %257 = vst.msk [vmem:[#allocation2 + $0xc8] sm:$0xff] %vm230, 0.0
      %258 = vst.msk [vmem:[#allocation2 + $0xd0] sm:$0x3] %vm233, 0.0
      %259 = vst.msk [vmem:[#allocation2 + $0xd8] sm:$0xff] %vm230, 0.0
      %260 = vst.msk [vmem:[#allocation2 + $0xe0] sm:$0xff] %vm230, 0.0
      %261 = vst.msk [vmem:[#allocation2 + $0xe8] sm:$0x3] %vm233, 0.0
      %262 = vst.msk [vmem:[#allocation2 + $0xf0] sm:$0xff] %vm230, 0.0
      %263 = vst.msk [vmem:[#allocation2 + $0xf8] sm:$0xff] %vm230, 0.0
      %264 = vst.msk [vmem:[#allocation2 + $0x100] sm:$0x3] %vm233, 0.0
      %265 = vst.msk [vmem:[#allocation2 + $0x108] sm:$0xff] %vm230, 0.0
      %266 = vst.msk [vmem:[#allocation2 + $0x110] sm:$0xff] %vm230, 0.0
      %267 = vst.msk [vmem:[#allocation2 + $0x118] sm:$0x3] %vm233, 0.0
      %268 = vst.msk [vmem:[#allocation2 + $0x120] sm:$0xff] %vm230, 0.0
      %269 = vst.msk [vmem:[#allocation2 + $0x128] sm:$0xff] %vm230, 0.0
      %270 = vst.msk [vmem:[#allocation2 + $0x130] sm:$0x3] %vm233, 0.0
      %271 = vst.msk [vmem:[#allocation2 + $0x138] sm:$0xff] %vm230, 0.0
      %272 = vst.msk [vmem:[#allocation2 + $0x140] sm:$0xff] %vm230, 0.0
      %273 = vst.msk [vmem:[#allocation2 + $0x148] sm:$0x3] %vm233, 0.0
      %274 = vst.msk [vmem:[#allocation2 + $0x150] sm:$0xff] %vm230, 0.0
      %275 = vst.msk [vmem:[#allocation2 + $0x158] sm:$0xff] %vm230, 0.0
      %276 = vst.msk [vmem:[#allocation2 + $0x160] sm:$0x3] %vm233, 0.0
      %277 = vst.msk [vmem:[#allocation2 + $0x168] sm:$0xff] %vm230, 0.0
      %278 = vst.msk [vmem:[#allocation2 + $0x170] sm:$0xff] %vm230, 0.0
      %279 = vst.msk [vmem:[#allocation2 + $0x178] sm:$0x3] %vm233, 0.0
      %280 = vst.msk [vmem:[#allocation2 + $0x180] sm:$0xff] %vm230, 0.0
      %281 = vst.msk [vmem:[#allocation2 + $0x188] sm:$0xff] %vm230, 0.0
      %282 = vst.msk [vmem:[#allocation2 + $0x190] sm:$0x3] %vm233, 0.0
      %283 = vst.msk [vmem:[#allocation2 + $0x198] sm:$0xff] %vm230, 0.0
      %284 = vst.msk [vmem:[#allocation2 + $0x1a0] sm:$0xff] %vm230, 0.0
      %285 = vst.msk [vmem:[#allocation2 + $0x1a8] sm:$0x3] %vm233, 0.0
      %s286 = scalar_lea.vmem [#allocation2], 24
      %287 = vst.msk [vmem:[%s286 + $0x1] sm:$0xff] %vm230, %v198
      %288 = vst.msk [vmem:[%s286 + $0x9] sm:$0xff] %vm230, %v199
      %289 = vst.msk [vmem:[%s286 + $0x19] sm:$0xff] %vm230, %v200
      %290 = vst.msk [vmem:[%s286 + $0x21] sm:$0xff] %vm230, %v201
      %291 = vst.msk [vmem:[%s286 + $0x31] sm:$0xff] %vm230, %v202
      %292 = vst.msk [vmem:[%s286 + $0x39] sm:$0xff] %vm230, %v203
      %293 = vst.msk [vmem:[%s286 + $0x49] sm:$0xff] %vm230, %v204
      %294 = vst.msk [vmem:[%s286 + $0x51] sm:$0xff] %vm230, %v205
      %295 = vst.msk [vmem:[%s286 + $0x61] sm:$0xff] %vm230, %v206
      %296 = vst.msk [vmem:[%s286 + $0x69] sm:$0xff] %vm230, %v207
      %297 = vst.msk [vmem:[%s286 + $0x79] sm:$0xff] %vm230, %v208
      %298 = vst.msk [vmem:[%s286 + $0x81] sm:$0xff] %vm230, %v209
      %299 = vst.msk [vmem:[%s286 + $0x91] sm:$0xff] %vm230, %v210
      %300 = vst.msk [vmem:[%s286 + $0x99] sm:$0xff] %vm230, %v211
      %301 = vst.msk [vmem:[%s286 + $0xa9] sm:$0xff] %vm230, %v212
      %302 = vst.msk [vmem:[%s286 + $0xb1] sm:$0xff] %vm230, %v213
      %303 = vst.msk [vmem:[%s286 + $0xc1] sm:$0xff] %vm230, %v214
      %304 = vst.msk [vmem:[%s286 + $0xc9] sm:$0xff] %vm230, %v215
      %305 = vst.msk [vmem:[%s286 + $0xd9] sm:$0xff] %vm230, %v216
      %306 = vst.msk [vmem:[%s286 + $0xe1] sm:$0xff] %vm230, %v217
      %307 = vst.msk [vmem:[%s286 + $0xf1] sm:$0xff] %vm230, %v218
      %308 = vst.msk [vmem:[%s286 + $0xf9] sm:$0xff] %vm230, %v219
      %309 = vst.msk [vmem:[%s286 + $0x109] sm:$0xff] %vm230, %v220
      %310 = vst.msk [vmem:[%s286 + $0x111] sm:$0xff] %vm230, %v221
      %311 = vst.msk [vmem:[%s286 + $0x121] sm:$0xff] %vm230, %v222
      %312 = vst.msk [vmem:[%s286 + $0x129] sm:$0xff] %vm230, %v223
      %313 = vst.msk [vmem:[%s286 + $0x139] sm:$0xff] %vm230, %v224
      %314 = vst.msk [vmem:[%s286 + $0x141] sm:$0xff] %vm230, %v225
      %315 = vst.msk [vmem:[%s286 + $0x151] sm:$0xff] %vm230, %v226
      %316 = vst.msk [vmem:[%s286 + $0x159] sm:$0xff] %vm230, %v227
      %317 = vst.msk [vmem:[%s286 + $0x169] sm:$0xff] %vm230, %v228
      %318 = vst.msk [vmem:[%s286 + $0x171] sm:$0xff] %vm230, %v229
      %v319 = vld [vmem:[#allocation2] sm:$0xff]
      %v320 = vld [vmem:[#allocation2 + $0x8] sm:$0xff]
      %v321 = vld [vmem:[#allocation2 + $0x18] sm:$0xff]
      %v322 = vld [vmem:[#allocation2 + $0x20] sm:$0xff]
      %v323 = vld [vmem:[#allocation2 + $0x30] sm:$0xff]
      %v324 = vld [vmem:[#allocation2 + $0x38] sm:$0xff]
      %v325 = vld [vmem:[#allocation2 + $0x48] sm:$0xff]
      %v326 = vld [vmem:[#allocation2 + $0x50] sm:$0xff]
      %v327 = vld [vmem:[#allocation2 + $0x60] sm:$0xff]
      %v328 = vld [vmem:[#allocation2 + $0x68] sm:$0xff]
      %v329 = vld [vmem:[#allocation2 + $0x78] sm:$0xff]
      %v330 = vld [vmem:[#allocation2 + $0x80] sm:$0xff]
      %v331 = vld [vmem:[#allocation2 + $0x90] sm:$0xff]
      %v332 = vld [vmem:[#allocation2 + $0x98] sm:$0xff]
      %v333 = vld [vmem:[#allocation2 + $0xa8] sm:$0xff]
      %v334 = vld [vmem:[#allocation2 + $0xb0] sm:$0xff]
      %v335 = vld [vmem:[#allocation2 + $0xc0] sm:$0xff]
      %v336 = vld [vmem:[#allocation2 + $0xc8] sm:$0xff]
      %v337 = vld [vmem:[#allocation2 + $0xd8] sm:$0xff]
      %v338 = vld [vmem:[#allocation2 + $0xe0] sm:$0xff]
      %v339 = vld [vmem:[#allocation2 + $0xf0] sm:$0xff]
      %v340 = vld [vmem:[#allocation2 + $0xf8] sm:$0xff]
      %v341 = vld [vmem:[#allocation2 + $0x108] sm:$0xff]
      %v342 = vld [vmem:[#allocation2 + $0x110] sm:$0xff]
      %v343 = vld [vmem:[#allocation2 + $0x120] sm:$0xff]
      %v344 = vld [vmem:[#allocation2 + $0x128] sm:$0xff]
      %v345 = vld [vmem:[#allocation2 + $0x138] sm:$0xff]
      %v346 = vld [vmem:[#allocation2 + $0x140] sm:$0xff]
      %v347 = vld [vmem:[#allocation2 + $0x150] sm:$0xff]
      %v348 = vld [vmem:[#allocation2 + $0x158] sm:$0xff]
      %v349 = vld [vmem:[#allocation2 + $0x168] sm:$0xff]
      %v350 = vld [vmem:[#allocation2 + $0x170] sm:$0xff]
      %351 = vst.msk [vmem:[#allocation3] sm:$0xff] %vm230, %v319
      %352 = vst.msk [vmem:[#allocation3 + $0x8] sm:$0xff] %vm230, %v320
      %353 = vst.msk [vmem:[#allocation3 + $0x10] sm:$0xff] %vm230, %v321
      %354 = vst.msk [vmem:[#allocation3 + $0x18] sm:$0xff] %vm230, %v322
      %355 = vst.msk [vmem:[#allocation3 + $0x20] sm:$0xff] %vm230, %v323
      %356 = vst.msk [vmem:[#allocation3 + $0x28] sm:$0xff] %vm230, %v324
      %357 = vst.msk [vmem:[#allocation3 + $0x30] sm:$0xff] %vm230, %v325
      %358 = vst.msk [vmem:[#allocation3 + $0x38] sm:$0xff] %vm230, %v326
      %359 = vst.msk [vmem:[#allocation3 + $0x40] sm:$0xff] %vm230, %v327
      %360 = vst.msk [vmem:[#allocation3 + $0x48] sm:$0xff] %vm230, %v328
      %361 = vst.msk [vmem:[#allocation3 + $0x50] sm:$0xff] %vm230, %v329
      %362 = vst.msk [vmem:[#allocation3 + $0x58] sm:$0xff] %vm230, %v330
      %363 = vst.msk [vmem:[#allocation3 + $0x60] sm:$0xff] %vm230, %v331
      %364 = vst.msk [vmem:[#allocation3 + $0x68] sm:$0xff] %vm230, %v332
      %365 = vst.msk [vmem:[#allocation3 + $0x70] sm:$0xff] %vm230, %v333
      %366 = vst.msk [vmem:[#allocation3 + $0x78] sm:$0xff] %vm230, %v334
      %367 = vst.msk [vmem:[#allocation3 + $0x80] sm:$0xff] %vm230, %v335
      %368 = vst.msk [vmem:[#allocation3 + $0x88] sm:$0xff] %vm230, %v336
      %369 = vst.msk [vmem:[#allocation3 + $0x90] sm:$0xff] %vm230, %v337
      %370 = vst.msk [vmem:[#allocation3 + $0x98] sm:$0xff] %vm230, %v338
      %371 = vst.msk [vmem:[#allocation3 + $0xa0] sm:$0xff] %vm230, %v339
      %372 = vst.msk [vmem:[#allocation3 + $0xa8] sm:$0xff] %vm230, %v340
      %373 = vst.msk [vmem:[#allocation3 + $0xb0] sm:$0xff] %vm230, %v341
      %374 = vst.msk [vmem:[#allocation3 + $0xb8] sm:$0xff] %vm230, %v342
      %375 = vst.msk [vmem:[#allocation3 + $0xc0] sm:$0xff] %vm230, %v343
      %376 = vst.msk [vmem:[#allocation3 + $0xc8] sm:$0xff] %vm230, %v344
      %377 = vst.msk [vmem:[#allocation3 + $0xd0] sm:$0xff] %vm230, %v345
      %378 = vst.msk [vmem:[#allocation3 + $0xd8] sm:$0xff] %vm230, %v346
      %379 = vst.msk [vmem:[#allocation3 + $0xe0] sm:$0xff] %vm230, %v347
      %380 = vst.msk [vmem:[#allocation3 + $0xe8] sm:$0xff] %vm230, %v348
      %381 = vst.msk [vmem:[#allocation3 + $0xf0] sm:$0xff] %vm230, %v349
      %382 = vst.msk [vmem:[#allocation3 + $0xf8] sm:$0xff] %vm230, %v350
      %v383 = vld [vmem:[#allocation2 + $0x1] sm:$0xff]
      %v384 = vld [vmem:[#allocation2 + $0x9] sm:$0xff]
      %v385 = vld [vmem:[#allocation2 + $0x19] sm:$0xff]
      %v386 = vld [vmem:[#allocation2 + $0x21] sm:$0xff]
      %v387 = vld [vmem:[#allocation2 + $0x31] sm:$0xff]
      %v388 = vld [vmem:[#allocation2 + $0x39] sm:$0xff]
      %v389 = vld [vmem:[#allocation2 + $0x49] sm:$0xff]
      %v390 = vld [vmem:[#allocation2 + $0x51] sm:$0xff]
      %v391 = vld [vmem:[#allocation2 + $0x61] sm:$0xff]
      %v392 = vld [vmem:[#allocation2 + $0x69] sm:$0xff]
      %v393 = vld [vmem:[#allocation2 + $0x79] sm:$0xff]
      %v394 = vld [vmem:[#allocation2 + $0x81] sm:$0xff]
      %v395 = vld [vmem:[#allocation2 + $0x91] sm:$0xff]
      %v396 = vld [vmem:[#allocation2 + $0x99] sm:$0xff]
      %v397 = vld [vmem:[#allocation2 + $0xa9] sm:$0xff]
      %v398 = vld [vmem:[#allocation2 + $0xb1] sm:$0xff]
      %v399 = vld [vmem:[#allocation2 + $0xc1] sm:$0xff]
      %v400 = vld [vmem:[#allocation2 + $0xc9] sm:$0xff]
      %v401 = vld [vmem:[#allocation2 + $0xd9] sm:$0xff]
      %v402 = vld [vmem:[#allocation2 + $0xe1] sm:$0xff]
      %v403 = vld [vmem:[#allocation2 + $0xf1] sm:$0xff]
      %v404 = vld [vmem:[#allocation2 + $0xf9] sm:$0xff]
      %v405 = vld [vmem:[#allocation2 + $0x109] sm:$0xff]
      %v406 = vld [vmem:[#allocation2 + $0x111] sm:$0xff]
      %v407 = vld [vmem:[#allocation2 + $0x121] sm:$0xff]
      %v408 = vld [vmem:[#allocation2 + $0x129] sm:$0xff]
      %v409 = vld [vmem:[#allocation2 + $0x139] sm:$0xff]
      %v410 = vld [vmem:[#allocation2 + $0x141] sm:$0xff]
      %v411 = vld [vmem:[#allocation2 + $0x151] sm:$0xff]
      %v412 = vld [vmem:[#allocation2 + $0x159] sm:$0xff]
      %v413 = vld [vmem:[#allocation2 + $0x169] sm:$0xff]
      %v414 = vld [vmem:[#allocation2 + $0x171] sm:$0xff]
      %447 = vrot.lane.b32.xlu0 %v383, 4
      %v448 = vpop.permute.xlu0 %447
      %449 = vrot.lane.b32.xlu0 %v384, 4
      %v450 = vpop.permute.xlu0 %449
      %451 = vrot.lane.b32.xlu0 %v385, 4
      %v452 = vpop.permute.xlu0 %451
      %453 = vrot.lane.b32.xlu0 %v386, 4
      %v454 = vpop.permute.xlu0 %453
      %455 = vrot.lane.b32.xlu0 %v387, 4
      %v456 = vpop.permute.xlu0 %455
      %457 = vrot.lane.b32.xlu0 %v388, 4
      %v458 = vpop.permute.xlu0 %457
      %459 = vrot.lane.b32.xlu0 %v389, 4
      %v460 = vpop.permute.xlu0 %459
      %461 = vrot.lane.b32.xlu0 %v390, 4
      %v462 = vpop.permute.xlu0 %461
      %463 = vrot.lane.b32.xlu0 %v391, 4
      %v464 = vpop.permute.xlu0 %463
      %465 = vrot.lane.b32.xlu0 %v392, 4
      %v466 = vpop.permute.xlu0 %465
      %467 = vrot.lane.b32.xlu0 %v393, 4
      %v468 = vpop.permute.xlu0 %467
      %469 = vrot.lane.b32.xlu0 %v394, 4
      %v470 = vpop.permute.xlu0 %469
      %471 = vrot.lane.b32.xlu0 %v395, 4
      %v472 = vpop.permute.xlu0 %471
      %473 = vrot.lane.b32.xlu0 %v396, 4
      %v474 = vpop.permute.xlu0 %473
      %475 = vrot.lane.b32.xlu0 %v397, 4
      %v476 = vpop.permute.xlu0 %475
      %477 = vrot.lane.b32.xlu0 %v398, 4
      %v478 = vpop.permute.xlu0 %477
      %479 = vrot.lane.b32.xlu0 %v399, 4
      %v480 = vpop.permute.xlu0 %479
      %481 = vrot.lane.b32.xlu0 %v400, 4
      %v482 = vpop.permute.xlu0 %481
      %483 = vrot.lane.b32.xlu0 %v401, 4
      %v484 = vpop.permute.xlu0 %483
      %485 = vrot.lane.b32.xlu0 %v402, 4
      %v486 = vpop.permute.xlu0 %485
      %487 = vrot.lane.b32.xlu0 %v403, 4
      %v488 = vpop.permute.xlu0 %487
      %489 = vrot.lane.b32.xlu0 %v404, 4
      %v490 = vpop.permute.xlu0 %489
      %491 = vrot.lane.b32.xlu0 %v405, 4
      %v492 = vpop.permute.xlu0 %491
      %493 = vrot.lane.b32.xlu0 %v406, 4
      %v494 = vpop.permute.xlu0 %493
      %495 = vrot.lane.b32.xlu0 %v407, 4
      %v496 = vpop.permute.xlu0 %495
      %497 = vrot.lane.b32.xlu0 %v408, 4
      %v498 = vpop.permute.xlu0 %497
      %499 = vrot.lane.b32.xlu0 %v409, 4
      %v500 = vpop.permute.xlu0 %499
      %501 = vrot.lane.b32.xlu0 %v410, 4
      %v502 = vpop.permute.xlu0 %501
      %503 = vrot.lane.b32.xlu0 %v411, 4
      %v504 = vpop.permute.xlu0 %503
      %505 = vrot.lane.b32.xlu0 %v412, 4
      %v506 = vpop.permute.xlu0 %505
      %507 = vrot.lane.b32.xlu0 %v413, 4
      %v508 = vpop.permute.xlu0 %507
      %509 = vrot.lane.b32.xlu0 %v414, 4
      %v510 = vpop.permute.xlu0 %509
      %vm543 = vcmask 64544
      %544 = vst.msk [vmem:[#allocation3] sm:$0xff] %vm543, %v448
      %545 = vst.msk [vmem:[#allocation3 + $0x8] sm:$0xff] %vm543, %v450
      %546 = vst.msk [vmem:[#allocation3 + $0x10] sm:$0xff] %vm543, %v452
      %547 = vst.msk [vmem:[#allocation3 + $0x18] sm:$0xff] %vm543, %v454
      %548 = vst.msk [vmem:[#allocation3 + $0x20] sm:$0xff] %vm543, %v456
      %549 = vst.msk [vmem:[#allocation3 + $0x28] sm:$0xff] %vm543, %v458
      %550 = vst.msk [vmem:[#allocation3 + $0x30] sm:$0xff] %vm543, %v460
      %551 = vst.msk [vmem:[#allocation3 + $0x38] sm:$0xff] %vm543, %v462
      %552 = vst.msk [vmem:[#allocation3 + $0x40] sm:$0xff] %vm543, %v464
      %553 = vst.msk [vmem:[#allocation3 + $0x48] sm:$0xff] %vm543, %v466
      %554 = vst.msk [vmem:[#allocation3 + $0x50] sm:$0xff] %vm543, %v468
      %555 = vst.msk [vmem:[#allocation3 + $0x58] sm:$0xff] %vm543, %v470
      %556 = vst.msk [vmem:[#allocation3 + $0x60] sm:$0xff] %vm543, %v472
      %557 = vst.msk [vmem:[#allocation3 + $0x68] sm:$0xff] %vm543, %v474
      %558 = vst.msk [vmem:[#allocation3 + $0x70] sm:$0xff] %vm543, %v476
      %559 = vst.msk [vmem:[#allocation3 + $0x78] sm:$0xff] %vm543, %v478
      %560 = vst.msk [vmem:[#allocation3 + $0x80] sm:$0xff] %vm543, %v480
      %561 = vst.msk [vmem:[#allocation3 + $0x88] sm:$0xff] %vm543, %v482
      %562 = vst.msk [vmem:[#allocation3 + $0x90] sm:$0xff] %vm543, %v484
      %563 = vst.msk [vmem:[#allocation3 + $0x98] sm:$0xff] %vm543, %v486
      %564 = vst.msk [vmem:[#allocation3 + $0xa0] sm:$0xff] %vm543, %v488
      %565 = vst.msk [vmem:[#allocation3 + $0xa8] sm:$0xff] %vm543, %v490
      %566 = vst.msk [vmem:[#allocation3 + $0xb0] sm:$0xff] %vm543, %v492
      %567 = vst.msk [vmem:[#allocation3 + $0xb8] sm:$0xff] %vm543, %v494
      %568 = vst.msk [vmem:[#allocation3 + $0xc0] sm:$0xff] %vm543, %v496
      %569 = vst.msk [vmem:[#allocation3 + $0xc8] sm:$0xff] %vm543, %v498
      %570 = vst.msk [vmem:[#allocation3 + $0xd0] sm:$0xff] %vm543, %v500
      %571 = vst.msk [vmem:[#allocation3 + $0xd8] sm:$0xff] %vm543, %v502
      %572 = vst.msk [vmem:[#allocation3 + $0xe0] sm:$0xff] %vm543, %v504
      %573 = vst.msk [vmem:[#allocation3 + $0xe8] sm:$0xff] %vm543, %v506
      %574 = vst.msk [vmem:[#allocation3 + $0xf0] sm:$0xff] %vm543, %v508
      %575 = vst.msk [vmem:[#allocation3 + $0xf8] sm:$0xff] %vm543, %v510
      %v576 = vld [vmem:[#allocation2 + $0x2] sm:$0xff]
      %v577 = vld [vmem:[#allocation2 + $0xa] sm:$0xff]
      %v578 = vld [vmem:[#allocation2 + $0x1a] sm:$0xff]
      %v579 = vld [vmem:[#allocation2 + $0x22] sm:$0xff]
      %v580 = vld [vmem:[#allocation2 + $0x32] sm:$0xff]
      %v581 = vld [vmem:[#allocation2 + $0x3a] sm:$0xff]
      %v582 = vld [vmem:[#allocation2 + $0x4a] sm:$0xff]
      %v583 = vld [vmem:[#allocation2 + $0x52] sm:$0xff]
      %v584 = vld [vmem:[#allocation2 + $0x62] sm:$0xff]
      %v585 = vld [vmem:[#allocation2 + $0x6a] sm:$0xff]
      %v586 = vld [vmem:[#allocation2 + $0x7a] sm:$0xff]
      %v587 = vld [vmem:[#allocation2 + $0x82] sm:$0xff]
      %v588 = vld [vmem:[#allocation2 + $0x92] sm:$0xff]
      %v589 = vld [vmem:[#allocation2 + $0x9a] sm:$0xff]
      %v590 = vld [vmem:[#allocation2 + $0xaa] sm:$0xff]
      %v591 = vld [vmem:[#allocation2 + $0xb2] sm:$0xff]
      %v592 = vld [vmem:[#allocation2 + $0xc2] sm:$0xff]
      %v593 = vld [vmem:[#allocation2 + $0xca] sm:$0xff]
      %v594 = vld [vmem:[#allocation2 + $0xda] sm:$0xff]
      %v595 = vld [vmem:[#allocation2 + $0xe2] sm:$0xff]
      %v596 = vld [vmem:[#allocation2 + $0xf2] sm:$0xff]
      %v597 = vld [vmem:[#allocation2 + $0xfa] sm:$0xff]
      %v598 = vld [vmem:[#allocation2 + $0x10a] sm:$0xff]
      %v599 = vld [vmem:[#allocation2 + $0x112] sm:$0xff]
      %v600 = vld [vmem:[#allocation2 + $0x122] sm:$0xff]
      %v601 = vld [vmem:[#allocation2 + $0x12a] sm:$0xff]
      %v602 = vld [vmem:[#allocation2 + $0x13a] sm:$0xff]
      %v603 = vld [vmem:[#allocation2 + $0x142] sm:$0xff]
      %v604 = vld [vmem:[#allocation2 + $0x152] sm:$0xff]
      %v605 = vld [vmem:[#allocation2 + $0x15a] sm:$0xff]
      %v606 = vld [vmem:[#allocation2 + $0x16a] sm:$0xff]
      %v607 = vld [vmem:[#allocation2 + $0x172] sm:$0xff]
      %640 = vrot.lane.b32.xlu0 %v576, 8
      %v641 = vpop.permute.xlu0 %640
      %642 = vrot.lane.b32.xlu0 %v577, 8
      %v643 = vpop.permute.xlu0 %642
      %644 = vrot.lane.b32.xlu0 %v578, 8
      %v645 = vpop.permute.xlu0 %644
      %646 = vrot.lane.b32.xlu0 %v579, 8
      %v647 = vpop.permute.xlu0 %646
      %648 = vrot.lane.b32.xlu0 %v580, 8
      %v649 = vpop.permute.xlu0 %648
      %650 = vrot.lane.b32.xlu0 %v581, 8
      %v651 = vpop.permute.xlu0 %650
      %652 = vrot.lane.b32.xlu0 %v582, 8
      %v653 = vpop.permute.xlu0 %652
      %654 = vrot.lane.b32.xlu0 %v583, 8
      %v655 = vpop.permute.xlu0 %654
      %656 = vrot.lane.b32.xlu0 %v584, 8
      %v657 = vpop.permute.xlu0 %656
      %658 = vrot.lane.b32.xlu0 %v585, 8
      %v659 = vpop.permute.xlu0 %658
      %660 = vrot.lane.b32.xlu0 %v586, 8
      %v661 = vpop.permute.xlu0 %660
      %662 = vrot.lane.b32.xlu0 %v587, 8
      %v663 = vpop.permute.xlu0 %662
      %664 = vrot.lane.b32.xlu0 %v588, 8
      %v665 = vpop.permute.xlu0 %664
      %666 = vrot.lane.b32.xlu0 %v589, 8
      %v667 = vpop.permute.xlu0 %666
      %668 = vrot.lane.b32.xlu0 %v590, 8
      %v669 = vpop.permute.xlu0 %668
      %670 = vrot.lane.b32.xlu0 %v591, 8
      %v671 = vpop.permute.xlu0 %670
      %672 = vrot.lane.b32.xlu0 %v592, 8
      %v673 = vpop.permute.xlu0 %672
      %674 = vrot.lane.b32.xlu0 %v593, 8
      %v675 = vpop.permute.xlu0 %674
      %676 = vrot.lane.b32.xlu0 %v594, 8
      %v677 = vpop.permute.xlu0 %676
      %678 = vrot.lane.b32.xlu0 %v595, 8
      %v679 = vpop.permute.xlu0 %678
      %680 = vrot.lane.b32.xlu0 %v596, 8
      %v681 = vpop.permute.xlu0 %680
      %682 = vrot.lane.b32.xlu0 %v597, 8
      %v683 = vpop.permute.xlu0 %682
      %684 = vrot.lane.b32.xlu0 %v598, 8
      %v685 = vpop.permute.xlu0 %684
      %686 = vrot.lane.b32.xlu0 %v599, 8
      %v687 = vpop.permute.xlu0 %686
      %688 = vrot.lane.b32.xlu0 %v600, 8
      %v689 = vpop.permute.xlu0 %688
      %690 = vrot.lane.b32.xlu0 %v601, 8
      %v691 = vpop.permute.xlu0 %690
      %692 = vrot.lane.b32.xlu0 %v602, 8
      %v693 = vpop.permute.xlu0 %692
      %694 = vrot.lane.b32.xlu0 %v603, 8
      %v695 = vpop.permute.xlu0 %694
      %696 = vrot.lane.b32.xlu0 %v604, 8
      %v697 = vpop.permute.xlu0 %696
      %698 = vrot.lane.b32.xlu0 %v605, 8
      %v699 = vpop.permute.xlu0 %698
      %700 = vrot.lane.b32.xlu0 %v606, 8
      %v701 = vpop.permute.xlu0 %700
      %702 = vrot.lane.b32.xlu0 %v607, 8
      %v703 = vpop.permute.xlu0 %702
      %vm736 = vcmask 97344
      %737 = vst.msk [vmem:[#allocation3] sm:$0xff] %vm736, %v641
      %738 = vst.msk [vmem:[#allocation3 + $0x8] sm:$0xff] %vm736, %v643
      %739 = vst.msk [vmem:[#allocation3 + $0x10] sm:$0xff] %vm736, %v645
      %740 = vst.msk [vmem:[#allocation3 + $0x18] sm:$0xff] %vm736, %v647
      %741 = vst.msk [vmem:[#allocation3 + $0x20] sm:$0xff] %vm736, %v649
      %742 = vst.msk [vmem:[#allocation3 + $0x28] sm:$0xff] %vm736, %v651
      %743 = vst.msk [vmem:[#allocation3 + $0x30] sm:$0xff] %vm736, %v653
      %744 = vst.msk [vmem:[#allocation3 + $0x38] sm:$0xff] %vm736, %v655
      %745 = vst.msk [vmem:[#allocation3 + $0x40] sm:$0xff] %vm736, %v657
      %746 = vst.msk [vmem:[#allocation3 + $0x48] sm:$0xff] %vm736, %v659
      %747 = vst.msk [vmem:[#allocation3 + $0x50] sm:$0xff] %vm736, %v661
      %748 = vst.msk [vmem:[#allocation3 + $0x58] sm:$0xff] %vm736, %v663
      %749 = vst.msk [vmem:[#allocation3 + $0x60] sm:$0xff] %vm736, %v665
      %750 = vst.msk [vmem:[#allocation3 + $0x68] sm:$0xff] %vm736, %v667
      %751 = vst.msk [vmem:[#allocation3 + $0x70] sm:$0xff] %vm736, %v669
      %752 = vst.msk [vmem:[#allocation3 + $0x78] sm:$0xff] %vm736, %v671
      %753 = vst.msk [vmem:[#allocation3 + $0x80] sm:$0xff] %vm736, %v673
      %754 = vst.msk [vmem:[#allocation3 + $0x88] sm:$0xff] %vm736, %v675
      %755 = vst.msk [vmem:[#allocation3 + $0x90] sm:$0xff] %vm736, %v677
      %756 = vst.msk [vmem:[#allocation3 + $0x98] sm:$0xff] %vm736, %v679
      %757 = vst.msk [vmem:[#allocation3 + $0xa0] sm:$0xff] %vm736, %v681
      %758 = vst.msk [vmem:[#allocation3 + $0xa8] sm:$0xff] %vm736, %v683
      %759 = vst.msk [vmem:[#allocation3 + $0xb0] sm:$0xff] %vm736, %v685
      %760 = vst.msk [vmem:[#allocation3 + $0xb8] sm:$0xff] %vm736, %v687
      %761 = vst.msk [vmem:[#allocation3 + $0xc0] sm:$0xff] %vm736, %v689
      %762 = vst.msk [vmem:[#allocation3 + $0xc8] sm:$0xff] %vm736, %v691
      %763 = vst.msk [vmem:[#allocation3 + $0xd0] sm:$0xff] %vm736, %v693
      %764 = vst.msk [vmem:[#allocation3 + $0xd8] sm:$0xff] %vm736, %v695
      %765 = vst.msk [vmem:[#allocation3 + $0xe0] sm:$0xff] %vm736, %v697
      %766 = vst.msk [vmem:[#allocation3 + $0xe8] sm:$0xff] %vm736, %v699
      %767 = vst.msk [vmem:[#allocation3 + $0xf0] sm:$0xff] %vm736, %v701
      %768 = vst.msk [vmem:[#allocation3 + $0xf8] sm:$0xff] %vm736, %v703
      %v769 = vld [vmem:[%s286] sm:$0xff]
      %v770 = vld [vmem:[%s286 + $0x8] sm:$0xff]
      %v771 = vld [vmem:[%s286 + $0x18] sm:$0xff]
      %v772 = vld [vmem:[%s286 + $0x20] sm:$0xff]
      %v773 = vld [vmem:[%s286 + $0x30] sm:$0xff]
      %v774 = vld [vmem:[%s286 + $0x38] sm:$0xff]
      %v775 = vld [vmem:[%s286 + $0x48] sm:$0xff]
      %v776 = vld [vmem:[%s286 + $0x50] sm:$0xff]
      %v777 = vld [vmem:[%s286 + $0x60] sm:$0xff]
      %v778 = vld [vmem:[%s286 + $0x68] sm:$0xff]
      %v779 = vld [vmem:[%s286 + $0x78] sm:$0xff]
      %v780 = vld [vmem:[%s286 + $0x80] sm:$0xff]
      %v781 = vld [vmem:[%s286 + $0x90] sm:$0xff]
      %v782 = vld [vmem:[%s286 + $0x98] sm:$0xff]
      %v783 = vld [vmem:[%s286 + $0xa8] sm:$0xff]
      %v784 = vld [vmem:[%s286 + $0xb0] sm:$0xff]
      %v785 = vld [vmem:[%s286 + $0xc0] sm:$0xff]
      %v786 = vld [vmem:[%s286 + $0xc8] sm:$0xff]
      %v787 = vld [vmem:[%s286 + $0xd8] sm:$0xff]
      %v788 = vld [vmem:[%s286 + $0xe0] sm:$0xff]
      %v789 = vld [vmem:[%s286 + $0xf0] sm:$0xff]
      %v790 = vld [vmem:[%s286 + $0xf8] sm:$0xff]
      %v791 = vld [vmem:[%s286 + $0x108] sm:$0xff]
      %v792 = vld [vmem:[%s286 + $0x110] sm:$0xff]
      %v793 = vld [vmem:[%s286 + $0x120] sm:$0xff]
      %v794 = vld [vmem:[%s286 + $0x128] sm:$0xff]
      %v795 = vld [vmem:[%s286 + $0x138] sm:$0xff]
      %v796 = vld [vmem:[%s286 + $0x140] sm:$0xff]
      %v797 = vld [vmem:[%s286 + $0x150] sm:$0xff]
      %v798 = vld [vmem:[%s286 + $0x158] sm:$0xff]
      %v799 = vld [vmem:[%s286 + $0x168] sm:$0xff]
      %v800 = vld [vmem:[%s286 + $0x170] sm:$0xff]
      %833 = vrot.lane.b32.xlu0 %v769, 12
      %v834 = vpop.permute.xlu0 %833
      %835 = vrot.lane.b32.xlu0 %v770, 12
      %v836 = vpop.permute.xlu0 %835
      %837 = vrot.lane.b32.xlu0 %v771, 12
      %v838 = vpop.permute.xlu0 %837
      %839 = vrot.lane.b32.xlu0 %v772, 12
      %v840 = vpop.permute.xlu0 %839
      %841 = vrot.lane.b32.xlu0 %v773, 12
      %v842 = vpop.permute.xlu0 %841
      %843 = vrot.lane.b32.xlu0 %v774, 12
      %v844 = vpop.permute.xlu0 %843
      %845 = vrot.lane.b32.xlu0 %v775, 12
      %v846 = vpop.permute.xlu0 %845
      %847 = vrot.lane.b32.xlu0 %v776, 12
      %v848 = vpop.permute.xlu0 %847
      %849 = vrot.lane.b32.xlu0 %v777, 12
      %v850 = vpop.permute.xlu0 %849
      %851 = vrot.lane.b32.xlu0 %v778, 12
      %v852 = vpop.permute.xlu0 %851
      %853 = vrot.lane.b32.xlu0 %v779, 12
      %v854 = vpop.permute.xlu0 %853
      %855 = vrot.lane.b32.xlu0 %v780, 12
      %v856 = vpop.permute.xlu0 %855
      %857 = vrot.lane.b32.xlu0 %v781, 12
      %v858 = vpop.permute.xlu0 %857
      %859 = vrot.lane.b32.xlu0 %v782, 12
      %v860 = vpop.permute.xlu0 %859
      %861 = vrot.lane.b32.xlu0 %v783, 12
      %v862 = vpop.permute.xlu0 %861
      %863 = vrot.lane.b32.xlu0 %v784, 12
      %v864 = vpop.permute.xlu0 %863
      %865 = vrot.lane.b32.xlu0 %v785, 12
      %v866 = vpop.permute.xlu0 %865
      %867 = vrot.lane.b32.xlu0 %v786, 12
      %v868 = vpop.permute.xlu0 %867
      %869 = vrot.lane.b32.xlu0 %v787, 12
      %v870 = vpop.permute.xlu0 %869
      %871 = vrot.lane.b32.xlu0 %v788, 12
      %v872 = vpop.permute.xlu0 %871
      %873 = vrot.lane.b32.xlu0 %v789, 12
      %v874 = vpop.permute.xlu0 %873
      %875 = vrot.lane.b32.xlu0 %v790, 12
      %v876 = vpop.permute.xlu0 %875
      %877 = vrot.lane.b32.xlu0 %v791, 12
      %v878 = vpop.permute.xlu0 %877
      %879 = vrot.lane.b32.xlu0 %v792, 12
      %v880 = vpop.permute.xlu0 %879
      %881 = vrot.lane.b32.xlu0 %v793, 12
      %v882 = vpop.permute.xlu0 %881
      %883 = vrot.lane.b32.xlu0 %v794, 12
      %v884 = vpop.permute.xlu0 %883
      %885 = vrot.lane.b32.xlu0 %v795, 12
      %v886 = vpop.permute.xlu0 %885
      %887 = vrot.lane.b32.xlu0 %v796, 12
      %v888 = vpop.permute.xlu0 %887
      %889 = vrot.lane.b32.xlu0 %v797, 12
      %v890 = vpop.permute.xlu0 %889
      %891 = vrot.lane.b32.xlu0 %v798, 12
      %v892 = vpop.permute.xlu0 %891
      %893 = vrot.lane.b32.xlu0 %v799, 12
      %v894 = vpop.permute.xlu0 %893
      %895 = vrot.lane.b32.xlu0 %v800, 12
      %v896 = vpop.permute.xlu0 %895
      %vm929 = vcmask 130144
      %930 = vst.msk [vmem:[#allocation3] sm:$0xff] %vm929, %v834
      %931 = vst.msk [vmem:[#allocation3 + $0x8] sm:$0xff] %vm929, %v836
      %932 = vst.msk [vmem:[#allocation3 + $0x10] sm:$0xff] %vm929, %v838
      %933 = vst.msk [vmem:[#allocation3 + $0x18] sm:$0xff] %vm929, %v840
      %934 = vst.msk [vmem:[#allocation3 + $0x20] sm:$0xff] %vm929, %v842
      %935 = vst.msk [vmem:[#allocation3 + $0x28] sm:$0xff] %vm929, %v844
      %936 = vst.msk [vmem:[#allocation3 + $0x30] sm:$0xff] %vm929, %v846
      %937 = vst.msk [vmem:[#allocation3 + $0x38] sm:$0xff] %vm929, %v848
      %938 = vst.msk [vmem:[#allocation3 + $0x40] sm:$0xff] %vm929, %v850
      %939 = vst.msk [vmem:[#allocation3 + $0x48] sm:$0xff] %vm929, %v852
      %940 = vst.msk [vmem:[#allocation3 + $0x50] sm:$0xff] %vm929, %v854
      %941 = vst.msk [vmem:[#allocation3 + $0x58] sm:$0xff] %vm929, %v856
      %942 = vst.msk [vmem:[#allocation3 + $0x60] sm:$0xff] %vm929, %v858
      %943 = vst.msk [vmem:[#allocation3 + $0x68] sm:$0xff] %vm929, %v860
      %944 = vst.msk [vmem:[#allocation3 + $0x70] sm:$0xff] %vm929, %v862
      %945 = vst.msk [vmem:[#allocation3 + $0x78] sm:$0xff] %vm929, %v864
      %946 = vst.msk [vmem:[#allocation3 + $0x80] sm:$0xff] %vm929, %v866
      %947 = vst.msk [vmem:[#allocation3 + $0x88] sm:$0xff] %vm929, %v868
      %948 = vst.msk [vmem:[#allocation3 + $0x90] sm:$0xff] %vm929, %v870
      %949 = vst.msk [vmem:[#allocation3 + $0x98] sm:$0xff] %vm929, %v872
      %950 = vst.msk [vmem:[#allocation3 + $0xa0] sm:$0xff] %vm929, %v874
      %951 = vst.msk [vmem:[#allocation3 + $0xa8] sm:$0xff] %vm929, %v876
      %952 = vst.msk [vmem:[#allocation3 + $0xb0] sm:$0xff] %vm929, %v878
      %953 = vst.msk [vmem:[#allocation3 + $0xb8] sm:$0xff] %vm929, %v880
      %954 = vst.msk [vmem:[#allocation3 + $0xc0] sm:$0xff] %vm929, %v882
      %955 = vst.msk [vmem:[#allocation3 + $0xc8] sm:$0xff] %vm929, %v884
      %956 = vst.msk [vmem:[#allocation3 + $0xd0] sm:$0xff] %vm929, %v886
      %957 = vst.msk [vmem:[#allocation3 + $0xd8] sm:$0xff] %vm929, %v888
      %958 = vst.msk [vmem:[#allocation3 + $0xe0] sm:$0xff] %vm929, %v890
      %959 = vst.msk [vmem:[#allocation3 + $0xe8] sm:$0xff] %vm929, %v892
      %960 = vst.msk [vmem:[#allocation3 + $0xf0] sm:$0xff] %vm929, %v894
      %961 = vst.msk [vmem:[#allocation3 + $0xf8] sm:$0xff] %vm929, %v896
      %v962 = vld [vmem:[%s286 + $0x1] sm:$0xff]
      %v963 = vld [vmem:[%s286 + $0x9] sm:$0xff]
      %v964 = vld [vmem:[%s286 + $0x19] sm:$0xff]
      %v965 = vld [vmem:[%s286 + $0x21] sm:$0xff]
      %v966 = vld [vmem:[%s286 + $0x31] sm:$0xff]
      %v967 = vld [vmem:[%s286 + $0x39] sm:$0xff]
      %v968 = vld [vmem:[%s286 + $0x49] sm:$0xff]
      %v969 = vld [vmem:[%s286 + $0x51] sm:$0xff]
      %v970 = vld [vmem:[%s286 + $0x61] sm:$0xff]
      %v971 = vld [vmem:[%s286 + $0x69] sm:$0xff]
      %v972 = vld [vmem:[%s286 + $0x79] sm:$0xff]
      %v973 = vld [vmem:[%s286 + $0x81] sm:$0xff]
      %v974 = vld [vmem:[%s286 + $0x91] sm:$0xff]
      %v975 = vld [vmem:[%s286 + $0x99] sm:$0xff]
      %v976 = vld [vmem:[%s286 + $0xa9] sm:$0xff]
      %v977 = vld [vmem:[%s286 + $0xb1] sm:$0xff]
      %v978 = vld [vmem:[%s286 + $0xc1] sm:$0xff]
      %v979 = vld [vmem:[%s286 + $0xc9] sm:$0xff]
      %v980 = vld [vmem:[%s286 + $0xd9] sm:$0xff]
      %v981 = vld [vmem:[%s286 + $0xe1] sm:$0xff]
      %v982 = vld [vmem:[%s286 + $0xf1] sm:$0xff]
      %v983 = vld [vmem:[%s286 + $0xf9] sm:$0xff]
      %v984 = vld [vmem:[%s286 + $0x109] sm:$0xff]
      %v985 = vld [vmem:[%s286 + $0x111] sm:$0xff]
      %v986 = vld [vmem:[%s286 + $0x121] sm:$0xff]
      %v987 = vld [vmem:[%s286 + $0x129] sm:$0xff]
      %v988 = vld [vmem:[%s286 + $0x139] sm:$0xff]
      %v989 = vld [vmem:[%s286 + $0x141] sm:$0xff]
      %v990 = vld [vmem:[%s286 + $0x151] sm:$0xff]
      %v991 = vld [vmem:[%s286 + $0x159] sm:$0xff]
      %v992 = vld [vmem:[%s286 + $0x169] sm:$0xff]
      %v993 = vld [vmem:[%s286 + $0x171] sm:$0xff]
      %1026 = vrot.lane.b32.xlu0 %v962, 16
      %v1027 = vpop.permute.xlu0 %1026
      %1028 = vrot.lane.b32.xlu0 %v963, 16
      %v1029 = vpop.permute.xlu0 %1028
      %1030 = vrot.lane.b32.xlu0 %v964, 16
      %v1031 = vpop.permute.xlu0 %1030
      %1032 = vrot.lane.b32.xlu0 %v965, 16
      %v1033 = vpop.permute.xlu0 %1032
      %1034 = vrot.lane.b32.xlu0 %v966, 16
      %v1035 = vpop.permute.xlu0 %1034
      %1036 = vrot.lane.b32.xlu0 %v967, 16
      %v1037 = vpop.permute.xlu0 %1036
      %1038 = vrot.lane.b32.xlu0 %v968, 16
      %v1039 = vpop.permute.xlu0 %1038
      %1040 = vrot.lane.b32.xlu0 %v969, 16
      %v1041 = vpop.permute.xlu0 %1040
      %1042 = vrot.lane.b32.xlu0 %v970, 16
      %v1043 = vpop.permute.xlu0 %1042
      %1044 = vrot.lane.b32.xlu0 %v971, 16
      %v1045 = vpop.permute.xlu0 %1044
      %1046 = vrot.lane.b32.xlu0 %v972, 16
      %v1047 = vpop.permute.xlu0 %1046
      %1048 = vrot.lane.b32.xlu0 %v973, 16
      %v1049 = vpop.permute.xlu0 %1048
      %1050 = vrot.lane.b32.xlu0 %v974, 16
      %v1051 = vpop.permute.xlu0 %1050
      %1052 = vrot.lane.b32.xlu0 %v975, 16
      %v1053 = vpop.permute.xlu0 %1052
      %1054 = vrot.lane.b32.xlu0 %v976, 16
      %v1055 = vpop.permute.xlu0 %1054
      %1056 = vrot.lane.b32.xlu0 %v977, 16
      %v1057 = vpop.permute.xlu0 %1056
      %1058 = vrot.lane.b32.xlu0 %v978, 16
      %v1059 = vpop.permute.xlu0 %1058
      %1060 = vrot.lane.b32.xlu0 %v979, 16
      %v1061 = vpop.permute.xlu0 %1060
      %1062 = vrot.lane.b32.xlu0 %v980, 16
      %v1063 = vpop.permute.xlu0 %1062
      %1064 = vrot.lane.b32.xlu0 %v981, 16
      %v1065 = vpop.permute.xlu0 %1064
      %1066 = vrot.lane.b32.xlu0 %v982, 16
      %v1067 = vpop.permute.xlu0 %1066
      %1068 = vrot.lane.b32.xlu0 %v983, 16
      %v1069 = vpop.permute.xlu0 %1068
      %1070 = vrot.lane.b32.xlu0 %v984, 16
      %v1071 = vpop.permute.xlu0 %1070
      %1072 = vrot.lane.b32.xlu0 %v985, 16
      %v1073 = vpop.permute.xlu0 %1072
      %1074 = vrot.lane.b32.xlu0 %v986, 16
      %v1075 = vpop.permute.xlu0 %1074
      %1076 = vrot.lane.b32.xlu0 %v987, 16
      %v1077 = vpop.permute.xlu0 %1076
      %1078 = vrot.lane.b32.xlu0 %v988, 16
      %v1079 = vpop.permute.xlu0 %1078
      %1080 = vrot.lane.b32.xlu0 %v989, 16
      %v1081 = vpop.permute.xlu0 %1080
      %1082 = vrot.lane.b32.xlu0 %v990, 16
      %v1083 = vpop.permute.xlu0 %1082
      %1084 = vrot.lane.b32.xlu0 %v991, 16
      %v1085 = vpop.permute.xlu0 %1084
      %1086 = vrot.lane.b32.xlu0 %v992, 16
      %v1087 = vpop.permute.xlu0 %1086
      %1088 = vrot.lane.b32.xlu0 %v993, 16
      %v1089 = vpop.permute.xlu0 %1088
      %vm1122 = vcmask 162944
      %1123 = vst.msk [vmem:[#allocation3] sm:$0xff] %vm1122, %v1027
      %1124 = vst.msk [vmem:[#allocation3 + $0x8] sm:$0xff] %vm1122, %v1029
      %1125 = vst.msk [vmem:[#allocation3 + $0x10] sm:$0xff] %vm1122, %v1031
      %1126 = vst.msk [vmem:[#allocation3 + $0x18] sm:$0xff] %vm1122, %v1033
      %1127 = vst.msk [vmem:[#allocation3 + $0x20] sm:$0xff] %vm1122, %v1035
      %1128 = vst.msk [vmem:[#allocation3 + $0x28] sm:$0xff] %vm1122, %v1037
      %1129 = vst.msk [vmem:[#allocation3 + $0x30] sm:$0xff] %vm1122, %v1039
      %1130 = vst.msk [vmem:[#allocation3 + $0x38] sm:$0xff] %vm1122, %v1041
      %1131 = vst.msk [vmem:[#allocation3 + $0x40] sm:$0xff] %vm1122, %v1043
      %1132 = vst.msk [vmem:[#allocation3 + $0x48] sm:$0xff] %vm1122, %v1045
      %1133 = vst.msk [vmem:[#allocation3 + $0x50] sm:$0xff] %vm1122, %v1047
      %1134 = vst.msk [vmem:[#allocation3 + $0x58] sm:$0xff] %vm1122, %v1049
      %1135 = vst.msk [vmem:[#allocation3 + $0x60] sm:$0xff] %vm1122, %v1051
      %1136 = vst.msk [vmem:[#allocation3 + $0x68] sm:$0xff] %vm1122, %v1053
      %1137 = vst.msk [vmem:[#allocation3 + $0x70] sm:$0xff] %vm1122, %v1055
      %1138 = vst.msk [vmem:[#allocation3 + $0x78] sm:$0xff] %vm1122, %v1057
      %1139 = vst.msk [vmem:[#allocation3 + $0x80] sm:$0xff] %vm1122, %v1059
      %1140 = vst.msk [vmem:[#allocation3 + $0x88] sm:$0xff] %vm1122, %v1061
      %1141 = vst.msk [vmem:[#allocation3 + $0x90] sm:$0xff] %vm1122, %v1063
      %1142 = vst.msk [vmem:[#allocation3 + $0x98] sm:$0xff] %vm1122, %v1065
      %1143 = vst.msk [vmem:[#allocation3 + $0xa0] sm:$0xff] %vm1122, %v1067
      %1144 = vst.msk [vmem:[#allocation3 + $0xa8] sm:$0xff] %vm1122, %v1069
      %1145 = vst.msk [vmem:[#allocation3 + $0xb0] sm:$0xff] %vm1122, %v1071
      %1146 = vst.msk [vmem:[#allocation3 + $0xb8] sm:$0xff] %vm1122, %v1073
      %1147 = vst.msk [vmem:[#allocation3 + $0xc0] sm:$0xff] %vm1122, %v1075
      %1148 = vst.msk [vmem:[#allocation3 + $0xc8] sm:$0xff] %vm1122, %v1077
      %1149 = vst.msk [vmem:[#allocation3 + $0xd0] sm:$0xff] %vm1122, %v1079
      %1150 = vst.msk [vmem:[#allocation3 + $0xd8] sm:$0xff] %vm1122, %v1081
      %1151 = vst.msk [vmem:[#allocation3 + $0xe0] sm:$0xff] %vm1122, %v1083
      %1152 = vst.msk [vmem:[#allocation3 + $0xe8] sm:$0xff] %vm1122, %v1085
      %1153 = vst.msk [vmem:[#allocation3 + $0xf0] sm:$0xff] %vm1122, %v1087
      %1154 = vst.msk [vmem:[#allocation3 + $0xf8] sm:$0xff] %vm1122, %v1089
      %v1155 = vld [vmem:[%s286 + $0x2] sm:$0xff]
      %v1156 = vld [vmem:[%s286 + $0xa] sm:$0xff]
      %v1157 = vld [vmem:[%s286 + $0x1a] sm:$0xff]
      %v1158 = vld [vmem:[%s286 + $0x22] sm:$0xff]
      %v1159 = vld [vmem:[%s286 + $0x32] sm:$0xff]
      %v1160 = vld [vmem:[%s286 + $0x3a] sm:$0xff]
      %v1161 = vld [vmem:[%s286 + $0x4a] sm:$0xff]
      %v1162 = vld [vmem:[%s286 + $0x52] sm:$0xff]
      %v1163 = vld [vmem:[%s286 + $0x62] sm:$0xff]
      %v1164 = vld [vmem:[%s286 + $0x6a] sm:$0xff]
      %v1165 = vld [vmem:[%s286 + $0x7a] sm:$0xff]
      %v1166 = vld [vmem:[%s286 + $0x82] sm:$0xff]
      %v1167 = vld [vmem:[%s286 + $0x92] sm:$0xff]
      %v1168 = vld [vmem:[%s286 + $0x9a] sm:$0xff]
      %v1169 = vld [vmem:[%s286 + $0xaa] sm:$0xff]
      %v1170 = vld [vmem:[%s286 + $0xb2] sm:$0xff]
      %v1171 = vld [vmem:[%s286 + $0xc2] sm:$0xff]
      %v1172 = vld [vmem:[%s286 + $0xca] sm:$0xff]
      %v1173 = vld [vmem:[%s286 + $0xda] sm:$0xff]
      %v1174 = vld [vmem:[%s286 + $0xe2] sm:$0xff]
      %v1175 = vld [vmem:[%s286 + $0xf2] sm:$0xff]
      %v1176 = vld [vmem:[%s286 + $0xfa] sm:$0xff]
      %v1177 = vld [vmem:[%s286 + $0x10a] sm:$0xff]
      %v1178 = vld [vmem:[%s286 + $0x112] sm:$0xff]
      %v1179 = vld [vmem:[%s286 + $0x122] sm:$0xff]
      %v1180 = vld [vmem:[%s286 + $0x12a] sm:$0xff]
      %v1181 = vld [vmem:[%s286 + $0x13a] sm:$0xff]
      %v1182 = vld [vmem:[%s286 + $0x142] sm:$0xff]
      %v1183 = vld [vmem:[%s286 + $0x152] sm:$0xff]
      %v1184 = vld [vmem:[%s286 + $0x15a] sm:$0xff]
      %v1185 = vld [vmem:[%s286 + $0x16a] sm:$0xff]
      %v1186 = vld [vmem:[%s286 + $0x172] sm:$0xff]
      %1219 = vrot.lane.b32.xlu0 %v1155, 20
      %v1220 = vpop.permute.xlu0 %1219
      %1221 = vrot.lane.b32.xlu0 %v1156, 20
      %v1222 = vpop.permute.xlu0 %1221
      %1223 = vrot.lane.b32.xlu0 %v1157, 20
      %v1224 = vpop.permute.xlu0 %1223
      %1225 = vrot.lane.b32.xlu0 %v1158, 20
      %v1226 = vpop.permute.xlu0 %1225
      %1227 = vrot.lane.b32.xlu0 %v1159, 20
      %v1228 = vpop.permute.xlu0 %1227
      %1229 = vrot.lane.b32.xlu0 %v1160, 20
      %v1230 = vpop.permute.xlu0 %1229
      %1231 = vrot.lane.b32.xlu0 %v1161, 20
      %v1232 = vpop.permute.xlu0 %1231
      %1233 = vrot.lane.b32.xlu0 %v1162, 20
      %v1234 = vpop.permute.xlu0 %1233
      %1235 = vrot.lane.b32.xlu0 %v1163, 20
      %v1236 = vpop.permute.xlu0 %1235
      %1237 = vrot.lane.b32.xlu0 %v1164, 20
      %v1238 = vpop.permute.xlu0 %1237
      %1239 = vrot.lane.b32.xlu0 %v1165, 20
      %v1240 = vpop.permute.xlu0 %1239
      %1241 = vrot.lane.b32.xlu0 %v1166, 20
      %v1242 = vpop.permute.xlu0 %1241
      %1243 = vrot.lane.b32.xlu0 %v1167, 20
      %v1244 = vpop.permute.xlu0 %1243
      %1245 = vrot.lane.b32.xlu0 %v1168, 20
      %v1246 = vpop.permute.xlu0 %1245
      %1247 = vrot.lane.b32.xlu0 %v1169, 20
      %v1248 = vpop.permute.xlu0 %1247
      %1249 = vrot.lane.b32.xlu0 %v1170, 20
      %v1250 = vpop.permute.xlu0 %1249
      %1251 = vrot.lane.b32.xlu0 %v1171, 20
      %v1252 = vpop.permute.xlu0 %1251
      %1253 = vrot.lane.b32.xlu0 %v1172, 20
      %v1254 = vpop.permute.xlu0 %1253
      %1255 = vrot.lane.b32.xlu0 %v1173, 20
      %v1256 = vpop.permute.xlu0 %1255
      %1257 = vrot.lane.b32.xlu0 %v1174, 20
      %v1258 = vpop.permute.xlu0 %1257
      %1259 = vrot.lane.b32.xlu0 %v1175, 20
      %v1260 = vpop.permute.xlu0 %1259
      %1261 = vrot.lane.b32.xlu0 %v1176, 20
      %v1262 = vpop.permute.xlu0 %1261
      %1263 = vrot.lane.b32.xlu0 %v1177, 20
      %v1264 = vpop.permute.xlu0 %1263
      %1265 = vrot.lane.b32.xlu0 %v1178, 20
      %v1266 = vpop.permute.xlu0 %1265
      %1267 = vrot.lane.b32.xlu0 %v1179, 20
      %v1268 = vpop.permute.xlu0 %1267
      %1269 = vrot.lane.b32.xlu0 %v1180, 20
      %v1270 = vpop.permute.xlu0 %1269
      %1271 = vrot.lane.b32.xlu0 %v1181, 20
      %v1272 = vpop.permute.xlu0 %1271
      %1273 = vrot.lane.b32.xlu0 %v1182, 20
      %v1274 = vpop.permute.xlu0 %1273
      %1275 = vrot.lane.b32.xlu0 %v1183, 20
      %v1276 = vpop.permute.xlu0 %1275
      %1277 = vrot.lane.b32.xlu0 %v1184, 20
      %v1278 = vpop.permute.xlu0 %1277
      %1279 = vrot.lane.b32.xlu0 %v1185, 20
      %v1280 = vpop.permute.xlu0 %1279
      %1281 = vrot.lane.b32.xlu0 %v1186, 20
      %v1282 = vpop.permute.xlu0 %1281
      %vm1315 = vcmask 195744
      %1316 = vst.msk [vmem:[#allocation3] sm:$0xff] %vm1315, %v1220
      %1317 = vst.msk [vmem:[#allocation3 + $0x8] sm:$0xff] %vm1315, %v1222
      %1318 = vst.msk [vmem:[#allocation3 + $0x10] sm:$0xff] %vm1315, %v1224
      %1319 = vst.msk [vmem:[#allocation3 + $0x18] sm:$0xff] %vm1315, %v1226
      %1320 = vst.msk [vmem:[#allocation3 + $0x20] sm:$0xff] %vm1315, %v1228
      %1321 = vst.msk [vmem:[#allocation3 + $0x28] sm:$0xff] %vm1315, %v1230
      %1322 = vst.msk [vmem:[#allocation3 + $0x30] sm:$0xff] %vm1315, %v1232
      %1323 = vst.msk [vmem:[#allocation3 + $0x38] sm:$0xff] %vm1315, %v1234
      %1324 = vst.msk [vmem:[#allocation3 + $0x40] sm:$0xff] %vm1315, %v1236
      %1325 = vst.msk [vmem:[#allocation3 + $0x48] sm:$0xff] %vm1315, %v1238
      %1326 = vst.msk [vmem:[#allocation3 + $0x50] sm:$0xff] %vm1315, %v1240
      %1327 = vst.msk [vmem:[#allocation3 + $0x58] sm:$0xff] %vm1315, %v1242
      %1328 = vst.msk [vmem:[#allocation3 + $0x60] sm:$0xff] %vm1315, %v1244
      %1329 = vst.msk [vmem:[#allocation3 + $0x68] sm:$0xff] %vm1315, %v1246
      %1330 = vst.msk [vmem:[#allocation3 + $0x70] sm:$0xff] %vm1315, %v1248
      %1331 = vst.msk [vmem:[#allocation3 + $0x78] sm:$0xff] %vm1315, %v1250
      %1332 = vst.msk [vmem:[#allocation3 + $0x80] sm:$0xff] %vm1315, %v1252
      %1333 = vst.msk [vmem:[#allocation3 + $0x88] sm:$0xff] %vm1315, %v1254
      %1334 = vst.msk [vmem:[#allocation3 + $0x90] sm:$0xff] %vm1315, %v1256
      %1335 = vst.msk [vmem:[#allocation3 + $0x98] sm:$0xff] %vm1315, %v1258
      %1336 = vst.msk [vmem:[#allocation3 + $0xa0] sm:$0xff] %vm1315, %v1260
      %1337 = vst.msk [vmem:[#allocation3 + $0xa8] sm:$0xff] %vm1315, %v1262
      %1338 = vst.msk [vmem:[#allocation3 + $0xb0] sm:$0xff] %vm1315, %v1264
      %1339 = vst.msk [vmem:[#allocation3 + $0xb8] sm:$0xff] %vm1315, %v1266
      %1340 = vst.msk [vmem:[#allocation3 + $0xc0] sm:$0xff] %vm1315, %v1268
      %1341 = vst.msk [vmem:[#allocation3 + $0xc8] sm:$0xff] %vm1315, %v1270
      %1342 = vst.msk [vmem:[#allocation3 + $0xd0] sm:$0xff] %vm1315, %v1272
      %1343 = vst.msk [vmem:[#allocation3 + $0xd8] sm:$0xff] %vm1315, %v1274
      %1344 = vst.msk [vmem:[#allocation3 + $0xe0] sm:$0xff] %vm1315, %v1276
      %1345 = vst.msk [vmem:[#allocation3 + $0xe8] sm:$0xff] %vm1315, %v1278
      %1346 = vst.msk [vmem:[#allocation3 + $0xf0] sm:$0xff] %vm1315, %v1280
      %1347 = vst.msk [vmem:[#allocation3 + $0xf8] sm:$0xff] %vm1315, %v1282
      %s1348 = scalar_lea.vmem [#allocation2], 48
      %v1349 = vld [vmem:[%s1348] sm:$0xff]
      %v1350 = vld [vmem:[%s1348 + $0x8] sm:$0xff]
      %v1351 = vld [vmem:[%s1348 + $0x18] sm:$0xff]
      %v1352 = vld [vmem:[%s1348 + $0x20] sm:$0xff]
      %v1353 = vld [vmem:[%s1348 + $0x30] sm:$0xff]
      %v1354 = vld [vmem:[%s1348 + $0x38] sm:$0xff]
      %v1355 = vld [vmem:[%s1348 + $0x48] sm:$0xff]
      %v1356 = vld [vmem:[%s1348 + $0x50] sm:$0xff]
      %v1357 = vld [vmem:[%s1348 + $0x60] sm:$0xff]
      %v1358 = vld [vmem:[%s1348 + $0x68] sm:$0xff]
      %v1359 = vld [vmem:[%s1348 + $0x78] sm:$0xff]
      %v1360 = vld [vmem:[%s1348 + $0x80] sm:$0xff]
      %v1361 = vld [vmem:[%s1348 + $0x90] sm:$0xff]
      %v1362 = vld [vmem:[%s1348 + $0x98] sm:$0xff]
      %v1363 = vld [vmem:[%s1348 + $0xa8] sm:$0xff]
      %v1364 = vld [vmem:[%s1348 + $0xb0] sm:$0xff]
      %v1365 = vld [vmem:[%s1348 + $0xc0] sm:$0xff]
      %v1366 = vld [vmem:[%s1348 + $0xc8] sm:$0xff]
      %v1367 = vld [vmem:[%s1348 + $0xd8] sm:$0xff]
      %v1368 = vld [vmem:[%s1348 + $0xe0] sm:$0xff]
      %v1369 = vld [vmem:[%s1348 + $0xf0] sm:$0xff]
      %v1370 = vld [vmem:[%s1348 + $0xf8] sm:$0xff]
      %v1371 = vld [vmem:[%s1348 + $0x108] sm:$0xff]
      %v1372 = vld [vmem:[%s1348 + $0x110] sm:$0xff]
      %v1373 = vld [vmem:[%s1348 + $0x120] sm:$0xff]
      %v1374 = vld [vmem:[%s1348 + $0x128] sm:$0xff]
      %v1375 = vld [vmem:[%s1348 + $0x138] sm:$0xff]
      %v1376 = vld [vmem:[%s1348 + $0x140] sm:$0xff]
      %v1377 = vld [vmem:[%s1348 + $0x150] sm:$0xff]
      %v1378 = vld [vmem:[%s1348 + $0x158] sm:$0xff]
      %v1379 = vld [vmem:[%s1348 + $0x168] sm:$0xff]
      %v1380 = vld [vmem:[%s1348 + $0x170] sm:$0xff]
      %1413 = vrot.lane.b32.xlu0 %v1349, 24
      %v1414 = vpop.permute.xlu0 %1413
      %1415 = vrot.lane.b32.xlu0 %v1350, 24
      %v1416 = vpop.permute.xlu0 %1415
      %1417 = vrot.lane.b32.xlu0 %v1351, 24
      %v1418 = vpop.permute.xlu0 %1417
      %1419 = vrot.lane.b32.xlu0 %v1352, 24
      %v1420 = vpop.permute.xlu0 %1419
      %1421 = vrot.lane.b32.xlu0 %v1353, 24
      %v1422 = vpop.permute.xlu0 %1421
      %1423 = vrot.lane.b32.xlu0 %v1354, 24
      %v1424 = vpop.permute.xlu0 %1423
      %1425 = vrot.lane.b32.xlu0 %v1355, 24
      %v1426 = vpop.permute.xlu0 %1425
      %1427 = vrot.lane.b32.xlu0 %v1356, 24
      %v1428 = vpop.permute.xlu0 %1427
      %1429 = vrot.lane.b32.xlu0 %v1357, 24
      %v1430 = vpop.permute.xlu0 %1429
      %1431 = vrot.lane.b32.xlu0 %v1358, 24
      %v1432 = vpop.permute.xlu0 %1431
      %1433 = vrot.lane.b32.xlu0 %v1359, 24
      %v1434 = vpop.permute.xlu0 %1433
      %1435 = vrot.lane.b32.xlu0 %v1360, 24
      %v1436 = vpop.permute.xlu0 %1435
      %1437 = vrot.lane.b32.xlu0 %v1361, 24
      %v1438 = vpop.permute.xlu0 %1437
      %1439 = vrot.lane.b32.xlu0 %v1362, 24
      %v1440 = vpop.permute.xlu0 %1439
      %1441 = vrot.lane.b32.xlu0 %v1363, 24
      %v1442 = vpop.permute.xlu0 %1441
      %1443 = vrot.lane.b32.xlu0 %v1364, 24
      %v1444 = vpop.permute.xlu0 %1443
      %1445 = vrot.lane.b32.xlu0 %v1365, 24
      %v1446 = vpop.permute.xlu0 %1445
      %1447 = vrot.lane.b32.xlu0 %v1366, 24
      %v1448 = vpop.permute.xlu0 %1447
      %1449 = vrot.lane.b32.xlu0 %v1367, 24
      %v1450 = vpop.permute.xlu0 %1449
      %1451 = vrot.lane.b32.xlu0 %v1368, 24
      %v1452 = vpop.permute.xlu0 %1451
      %1453 = vrot.lane.b32.xlu0 %v1369, 24
      %v1454 = vpop.permute.xlu0 %1453
      %1455 = vrot.lane.b32.xlu0 %v1370, 24
      %v1456 = vpop.permute.xlu0 %1455
      %1457 = vrot.lane.b32.xlu0 %v1371, 24
      %v1458 = vpop.permute.xlu0 %1457
      %1459 = vrot.lane.b32.xlu0 %v1372, 24
      %v1460 = vpop.permute.xlu0 %1459
      %1461 = vrot.lane.b32.xlu0 %v1373, 24
      %v1462 = vpop.permute.xlu0 %1461
      %1463 = vrot.lane.b32.xlu0 %v1374, 24
      %v1464 = vpop.permute.xlu0 %1463
      %1465 = vrot.lane.b32.xlu0 %v1375, 24
      %v1466 = vpop.permute.xlu0 %1465
      %1467 = vrot.lane.b32.xlu0 %v1376, 24
      %v1468 = vpop.permute.xlu0 %1467
      %1469 = vrot.lane.b32.xlu0 %v1377, 24
      %v1470 = vpop.permute.xlu0 %1469
      %1471 = vrot.lane.b32.xlu0 %v1378, 24
      %v1472 = vpop.permute.xlu0 %1471
      %1473 = vrot.lane.b32.xlu0 %v1379, 24
      %v1474 = vpop.permute.xlu0 %1473
      %1475 = vrot.lane.b32.xlu0 %v1380, 24
      %v1476 = vpop.permute.xlu0 %1475
      %vm1509 = vcmask 228544
      %1510 = vst.msk [vmem:[#allocation3] sm:$0xff] %vm1509, %v1414
      %1511 = vst.msk [vmem:[#allocation3 + $0x8] sm:$0xff] %vm1509, %v1416
      %1512 = vst.msk [vmem:[#allocation3 + $0x10] sm:$0xff] %vm1509, %v1418
      %1513 = vst.msk [vmem:[#allocation3 + $0x18] sm:$0xff] %vm1509, %v1420
      %1514 = vst.msk [vmem:[#allocation3 + $0x20] sm:$0xff] %vm1509, %v1422
      %1515 = vst.msk [vmem:[#allocation3 + $0x28] sm:$0xff] %vm1509, %v1424
      %1516 = vst.msk [vmem:[#allocation3 + $0x30] sm:$0xff] %vm1509, %v1426
      %1517 = vst.msk [vmem:[#allocation3 + $0x38] sm:$0xff] %vm1509, %v1428
      %1518 = vst.msk [vmem:[#allocation3 + $0x40] sm:$0xff] %vm1509, %v1430
      %1519 = vst.msk [vmem:[#allocation3 + $0x48] sm:$0xff] %vm1509, %v1432
      %1520 = vst.msk [vmem:[#allocation3 + $0x50] sm:$0xff] %vm1509, %v1434
      %1521 = vst.msk [vmem:[#allocation3 + $0x58] sm:$0xff] %vm1509, %v1436
      %1522 = vst.msk [vmem:[#allocation3 + $0x60] sm:$0xff] %vm1509, %v1438
      %1523 = vst.msk [vmem:[#allocation3 + $0x68] sm:$0xff] %vm1509, %v1440
      %1524 = vst.msk [vmem:[#allocation3 + $0x70] sm:$0xff] %vm1509, %v1442
      %1525 = vst.msk [vmem:[#allocation3 + $0x78] sm:$0xff] %vm1509, %v1444
      %1526 = vst.msk [vmem:[#allocation3 + $0x80] sm:$0xff] %vm1509, %v1446
      %1527 = vst.msk [vmem:[#allocation3 + $0x88] sm:$0xff] %vm1509, %v1448
      %1528 = vst.msk [vmem:[#allocation3 + $0x90] sm:$0xff] %vm1509, %v1450
      %1529 = vst.msk [vmem:[#allocation3 + $0x98] sm:$0xff] %vm1509, %v1452
      %1530 = vst.msk [vmem:[#allocation3 + $0xa0] sm:$0xff] %vm1509, %v1454
      %1531 = vst.msk [vmem:[#allocation3 + $0xa8] sm:$0xff] %vm1509, %v1456
      %1532 = vst.msk [vmem:[#allocation3 + $0xb0] sm:$0xff] %vm1509, %v1458
      %1533 = vst.msk [vmem:[#allocation3 + $0xb8] sm:$0xff] %vm1509, %v1460
      %1534 = vst.msk [vmem:[#allocation3 + $0xc0] sm:$0xff] %vm1509, %v1462
      %1535 = vst.msk [vmem:[#allocation3 + $0xc8] sm:$0xff] %vm1509, %v1464
      %1536 = vst.msk [vmem:[#allocation3 + $0xd0] sm:$0xff] %vm1509, %v1466
      %1537 = vst.msk [vmem:[#allocation3 + $0xd8] sm:$0xff] %vm1509, %v1468
      %1538 = vst.msk [vmem:[#allocation3 + $0xe0] sm:$0xff] %vm1509, %v1470
      %1539 = vst.msk [vmem:[#allocation3 + $0xe8] sm:$0xff] %vm1509, %v1472
      %1540 = vst.msk [vmem:[#allocation3 + $0xf0] sm:$0xff] %vm1509, %v1474
      %1541 = vst.msk [vmem:[#allocation3 + $0xf8] sm:$0xff] %vm1509, %v1476
      %v1542 = vld [vmem:[%s1348 + $0x1] sm:$0xff]
      %v1543 = vld [vmem:[%s1348 + $0x9] sm:$0xff]
      %v1544 = vld [vmem:[%s1348 + $0x19] sm:$0xff]
      %v1545 = vld [vmem:[%s1348 + $0x21] sm:$0xff]
      %v1546 = vld [vmem:[%s1348 + $0x31] sm:$0xff]
      %v1547 = vld [vmem:[%s1348 + $0x39] sm:$0xff]
      %v1548 = vld [vmem:[%s1348 + $0x49] sm:$0xff]
      %v1549 = vld [vmem:[%s1348 + $0x51] sm:$0xff]
      %v1550 = vld [vmem:[%s1348 + $0x61] sm:$0xff]
      %v1551 = vld [vmem:[%s1348 + $0x69] sm:$0xff]
      %v1552 = vld [vmem:[%s1348 + $0x79] sm:$0xff]
      %v1553 = vld [vmem:[%s1348 + $0x81] sm:$0xff]
      %v1554 = vld [vmem:[%s1348 + $0x91] sm:$0xff]
      %v1555 = vld [vmem:[%s1348 + $0x99] sm:$0xff]
      %v1556 = vld [vmem:[%s1348 + $0xa9] sm:$0xff]
      %v1557 = vld [vmem:[%s1348 + $0xb1] sm:$0xff]
      %v1558 = vld [vmem:[%s1348 + $0xc1] sm:$0xff]
      %v1559 = vld [vmem:[%s1348 + $0xc9] sm:$0xff]
      %v1560 = vld [vmem:[%s1348 + $0xd9] sm:$0xff]
      %v1561 = vld [vmem:[%s1348 + $0xe1] sm:$0xff]
      %v1562 = vld [vmem:[%s1348 + $0xf1] sm:$0xff]
      %v1563 = vld [vmem:[%s1348 + $0xf9] sm:$0xff]
      %v1564 = vld [vmem:[%s1348 + $0x109] sm:$0xff]
      %v1565 = vld [vmem:[%s1348 + $0x111] sm:$0xff]
      %v1566 = vld [vmem:[%s1348 + $0x121] sm:$0xff]
      %v1567 = vld [vmem:[%s1348 + $0x129] sm:$0xff]
      %v1568 = vld [vmem:[%s1348 + $0x139] sm:$0xff]
      %v1569 = vld [vmem:[%s1348 + $0x141] sm:$0xff]
      %v1570 = vld [vmem:[%s1348 + $0x151] sm:$0xff]
      %v1571 = vld [vmem:[%s1348 + $0x159] sm:$0xff]
      %v1572 = vld [vmem:[%s1348 + $0x169] sm:$0xff]
      %v1573 = vld [vmem:[%s1348 + $0x171] sm:$0xff]
      %1606 = vrot.lane.b32.xlu0 %v1542, 28
      %v1607 = vpop.permute.xlu0 %1606
      %1608 = vrot.lane.b32.xlu0 %v1543, 28
      %v1609 = vpop.permute.xlu0 %1608
      %1610 = vrot.lane.b32.xlu0 %v1544, 28
      %v1611 = vpop.permute.xlu0 %1610
      %1612 = vrot.lane.b32.xlu0 %v1545, 28
      %v1613 = vpop.permute.xlu0 %1612
      %1614 = vrot.lane.b32.xlu0 %v1546, 28
      %v1615 = vpop.permute.xlu0 %1614
      %1616 = vrot.lane.b32.xlu0 %v1547, 28
      %v1617 = vpop.permute.xlu0 %1616
      %1618 = vrot.lane.b32.xlu0 %v1548, 28
      %v1619 = vpop.permute.xlu0 %1618
      %1620 = vrot.lane.b32.xlu0 %v1549, 28
      %v1621 = vpop.permute.xlu0 %1620
      %1622 = vrot.lane.b32.xlu0 %v1550, 28
      %v1623 = vpop.permute.xlu0 %1622
      %1624 = vrot.lane.b32.xlu0 %v1551, 28
      %v1625 = vpop.permute.xlu0 %1624
      %1626 = vrot.lane.b32.xlu0 %v1552, 28
      %v1627 = vpop.permute.xlu0 %1626
      %1628 = vrot.lane.b32.xlu0 %v1553, 28
      %v1629 = vpop.permute.xlu0 %1628
      %1630 = vrot.lane.b32.xlu0 %v1554, 28
      %v1631 = vpop.permute.xlu0 %1630
      %1632 = vrot.lane.b32.xlu0 %v1555, 28
      %v1633 = vpop.permute.xlu0 %1632
      %1634 = vrot.lane.b32.xlu0 %v1556, 28
      %v1635 = vpop.permute.xlu0 %1634
      %1636 = vrot.lane.b32.xlu0 %v1557, 28
      %v1637 = vpop.permute.xlu0 %1636
      %1638 = vrot.lane.b32.xlu0 %v1558, 28
      %v1639 = vpop.permute.xlu0 %1638
      %1640 = vrot.lane.b32.xlu0 %v1559, 28
      %v1641 = vpop.permute.xlu0 %1640
      %1642 = vrot.lane.b32.xlu0 %v1560, 28
      %v1643 = vpop.permute.xlu0 %1642
      %1644 = vrot.lane.b32.xlu0 %v1561, 28
      %v1645 = vpop.permute.xlu0 %1644
      %1646 = vrot.lane.b32.xlu0 %v1562, 28
      %v1647 = vpop.permute.xlu0 %1646
      %1648 = vrot.lane.b32.xlu0 %v1563, 28
      %v1649 = vpop.permute.xlu0 %1648
      %1650 = vrot.lane.b32.xlu0 %v1564, 28
      %v1651 = vpop.permute.xlu0 %1650
      %1652 = vrot.lane.b32.xlu0 %v1565, 28
      %v1653 = vpop.permute.xlu0 %1652
      %1654 = vrot.lane.b32.xlu0 %v1566, 28
      %v1655 = vpop.permute.xlu0 %1654
      %1656 = vrot.lane.b32.xlu0 %v1567, 28
      %v1657 = vpop.permute.xlu0 %1656
      %1658 = vrot.lane.b32.xlu0 %v1568, 28
      %v1659 = vpop.permute.xlu0 %1658
      %1660 = vrot.lane.b32.xlu0 %v1569, 28
      %v1661 = vpop.permute.xlu0 %1660
      %1662 = vrot.lane.b32.xlu0 %v1570, 28
      %v1663 = vpop.permute.xlu0 %1662
      %1664 = vrot.lane.b32.xlu0 %v1571, 28
      %v1665 = vpop.permute.xlu0 %1664
      %1666 = vrot.lane.b32.xlu0 %v1572, 28
      %v1667 = vpop.permute.xlu0 %1666
      %1668 = vrot.lane.b32.xlu0 %v1573, 28
      %v1669 = vpop.permute.xlu0 %1668
      %vm1702 = vcmask 261344
      %1703 = vst.msk [vmem:[#allocation3] sm:$0xff] %vm1702, %v1607
      %1704 = vst.msk [vmem:[#allocation3 + $0x8] sm:$0xff] %vm1702, %v1609
      %1705 = vst.msk [vmem:[#allocation3 + $0x10] sm:$0xff] %vm1702, %v1611
      %1706 = vst.msk [vmem:[#allocation3 + $0x18] sm:$0xff] %vm1702, %v1613
      %1707 = vst.msk [vmem:[#allocation3 + $0x20] sm:$0xff] %vm1702, %v1615
      %1708 = vst.msk [vmem:[#allocation3 + $0x28] sm:$0xff] %vm1702, %v1617
      %1709 = vst.msk [vmem:[#allocation3 + $0x30] sm:$0xff] %vm1702, %v1619
      %1710 = vst.msk [vmem:[#allocation3 + $0x38] sm:$0xff] %vm1702, %v1621
      %1711 = vst.msk [vmem:[#allocation3 + $0x40] sm:$0xff] %vm1702, %v1623
      %1712 = vst.msk [vmem:[#allocation3 + $0x48] sm:$0xff] %vm1702, %v1625
      %1713 = vst.msk [vmem:[#allocation3 + $0x50] sm:$0xff] %vm1702, %v1627
      %1714 = vst.msk [vmem:[#allocation3 + $0x58] sm:$0xff] %vm1702, %v1629
      %1715 = vst.msk [vmem:[#allocation3 + $0x60] sm:$0xff] %vm1702, %v1631
      %1716 = vst.msk [vmem:[#allocation3 + $0x68] sm:$0xff] %vm1702, %v1633
      %1717 = vst.msk [vmem:[#allocation3 + $0x70] sm:$0xff] %vm1702, %v1635
      %1718 = vst.msk [vmem:[#allocation3 + $0x78] sm:$0xff] %vm1702, %v1637
      %1719 = vst.msk [vmem:[#allocation3 + $0x80] sm:$0xff] %vm1702, %v1639
      %1720 = vst.msk [vmem:[#allocation3 + $0x88] sm:$0xff] %vm1702, %v1641
      %1721 = vst.msk [vmem:[#allocation3 + $0x90] sm:$0xff] %vm1702, %v1643
      %1722 = vst.msk [vmem:[#allocation3 + $0x98] sm:$0xff] %vm1702, %v1645
      %1723 = vst.msk [vmem:[#allocation3 + $0xa0] sm:$0xff] %vm1702, %v1647
      %1724 = vst.msk [vmem:[#allocation3 + $0xa8] sm:$0xff] %vm1702, %v1649
      %1725 = vst.msk [vmem:[#allocation3 + $0xb0] sm:$0xff] %vm1702, %v1651
      %1726 = vst.msk [vmem:[#allocation3 + $0xb8] sm:$0xff] %vm1702, %v1653
      %1727 = vst.msk [vmem:[#allocation3 + $0xc0] sm:$0xff] %vm1702, %v1655
      %1728 = vst.msk [vmem:[#allocation3 + $0xc8] sm:$0xff] %vm1702, %v1657
      %1729 = vst.msk [vmem:[#allocation3 + $0xd0] sm:$0xff] %vm1702, %v1659
      %1730 = vst.msk [vmem:[#allocation3 + $0xd8] sm:$0xff] %vm1702, %v1661
      %1731 = vst.msk [vmem:[#allocation3 + $0xe0] sm:$0xff] %vm1702, %v1663
      %1732 = vst.msk [vmem:[#allocation3 + $0xe8] sm:$0xff] %vm1702, %v1665
      %1733 = vst.msk [vmem:[#allocation3 + $0xf0] sm:$0xff] %vm1702, %v1667
      %1734 = vst.msk [vmem:[#allocation3 + $0xf8] sm:$0xff] %vm1702, %v1669
      %v1735 = vld [vmem:[%s1348 + $0x2] sm:$0xff]
      %v1736 = vld [vmem:[%s1348 + $0xa] sm:$0xff]
      %v1737 = vld [vmem:[%s1348 + $0x1a] sm:$0xff]
      %v1738 = vld [vmem:[%s1348 + $0x22] sm:$0xff]
      %v1739 = vld [vmem:[%s1348 + $0x32] sm:$0xff]
      %v1740 = vld [vmem:[%s1348 + $0x3a] sm:$0xff]
      %v1741 = vld [vmem:[%s1348 + $0x4a] sm:$0xff]
      %v1742 = vld [vmem:[%s1348 + $0x52] sm:$0xff]
      %v1743 = vld [vmem:[%s1348 + $0x62] sm:$0xff]
      %v1744 = vld [vmem:[%s1348 + $0x6a] sm:$0xff]
      %v1745 = vld [vmem:[%s1348 + $0x7a] sm:$0xff]
      %v1746 = vld [vmem:[%s1348 + $0x82] sm:$0xff]
      %v1747 = vld [vmem:[%s1348 + $0x92] sm:$0xff]
      %v1748 = vld [vmem:[%s1348 + $0x9a] sm:$0xff]
      %v1749 = vld [vmem:[%s1348 + $0xaa] sm:$0xff]
      %v1750 = vld [vmem:[%s1348 + $0xb2] sm:$0xff]
      %v1751 = vld [vmem:[%s1348 + $0xc2] sm:$0xff]
      %v1752 = vld [vmem:[%s1348 + $0xca] sm:$0xff]
      %v1753 = vld [vmem:[%s1348 + $0xda] sm:$0xff]
      %v1754 = vld [vmem:[%s1348 + $0xe2] sm:$0xff]
      %v1755 = vld [vmem:[%s1348 + $0xf2] sm:$0xff]
      %v1756 = vld [vmem:[%s1348 + $0xfa] sm:$0xff]
      %v1757 = vld [vmem:[%s1348 + $0x10a] sm:$0xff]
      %v1758 = vld [vmem:[%s1348 + $0x112] sm:$0xff]
      %v1759 = vld [vmem:[%s1348 + $0x122] sm:$0xff]
      %v1760 = vld [vmem:[%s1348 + $0x12a] sm:$0xff]
      %v1761 = vld [vmem:[%s1348 + $0x13a] sm:$0xff]
      %v1762 = vld [vmem:[%s1348 + $0x142] sm:$0xff]
      %v1763 = vld [vmem:[%s1348 + $0x152] sm:$0xff]
      %v1764 = vld [vmem:[%s1348 + $0x15a] sm:$0xff]
      %v1765 = vld [vmem:[%s1348 + $0x16a] sm:$0xff]
      %v1766 = vld [vmem:[%s1348 + $0x172] sm:$0xff]
      %1799 = vrot.lane.b32.xlu0 %v1735, 32
      %v1800 = vpop.permute.xlu0 %1799
      %1801 = vrot.lane.b32.xlu0 %v1736, 32
      %v1802 = vpop.permute.xlu0 %1801
      %1803 = vrot.lane.b32.xlu0 %v1737, 32
      %v1804 = vpop.permute.xlu0 %1803
      %1805 = vrot.lane.b32.xlu0 %v1738, 32
      %v1806 = vpop.permute.xlu0 %1805
      %1807 = vrot.lane.b32.xlu0 %v1739, 32
      %v1808 = vpop.permute.xlu0 %1807
      %1809 = vrot.lane.b32.xlu0 %v1740, 32
      %v1810 = vpop.permute.xlu0 %1809
      %1811 = vrot.lane.b32.xlu0 %v1741, 32
      %v1812 = vpop.permute.xlu0 %1811
      %1813 = vrot.lane.b32.xlu0 %v1742, 32
      %v1814 = vpop.permute.xlu0 %1813
      %1815 = vrot.lane.b32.xlu0 %v1743, 32
      %v1816 = vpop.permute.xlu0 %1815
      %1817 = vrot.lane.b32.xlu0 %v1744, 32
      %v1818 = vpop.permute.xlu0 %1817
      %1819 = vrot.lane.b32.xlu0 %v1745, 32
      %v1820 = vpop.permute.xlu0 %1819
      %1821 = vrot.lane.b32.xlu0 %v1746, 32
      %v1822 = vpop.permute.xlu0 %1821
      %1823 = vrot.lane.b32.xlu0 %v1747, 32
      %v1824 = vpop.permute.xlu0 %1823
      %1825 = vrot.lane.b32.xlu0 %v1748, 32
      %v1826 = vpop.permute.xlu0 %1825
      %1827 = vrot.lane.b32.xlu0 %v1749, 32
      %v1828 = vpop.permute.xlu0 %1827
      %1829 = vrot.lane.b32.xlu0 %v1750, 32
      %v1830 = vpop.permute.xlu0 %1829
      %1831 = vrot.lane.b32.xlu0 %v1751, 32
      %v1832 = vpop.permute.xlu0 %1831
      %1833 = vrot.lane.b32.xlu0 %v1752, 32
      %v1834 = vpop.permute.xlu0 %1833
      %1835 = vrot.lane.b32.xlu0 %v1753, 32
      %v1836 = vpop.permute.xlu0 %1835
      %1837 = vrot.lane.b32.xlu0 %v1754, 32
      %v1838 = vpop.permute.xlu0 %1837
      %1839 = vrot.lane.b32.xlu0 %v1755, 32
      %v1840 = vpop.permute.xlu0 %1839
      %1841 = vrot.lane.b32.xlu0 %v1756, 32
      %v1842 = vpop.permute.xlu0 %1841
      %1843 = vrot.lane.b32.xlu0 %v1757, 32
      %v1844 = vpop.permute.xlu0 %1843
      %1845 = vrot.lane.b32.xlu0 %v1758, 32
      %v1846 = vpop.permute.xlu0 %1845
      %1847 = vrot.lane.b32.xlu0 %v1759, 32
      %v1848 = vpop.permute.xlu0 %1847
      %1849 = vrot.lane.b32.xlu0 %v1760, 32
      %v1850 = vpop.permute.xlu0 %1849
      %1851 = vrot.lane.b32.xlu0 %v1761, 32
      %v1852 = vpop.permute.xlu0 %1851
      %1853 = vrot.lane.b32.xlu0 %v1762, 32
      %v1854 = vpop.permute.xlu0 %1853
      %1855 = vrot.lane.b32.xlu0 %v1763, 32
      %v1856 = vpop.permute.xlu0 %1855
      %1857 = vrot.lane.b32.xlu0 %v1764, 32
      %v1858 = vpop.permute.xlu0 %1857
      %1859 = vrot.lane.b32.xlu0 %v1765, 32
      %v1860 = vpop.permute.xlu0 %1859
      %1861 = vrot.lane.b32.xlu0 %v1766, 32
      %v1862 = vpop.permute.xlu0 %1861
      %vm1895 = vcmask 294144
      %1896 = vst.msk [vmem:[#allocation3] sm:$0xff] %vm1895, %v1800
      %1897 = vst.msk [vmem:[#allocation3 + $0x8] sm:$0xff] %vm1895, %v1802
      %1898 = vst.msk [vmem:[#allocation3 + $0x10] sm:$0xff] %vm1895, %v1804
      %1899 = vst.msk [vmem:[#allocation3 + $0x18] sm:$0xff] %vm1895, %v1806
      %1900 = vst.msk [vmem:[#allocation3 + $0x20] sm:$0xff] %vm1895, %v1808
      %1901 = vst.msk [vmem:[#allocation3 + $0x28] sm:$0xff] %vm1895, %v1810
      %1902 = vst.msk [vmem:[#allocation3 + $0x30] sm:$0xff] %vm1895, %v1812
      %1903 = vst.msk [vmem:[#allocation3 + $0x38] sm:$0xff] %vm1895, %v1814
      %1904 = vst.msk [vmem:[#allocation3 + $0x40] sm:$0xff] %vm1895, %v1816
      %1905 = vst.msk [vmem:[#allocation3 + $0x48] sm:$0xff] %vm1895, %v1818
      %1906 = vst.msk [vmem:[#allocation3 + $0x50] sm:$0xff] %vm1895, %v1820
      %1907 = vst.msk [vmem:[#allocation3 + $0x58] sm:$0xff] %vm1895, %v1822
      %1908 = vst.msk [vmem:[#allocation3 + $0x60] sm:$0xff] %vm1895, %v1824
      %1909 = vst.msk [vmem:[#allocation3 + $0x68] sm:$0xff] %vm1895, %v1826
      %1910 = vst.msk [vmem:[#allocation3 + $0x70] sm:$0xff] %vm1895, %v1828
      %1911 = vst.msk [vmem:[#allocation3 + $0x78] sm:$0xff] %vm1895, %v1830
      %1912 = vst.msk [vmem:[#allocation3 + $0x80] sm:$0xff] %vm1895, %v1832
      %1913 = vst.msk [vmem:[#allocation3 + $0x88] sm:$0xff] %vm1895, %v1834
      %1914 = vst.msk [vmem:[#allocation3 + $0x90] sm:$0xff] %vm1895, %v1836
      %1915 = vst.msk [vmem:[#allocation3 + $0x98] sm:$0xff] %vm1895, %v1838
      %1916 = vst.msk [vmem:[#allocation3 + $0xa0] sm:$0xff] %vm1895, %v1840
      %1917 = vst.msk [vmem:[#allocation3 + $0xa8] sm:$0xff] %vm1895, %v1842
      %1918 = vst.msk [vmem:[#allocation3 + $0xb0] sm:$0xff] %vm1895, %v1844
      %1919 = vst.msk [vmem:[#allocation3 + $0xb8] sm:$0xff] %vm1895, %v1846
      %1920 = vst.msk [vmem:[#allocation3 + $0xc0] sm:$0xff] %vm1895, %v1848
      %1921 = vst.msk [vmem:[#allocation3 + $0xc8] sm:$0xff] %vm1895, %v1850
      %1922 = vst.msk [vmem:[#allocation3 + $0xd0] sm:$0xff] %vm1895, %v1852
      %1923 = vst.msk [vmem:[#allocation3 + $0xd8] sm:$0xff] %vm1895, %v1854
      %1924 = vst.msk [vmem:[#allocation3 + $0xe0] sm:$0xff] %vm1895, %v1856
      %1925 = vst.msk [vmem:[#allocation3 + $0xe8] sm:$0xff] %vm1895, %v1858
      %1926 = vst.msk [vmem:[#allocation3 + $0xf0] sm:$0xff] %vm1895, %v1860
      %1927 = vst.msk [vmem:[#allocation3 + $0xf8] sm:$0xff] %vm1895, %v1862
      %v1928 = vld [vmem:[#allocation3] sm:$0xff]
      %v1929 = vld [vmem:[#allocation3 + $0x8] sm:$0xff]
      %v1930 = vld [vmem:[#allocation3 + $0x10] sm:$0xff]
      %v1931 = vld [vmem:[#allocation3 + $0x18] sm:$0xff]
      %v1932 = vld [vmem:[#allocation3 + $0x20] sm:$0xff]
      %v1933 = vld [vmem:[#allocation3 + $0x28] sm:$0xff]
      %v1934 = vld [vmem:[#allocation3 + $0x30] sm:$0xff]
      %v1935 = vld [vmem:[#allocation3 + $0x38] sm:$0xff]
      %v1936 = vld [vmem:[#allocation3 + $0x40] sm:$0xff]
      %v1937 = vld [vmem:[#allocation3 + $0x48] sm:$0xff]
      %v1938 = vld [vmem:[#allocation3 + $0x50] sm:$0xff]
      %v1939 = vld [vmem:[#allocation3 + $0x58] sm:$0xff]
      %v1940 = vld [vmem:[#allocation3 + $0x60] sm:$0xff]
      %v1941 = vld [vmem:[#allocation3 + $0x68] sm:$0xff]
      %v1942 = vld [vmem:[#allocation3 + $0x70] sm:$0xff]
      %v1943 = vld [vmem:[#allocation3 + $0x78] sm:$0xff]
      %v1944 = vld [vmem:[#allocation3 + $0x80] sm:$0xff]
      %v1945 = vld [vmem:[#allocation3 + $0x88] sm:$0xff]
      %v1946 = vld [vmem:[#allocation3 + $0x90] sm:$0xff]
      %v1947 = vld [vmem:[#allocation3 + $0x98] sm:$0xff]
      %v1948 = vld [vmem:[#allocation3 + $0xa0] sm:$0xff]
      %v1949 = vld [vmem:[#allocation3 + $0xa8] sm:$0xff]
      %v1950 = vld [vmem:[#allocation3 + $0xb0] sm:$0xff]
      %v1951 = vld [vmem:[#allocation3 + $0xb8] sm:$0xff]
      %v1952 = vld [vmem:[#allocation3 + $0xc0] sm:$0xff]
      %v1953 = vld [vmem:[#allocation3 + $0xc8] sm:$0xff]
      %v1954 = vld [vmem:[#allocation3 + $0xd0] sm:$0xff]
      %v1955 = vld [vmem:[#allocation3 + $0xd8] sm:$0xff]
      %v1956 = vld [vmem:[#allocation3 + $0xe0] sm:$0xff]
      %v1957 = vld [vmem:[#allocation3 + $0xe8] sm:$0xff]
      %v1958 = vld [vmem:[#allocation3 + $0xf0] sm:$0xff]
      %v1959 = vld [vmem:[#allocation3 + $0xf8] sm:$0xff]
      %v1960 = vld [vmem:[%s1] sm:$0xff]
      %v1961 = vld [vmem:[%s1 + $0x8] sm:$0xff]
      %v1962 = vld [vmem:[%s1 + $0x10] sm:$0xff]
      %v1963 = vld [vmem:[%s1 + $0x18] sm:$0xff]
      %v1964 = vld [vmem:[%s1 + $0x20] sm:$0xf]
      %v1965 = vld [vmem:[%s3] sm:$0x1]
      %v1966 = vperm.slane %v1965, 0
      %vm1967 = vcmask 293888
      %v1969 = vsel %vm1967, %v1928, 0
      %v1972 = vsel %vm1967, %v1929, 0
      %v1975 = vsel %vm1967, %v1930, 0
      %v1978 = vsel %vm1967, %v1931, 0
      %v1981 = vsel %vm1967, %v1932, 0
      %v1984 = vsel %vm1967, %v1933, 0
      %v1987 = vsel %vm1967, %v1934, 0
      %v1990 = vsel %vm1967, %v1935, 0
      %v1993 = vsel %vm1967, %v1936, 0
      %v1996 = vsel %vm1967, %v1937, 0
      %v1999 = vsel %vm1967, %v1938, 0
      %v2002 = vsel %vm1967, %v1939, 0
      %v2005 = vsel %vm1967, %v1940, 0
      %v2008 = vsel %vm1967, %v1941, 0
      %v2011 = vsel %vm1967, %v1942, 0
      %v2014 = vsel %vm1967, %v1943, 0
      %v2017 = vsel %vm1967, %v1944, 0
      %v2020 = vsel %vm1967, %v1945, 0
      %v2023 = vsel %vm1967, %v1946, 0
      %v2026 = vsel %vm1967, %v1947, 0
      %v2029 = vsel %vm1967, %v1948, 0
      %v2032 = vsel %vm1967, %v1949, 0
      %v2035 = vsel %vm1967, %v1950, 0
      %v2038 = vsel %vm1967, %v1951, 0
      %v2041 = vsel %vm1967, %v1952, 0
      %v2044 = vsel %vm1967, %v1953, 0
      %v2047 = vsel %vm1967, %v1954, 0
      %v2050 = vsel %vm1967, %v1955, 0
      %v2053 = vsel %vm1967, %v1956, 0
      %v2056 = vsel %vm1967, %v1957, 0
      %v2059 = vsel %vm1967, %v1958, 0
      %v2062 = vsel %vm1967, %v1959, 0
      %vm2064 = vcmask 1043456
      %v2066 = vsel %vm2064, %v1964, 0
      %2068 = vmatpush.msra.mxu0 0.0
      %2069 = vmatpush.msra.mxu0 0.0
      %2070 = vmatpush.msra.mxu0 0.0
      %2071 = vmatpush.msra.mxu0 0.0
      %2072 = vmatpush.msra.mxu0 0.0
      %2073 = vmatpush.msra.mxu0 0.0
      %2074 = vmatpush.msra.mxu0 0.0
      %2075 = vmatpush.msra.mxu0 0.0
      %2076 = vmatpush.msra.mxu0 0.0
      %2077 = vmatpush.msra.mxu0 0.0
      %2078 = vmatpush.msra.mxu0 0.0
      %2079 = vmatpush.msra.mxu0 %v2066
      %2080 = vmatpush.msra.mxu0 %v1963
      %2081 = vmatpush.msra.mxu0 %v1962
      %2082 = vmatpush.msra.mxu0 %v1961
      %2083 = vmatpush.msra.mxu0 %v1960
      %2084 = vmatmul.f32.gmra.mxu0 %v1969
      %v2085 = vpop.f32.mrf.mxu0
      %v2086 = vadd.f32 %v1966, %v2085
      %2087 = vmatmul.f32.gmra.mxu0 %v1972
      %v2088 = vpop.f32.mrf.mxu0
      %v2089 = vadd.f32 %v1966, %v2088
      %2090 = vmatmul.f32.gmra.mxu0 %v1975
      %v2091 = vpop.f32.mrf.mxu0
      %v2092 = vadd.f32 %v1966, %v2091
      %2093 = vmatmul.f32.gmra.mxu0 %v1978
      %v2094 = vpop.f32.mrf.mxu0
      %v2095 = vadd.f32 %v1966, %v2094
      %2096 = vmatmul.f32.gmra.mxu0 %v1981
      %v2097 = vpop.f32.mrf.mxu0
      %v2098 = vadd.f32 %v1966, %v2097
      %2099 = vmatmul.f32.gmra.mxu0 %v1984
      %v2100 = vpop.f32.mrf.mxu0
      %v2101 = vadd.f32 %v1966, %v2100
      %2102 = vmatmul.f32.gmra.mxu0 %v1987
      %v2103 = vpop.f32.mrf.mxu0
      %v2104 = vadd.f32 %v1966, %v2103
      %2105 = vmatmul.f32.gmra.mxu0 %v1990
      %v2106 = vpop.f32.mrf.mxu0
      %v2107 = vadd.f32 %v1966, %v2106
      %2108 = vmatmul.f32.gmra.mxu0 %v1993
      %v2109 = vpop.f32.mrf.mxu0
      %v2110 = vadd.f32 %v1966, %v2109
      %2111 = vmatmul.f32.gmra.mxu0 %v1996
      %v2112 = vpop.f32.mrf.mxu0
      %v2113 = vadd.f32 %v1966, %v2112
      %2114 = vmatmul.f32.gmra.mxu0 %v1999
      %v2115 = vpop.f32.mrf.mxu0
      %v2116 = vadd.f32 %v1966, %v2115
      %2117 = vmatmul.f32.gmra.mxu0 %v2002
      %v2118 = vpop.f32.mrf.mxu0
      %v2119 = vadd.f32 %v1966, %v2118
      %2120 = vmatmul.f32.gmra.mxu0 %v2005
      %v2121 = vpop.f32.mrf.mxu0
      %v2122 = vadd.f32 %v1966, %v2121
      %2123 = vmatmul.f32.gmra.mxu0 %v2008
      %v2124 = vpop.f32.mrf.mxu0
      %v2125 = vadd.f32 %v1966, %v2124
      %2126 = vmatmul.f32.gmra.mxu0 %v2011
      %v2127 = vpop.f32.mrf.mxu0
      %v2128 = vadd.f32 %v1966, %v2127
      %2129 = vmatmul.f32.gmra.mxu0 %v2014
      %v2130 = vpop.f32.mrf.mxu0
      %v2131 = vadd.f32 %v1966, %v2130
      %2132 = vmatmul.f32.gmra.mxu0 %v2017
      %v2133 = vpop.f32.mrf.mxu0
      %v2134 = vadd.f32 %v1966, %v2133
      %2135 = vmatmul.f32.gmra.mxu0 %v2020
      %v2136 = vpop.f32.mrf.mxu0
      %v2137 = vadd.f32 %v1966, %v2136
      %2138 = vmatmul.f32.gmra.mxu0 %v2023
      %v2139 = vpop.f32.mrf.mxu0
      %v2140 = vadd.f32 %v1966, %v2139
      %2141 = vmatmul.f32.gmra.mxu0 %v2026
      %v2142 = vpop.f32.mrf.mxu0
      %v2143 = vadd.f32 %v1966, %v2142
      %2144 = vmatmul.f32.gmra.mxu0 %v2029
      %v2145 = vpop.f32.mrf.mxu0
      %v2146 = vadd.f32 %v1966, %v2145
      %2147 = vmatmul.f32.gmra.mxu0 %v2032
      %v2148 = vpop.f32.mrf.mxu0
      %v2149 = vadd.f32 %v1966, %v2148
      %2150 = vmatmul.f32.gmra.mxu0 %v2035
      %v2151 = vpop.f32.mrf.mxu0
      %v2152 = vadd.f32 %v1966, %v2151
      %2153 = vmatmul.f32.gmra.mxu0 %v2038
      %v2154 = vpop.f32.mrf.mxu0
      %v2155 = vadd.f32 %v1966, %v2154
      %2156 = vmatmul.f32.gmra.mxu0 %v2041
      %v2157 = vpop.f32.mrf.mxu0
      %v2158 = vadd.f32 %v1966, %v2157
      %2159 = vmatmul.f32.gmra.mxu0 %v2044
      %v2160 = vpop.f32.mrf.mxu0
      %v2161 = vadd.f32 %v1966, %v2160
      %2162 = vmatmul.f32.gmra.mxu0 %v2047
      %v2163 = vpop.f32.mrf.mxu0
      %v2164 = vadd.f32 %v1966, %v2163
      %2165 = vmatmul.f32.gmra.mxu0 %v2050
      %v2166 = vpop.f32.mrf.mxu0
      %v2167 = vadd.f32 %v1966, %v2166
      %2168 = vmatmul.f32.gmra.mxu0 %v2053
      %v2169 = vpop.f32.mrf.mxu0
      %v2170 = vadd.f32 %v1966, %v2169
      %2171 = vmatmul.f32.gmra.mxu0 %v2056
      %v2172 = vpop.f32.mrf.mxu0
      %v2173 = vadd.f32 %v1966, %v2172
      %2174 = vmatmul.f32.gmra.mxu0 %v2059
      %v2175 = vpop.f32.mrf.mxu0
      %v2176 = vadd.f32 %v1966, %v2175
      %2177 = vmatmul.f32.gmra.mxu0 %v2062
      %v2178 = vpop.f32.mrf.mxu0
      %v2179 = vadd.f32 %v1966, %v2178
      %2180 = vdwg.mxu0
      %v2181 = vmax.f32 %v2086, 0.0
      %v2182 = vmax.f32 %v2089, 0.0
      %v2183 = vmax.f32 %v2092, 0.0
      %v2184 = vmax.f32 %v2095, 0.0
      %v2185 = vmax.f32 %v2098, 0.0
      %v2186 = vmax.f32 %v2101, 0.0
      %v2187 = vmax.f32 %v2104, 0.0
      %v2188 = vmax.f32 %v2107, 0.0
      %v2189 = vmax.f32 %v2110, 0.0
      %v2190 = vmax.f32 %v2113, 0.0
      %v2191 = vmax.f32 %v2116, 0.0
      %v2192 = vmax.f32 %v2119, 0.0
      %v2193 = vmax.f32 %v2122, 0.0
      %v2194 = vmax.f32 %v2125, 0.0
      %v2195 = vmax.f32 %v2128, 0.0
      %v2196 = vmax.f32 %v2131, 0.0
      %v2197 = vmax.f32 %v2134, 0.0
      %v2198 = vmax.f32 %v2137, 0.0
      %v2199 = vmax.f32 %v2140, 0.0
      %v2200 = vmax.f32 %v2143, 0.0
      %v2201 = vmax.f32 %v2146, 0.0
      %v2202 = vmax.f32 %v2149, 0.0
      %v2203 = vmax.f32 %v2152, 0.0
      %v2204 = vmax.f32 %v2155, 0.0
      %v2205 = vmax.f32 %v2158, 0.0
      %v2206 = vmax.f32 %v2161, 0.0
      %v2207 = vmax.f32 %v2164, 0.0
      %v2208 = vmax.f32 %v2167, 0.0
      %v2209 = vmax.f32 %v2170, 0.0
      %v2210 = vmax.f32 %v2173, 0.0
      %v2211 = vmax.f32 %v2176, 0.0
      %v2212 = vmax.f32 %v2179, 0.0
      %2213 = vst.msk [vmem:[%s286 + $0x1] sm:$0xff] %vm230, %v2181
      %2214 = vst.msk [vmem:[%s286 + $0x9] sm:$0xff] %vm230, %v2182
      %2215 = vst.msk [vmem:[%s286 + $0x19] sm:$0xff] %vm230, %v2183
      %2216 = vst.msk [vmem:[%s286 + $0x21] sm:$0xff] %vm230, %v2184
      %2217 = vst.msk [vmem:[%s286 + $0x31] sm:$0xff] %vm230, %v2185
      %2218 = vst.msk [vmem:[%s286 + $0x39] sm:$0xff] %vm230, %v2186
      %2219 = vst.msk [vmem:[%s286 + $0x49] sm:$0xff] %vm230, %v2187
      %2220 = vst.msk [vmem:[%s286 + $0x51] sm:$0xff] %vm230, %v2188
      %2221 = vst.msk [vmem:[%s286 + $0x61] sm:$0xff] %vm230, %v2189
      %2222 = vst.msk [vmem:[%s286 + $0x69] sm:$0xff] %vm230, %v2190
      %2223 = vst.msk [vmem:[%s286 + $0x79] sm:$0xff] %vm230, %v2191
      %2224 = vst.msk [vmem:[%s286 + $0x81] sm:$0xff] %vm230, %v2192
      %2225 = vst.msk [vmem:[%s286 + $0x91] sm:$0xff] %vm230, %v2193
      %2226 = vst.msk [vmem:[%s286 + $0x99] sm:$0xff] %vm230, %v2194
      %2227 = vst.msk [vmem:[%s286 + $0xa9] sm:$0xff] %vm230, %v2195
      %2228 = vst.msk [vmem:[%s286 + $0xb1] sm:$0xff] %vm230, %v2196
      %2229 = vst.msk [vmem:[%s286 + $0xc1] sm:$0xff] %vm230, %v2197
      %2230 = vst.msk [vmem:[%s286 + $0xc9] sm:$0xff] %vm230, %v2198
      %2231 = vst.msk [vmem:[%s286 + $0xd9] sm:$0xff] %vm230, %v2199
      %2232 = vst.msk [vmem:[%s286 + $0xe1] sm:$0xff] %vm230, %v2200
      %2233 = vst.msk [vmem:[%s286 + $0xf1] sm:$0xff] %vm230, %v2201
      %2234 = vst.msk [vmem:[%s286 + $0xf9] sm:$0xff] %vm230, %v2202
      %2235 = vst.msk [vmem:[%s286 + $0x109] sm:$0xff] %vm230, %v2203
      %2236 = vst.msk [vmem:[%s286 + $0x111] sm:$0xff] %vm230, %v2204
      %2237 = vst.msk [vmem:[%s286 + $0x121] sm:$0xff] %vm230, %v2205
      %2238 = vst.msk [vmem:[%s286 + $0x129] sm:$0xff] %vm230, %v2206
      %2239 = vst.msk [vmem:[%s286 + $0x139] sm:$0xff] %vm230, %v2207
      %2240 = vst.msk [vmem:[%s286 + $0x141] sm:$0xff] %vm230, %v2208
      %2241 = vst.msk [vmem:[%s286 + $0x151] sm:$0xff] %vm230, %v2209
      %2242 = vst.msk [vmem:[%s286 + $0x159] sm:$0xff] %vm230, %v2210
      %2243 = vst.msk [vmem:[%s286 + $0x169] sm:$0xff] %vm230, %v2211
      %2244 = vst.msk [vmem:[%s286 + $0x171] sm:$0xff] %vm230, %v2212
      %v2245 = vld [vmem:[#allocation2] sm:$0xff]
      %v2246 = vld [vmem:[#allocation2 + $0x8] sm:$0xff]
      %v2247 = vld [vmem:[#allocation2 + $0x18] sm:$0xff]
      %v2248 = vld [vmem:[#allocation2 + $0x20] sm:$0xff]
      %v2249 = vld [vmem:[#allocation2 + $0x30] sm:$0xff]
      %v2250 = vld [vmem:[#allocation2 + $0x38] sm:$0xff]
      %v2251 = vld [vmem:[#allocation2 + $0x48] sm:$0xff]
      %v2252 = vld [vmem:[#allocation2 + $0x50] sm:$0xff]
      %v2253 = vld [vmem:[#allocation2 + $0x60] sm:$0xff]
      %v2254 = vld [vmem:[#allocation2 + $0x68] sm:$0xff]
      %v2255 = vld [vmem:[#allocation2 + $0x78] sm:$0xff]
      %v2256 = vld [vmem:[#allocation2 + $0x80] sm:$0xff]
      %v2257 = vld [vmem:[#allocation2 + $0x90] sm:$0xff]
      %v2258 = vld [vmem:[#allocation2 + $0x98] sm:$0xff]
      %v2259 = vld [vmem:[#allocation2 + $0xa8] sm:$0xff]
      %v2260 = vld [vmem:[#allocation2 + $0xb0] sm:$0xff]
      %v2261 = vld [vmem:[#allocation2 + $0xc0] sm:$0xff]
      %v2262 = vld [vmem:[#allocation2 + $0xc8] sm:$0xff]
      %v2263 = vld [vmem:[#allocation2 + $0xd8] sm:$0xff]
      %v2264 = vld [vmem:[#allocation2 + $0xe0] sm:$0xff]
      %v2265 = vld [vmem:[#allocation2 + $0xf0] sm:$0xff]
      %v2266 = vld [vmem:[#allocation2 + $0xf8] sm:$0xff]
      %v2267 = vld [vmem:[#allocation2 + $0x108] sm:$0xff]
      %v2268 = vld [vmem:[#allocation2 + $0x110] sm:$0xff]
      %v2269 = vld [vmem:[#allocation2 + $0x120] sm:$0xff]
      %v2270 = vld [vmem:[#allocation2 + $0x128] sm:$0xff]
      %v2271 = vld [vmem:[#allocation2 + $0x138] sm:$0xff]
      %v2272 = vld [vmem:[#allocation2 + $0x140] sm:$0xff]
      %v2273 = vld [vmem:[#allocation2 + $0x150] sm:$0xff]
      %v2274 = vld [vmem:[#allocation2 + $0x158] sm:$0xff]
      %v2275 = vld [vmem:[#allocation2 + $0x168] sm:$0xff]
      %v2276 = vld [vmem:[#allocation2 + $0x170] sm:$0xff]
      %2277 = vst.msk [vmem:[#allocation3] sm:$0xff] %vm230, %v2245
      %2278 = vst.msk [vmem:[#allocation3 + $0x8] sm:$0xff] %vm230, %v2246
      %2279 = vst.msk [vmem:[#allocation3 + $0x10] sm:$0xff] %vm230, %v2247
      %2280 = vst.msk [vmem:[#allocation3 + $0x18] sm:$0xff] %vm230, %v2248
      %2281 = vst.msk [vmem:[#allocation3 + $0x20] sm:$0xff] %vm230, %v2249
      %2282 = vst.msk [vmem:[#allocation3 + $0x28] sm:$0xff] %vm230, %v2250
      %2283 = vst.msk [vmem:[#allocation3 + $0x30] sm:$0xff] %vm230, %v2251
      %2284 = vst.msk [vmem:[#allocation3 + $0x38] sm:$0xff] %vm230, %v2252
      %2285 = vst.msk [vmem:[#allocation3 + $0x40] sm:$0xff] %vm230, %v2253
      %2286 = vst.msk [vmem:[#allocation3 + $0x48] sm:$0xff] %vm230, %v2254
      %2287 = vst.msk [vmem:[#allocation3 + $0x50] sm:$0xff] %vm230, %v2255
      %2288 = vst.msk [vmem:[#allocation3 + $0x58] sm:$0xff] %vm230, %v2256
      %2289 = vst.msk [vmem:[#allocation3 + $0x60] sm:$0xff] %vm230, %v2257
      %2290 = vst.msk [vmem:[#allocation3 + $0x68] sm:$0xff] %vm230, %v2258
      %2291 = vst.msk [vmem:[#allocation3 + $0x70] sm:$0xff] %vm230, %v2259
      %2292 = vst.msk [vmem:[#allocation3 + $0x78] sm:$0xff] %vm230, %v2260
      %2293 = vst.msk [vmem:[#allocation3 + $0x80] sm:$0xff] %vm230, %v2261
      %2294 = vst.msk [vmem:[#allocation3 + $0x88] sm:$0xff] %vm230, %v2262
      %2295 = vst.msk [vmem:[#allocation3 + $0x90] sm:$0xff] %vm230, %v2263
      %2296 = vst.msk [vmem:[#allocation3 + $0x98] sm:$0xff] %vm230, %v2264
      %2297 = vst.msk [vmem:[#allocation3 + $0xa0] sm:$0xff] %vm230, %v2265
      %2298 = vst.msk [vmem:[#allocation3 + $0xa8] sm:$0xff] %vm230, %v2266
      %2299 = vst.msk [vmem:[#allocation3 + $0xb0] sm:$0xff] %vm230, %v2267
      %2300 = vst.msk [vmem:[#allocation3 + $0xb8] sm:$0xff] %vm230, %v2268
      %2301 = vst.msk [vmem:[#allocation3 + $0xc0] sm:$0xff] %vm230, %v2269
      %2302 = vst.msk [vmem:[#allocation3 + $0xc8] sm:$0xff] %vm230, %v2270
      %2303 = vst.msk [vmem:[#allocation3 + $0xd0] sm:$0xff] %vm230, %v2271
      %2304 = vst.msk [vmem:[#allocation3 + $0xd8] sm:$0xff] %vm230, %v2272
      %2305 = vst.msk [vmem:[#allocation3 + $0xe0] sm:$0xff] %vm230, %v2273
      %2306 = vst.msk [vmem:[#allocation3 + $0xe8] sm:$0xff] %vm230, %v2274
      %2307 = vst.msk [vmem:[#allocation3 + $0xf0] sm:$0xff] %vm230, %v2275
      %2308 = vst.msk [vmem:[#allocation3 + $0xf8] sm:$0xff] %vm230, %v2276
      %v2309 = vld [vmem:[#allocation2 + $0x1] sm:$0xff]
      %v2310 = vld [vmem:[#allocation2 + $0x9] sm:$0xff]
      %v2311 = vld [vmem:[#allocation2 + $0x19] sm:$0xff]
      %v2312 = vld [vmem:[#allocation2 + $0x21] sm:$0xff]
      %v2313 = vld [vmem:[#allocation2 + $0x31] sm:$0xff]
      %v2314 = vld [vmem:[#allocation2 + $0x39] sm:$0xff]
      %v2315 = vld [vmem:[#allocation2 + $0x49] sm:$0xff]
      %v2316 = vld [vmem:[#allocation2 + $0x51] sm:$0xff]
      %v2317 = vld [vmem:[#allocation2 + $0x61] sm:$0xff]
      %v2318 = vld [vmem:[#allocation2 + $0x69] sm:$0xff]
      %v2319 = vld [vmem:[#allocation2 + $0x79] sm:$0xff]
      %v2320 = vld [vmem:[#allocation2 + $0x81] sm:$0xff]
      %v2321 = vld [vmem:[#allocation2 + $0x91] sm:$0xff]
      %v2322 = vld [vmem:[#allocation2 + $0x99] sm:$0xff]
      %v2323 = vld [vmem:[#allocation2 + $0xa9] sm:$0xff]
      %v2324 = vld [vmem:[#allocation2 + $0xb1] sm:$0xff]
      %v2325 = vld [vmem:[#allocation2 + $0xc1] sm:$0xff]
      %v2326 = vld [vmem:[#allocation2 + $0xc9] sm:$0xff]
      %v2327 = vld [vmem:[#allocation2 + $0xd9] sm:$0xff]
      %v2328 = vld [vmem:[#allocation2 + $0xe1] sm:$0xff]
      %v2329 = vld [vmem:[#allocation2 + $0xf1] sm:$0xff]
      %v2330 = vld [vmem:[#allocation2 + $0xf9] sm:$0xff]
      %v2331 = vld [vmem:[#allocation2 + $0x109] sm:$0xff]
      %v2332 = vld [vmem:[#allocation2 + $0x111] sm:$0xff]
      %v2333 = vld [vmem:[#allocation2 + $0x121] sm:$0xff]
      %v2334 = vld [vmem:[#allocation2 + $0x129] sm:$0xff]
      %v2335 = vld [vmem:[#allocation2 + $0x139] sm:$0xff]
      %v2336 = vld [vmem:[#allocation2 + $0x141] sm:$0xff]
      %v2337 = vld [vmem:[#allocation2 + $0x151] sm:$0xff]
      %v2338 = vld [vmem:[#allocation2 + $0x159] sm:$0xff]
      %v2339 = vld [vmem:[#allocation2 + $0x169] sm:$0xff]
      %v2340 = vld [vmem:[#allocation2 + $0x171] sm:$0xff]
      %2373 = vrot.lane.b32.xlu0 %v2309, 4
      %v2374 = vpop.permute.xlu0 %2373
      %2375 = vrot.lane.b32.xlu0 %v2310, 4
      %v2376 = vpop.permute.xlu0 %2375
      %2377 = vrot.lane.b32.xlu0 %v2311, 4
      %v2378 = vpop.permute.xlu0 %2377
      %2379 = vrot.lane.b32.xlu0 %v2312, 4
      %v2380 = vpop.permute.xlu0 %2379
      %2381 = vrot.lane.b32.xlu0 %v2313, 4
      %v2382 = vpop.permute.xlu0 %2381
      %2383 = vrot.lane.b32.xlu0 %v2314, 4
      %v2384 = vpop.permute.xlu0 %2383
      %2385 = vrot.lane.b32.xlu0 %v2315, 4
      %v2386 = vpop.permute.xlu0 %2385
      %2387 = vrot.lane.b32.xlu0 %v2316, 4
      %v2388 = vpop.permute.xlu0 %2387
      %2389 = vrot.lane.b32.xlu0 %v2317, 4
      %v2390 = vpop.permute.xlu0 %2389
      %2391 = vrot.lane.b32.xlu0 %v2318, 4
      %v2392 = vpop.permute.xlu0 %2391
      %2393 = vrot.lane.b32.xlu0 %v2319, 4
      %v2394 = vpop.permute.xlu0 %2393
      %2395 = vrot.lane.b32.xlu0 %v2320, 4
      %v2396 = vpop.permute.xlu0 %2395
      %2397 = vrot.lane.b32.xlu0 %v2321, 4
      %v2398 = vpop.permute.xlu0 %2397
      %2399 = vrot.lane.b32.xlu0 %v2322, 4
      %v2400 = vpop.permute.xlu0 %2399
      %2401 = vrot.lane.b32.xlu0 %v2323, 4
      %v2402 = vpop.permute.xlu0 %2401
      %2403 = vrot.lane.b32.xlu0 %v2324, 4
      %v2404 = vpop.permute.xlu0 %2403
      %2405 = vrot.lane.b32.xlu0 %v2325, 4
      %v2406 = vpop.permute.xlu0 %2405
      %2407 = vrot.lane.b32.xlu0 %v2326, 4
      %v2408 = vpop.permute.xlu0 %2407
      %2409 = vrot.lane.b32.xlu0 %v2327, 4
      %v2410 = vpop.permute.xlu0 %2409
      %2411 = vrot.lane.b32.xlu0 %v2328, 4
      %v2412 = vpop.permute.xlu0 %2411
      %2413 = vrot.lane.b32.xlu0 %v2329, 4
      %v2414 = vpop.permute.xlu0 %2413
      %2415 = vrot.lane.b32.xlu0 %v2330, 4
      %v2416 = vpop.permute.xlu0 %2415
      %2417 = vrot.lane.b32.xlu0 %v2331, 4
      %v2418 = vpop.permute.xlu0 %2417
      %2419 = vrot.lane.b32.xlu0 %v2332, 4
      %v2420 = vpop.permute.xlu0 %2419
      %2421 = vrot.lane.b32.xlu0 %v2333, 4
      %v2422 = vpop.permute.xlu0 %2421
      %2423 = vrot.lane.b32.xlu0 %v2334, 4
      %v2424 = vpop.permute.xlu0 %2423
      %2425 = vrot.lane.b32.xlu0 %v2335, 4
      %v2426 = vpop.permute.xlu0 %2425
      %2427 = vrot.lane.b32.xlu0 %v2336, 4
      %v2428 = vpop.permute.xlu0 %2427
      %2429 = vrot.lane.b32.xlu0 %v2337, 4
      %v2430 = vpop.permute.xlu0 %2429
      %2431 = vrot.lane.b32.xlu0 %v2338, 4
      %v2432 = vpop.permute.xlu0 %2431
      %2433 = vrot.lane.b32.xlu0 %v2339, 4
      %v2434 = vpop.permute.xlu0 %2433
      %2435 = vrot.lane.b32.xlu0 %v2340, 4
      %v2436 = vpop.permute.xlu0 %2435
      %2469 = vst.msk [vmem:[#allocation3] sm:$0xff] %vm543, %v2374
      %2470 = vst.msk [vmem:[#allocation3 + $0x8] sm:$0xff] %vm543, %v2376
      %2471 = vst.msk [vmem:[#allocation3 + $0x10] sm:$0xff] %vm543, %v2378
      %2472 = vst.msk [vmem:[#allocation3 + $0x18] sm:$0xff] %vm543, %v2380
      %2473 = vst.msk [vmem:[#allocation3 + $0x20] sm:$0xff] %vm543, %v2382
      %2474 = vst.msk [vmem:[#allocation3 + $0x28] sm:$0xff] %vm543, %v2384
      %2475 = vst.msk [vmem:[#allocation3 + $0x30] sm:$0xff] %vm543, %v2386
      %2476 = vst.msk [vmem:[#allocation3 + $0x38] sm:$0xff] %vm543, %v2388
      %2477 = vst.msk [vmem:[#allocation3 + $0x40] sm:$0xff] %vm543, %v2390
      %2478 = vst.msk [vmem:[#allocation3 + $0x48] sm:$0xff] %vm543, %v2392
      %2479 = vst.msk [vmem:[#allocation3 + $0x50] sm:$0xff] %vm543, %v2394
      %2480 = vst.msk [vmem:[#allocation3 + $0x58] sm:$0xff] %vm543, %v2396
      %2481 = vst.msk [vmem:[#allocation3 + $0x60] sm:$0xff] %vm543, %v2398
      %2482 = vst.msk [vmem:[#allocation3 + $0x68] sm:$0xff] %vm543, %v2400
      %2483 = vst.msk [vmem:[#allocation3 + $0x70] sm:$0xff] %vm543, %v2402
      %2484 = vst.msk [vmem:[#allocation3 + $0x78] sm:$0xff] %vm543, %v2404
      %2485 = vst.msk [vmem:[#allocation3 + $0x80] sm:$0xff] %vm543, %v2406
      %2486 = vst.msk [vmem:[#allocation3 + $0x88] sm:$0xff] %vm543, %v2408
      %2487 = vst.msk [vmem:[#allocation3 + $0x90] sm:$0xff] %vm543, %v2410
      %2488 = vst.msk [vmem:[#allocation3 + $0x98] sm:$0xff] %vm543, %v2412
      %2489 = vst.msk [vmem:[#allocation3 + $0xa0] sm:$0xff] %vm543, %v2414
      %2490 = vst.msk [vmem:[#allocation3 + $0xa8] sm:$0xff] %vm543, %v2416
      %2491 = vst.msk [vmem:[#allocation3 + $0xb0] sm:$0xff] %vm543, %v2418
      %2492 = vst.msk [vmem:[#allocation3 + $0xb8] sm:$0xff] %vm543, %v2420
      %2493 = vst.msk [vmem:[#allocation3 + $0xc0] sm:$0xff] %vm543, %v2422
      %2494 = vst.msk [vmem:[#allocation3 + $0xc8] sm:$0xff] %vm543, %v2424
      %2495 = vst.msk [vmem:[#allocation3 + $0xd0] sm:$0xff] %vm543, %v2426
      %2496 = vst.msk [vmem:[#allocation3 + $0xd8] sm:$0xff] %vm543, %v2428
      %2497 = vst.msk [vmem:[#allocation3 + $0xe0] sm:$0xff] %vm543, %v2430
      %2498 = vst.msk [vmem:[#allocation3 + $0xe8] sm:$0xff] %vm543, %v2432
      %2499 = vst.msk [vmem:[#allocation3 + $0xf0] sm:$0xff] %vm543, %v2434
      %2500 = vst.msk [vmem:[#allocation3 + $0xf8] sm:$0xff] %vm543, %v2436
      %v2501 = vld [vmem:[#allocation2 + $0x2] sm:$0xff]
      %v2502 = vld [vmem:[#allocation2 + $0xa] sm:$0xff]
      %v2503 = vld [vmem:[#allocation2 + $0x1a] sm:$0xff]
      %v2504 = vld [vmem:[#allocation2 + $0x22] sm:$0xff]
      %v2505 = vld [vmem:[#allocation2 + $0x32] sm:$0xff]
      %v2506 = vld [vmem:[#allocation2 + $0x3a] sm:$0xff]
      %v2507 = vld [vmem:[#allocation2 + $0x4a] sm:$0xff]
      %v2508 = vld [vmem:[#allocation2 + $0x52] sm:$0xff]
      %v2509 = vld [vmem:[#allocation2 + $0x62] sm:$0xff]
      %v2510 = vld [vmem:[#allocation2 + $0x6a] sm:$0xff]
      %v2511 = vld [vmem:[#allocation2 + $0x7a] sm:$0xff]
      %v2512 = vld [vmem:[#allocation2 + $0x82] sm:$0xff]
      %v2513 = vld [vmem:[#allocation2 + $0x92] sm:$0xff]
      %v2514 = vld [vmem:[#allocation2 + $0x9a] sm:$0xff]
      %v2515 = vld [vmem:[#allocation2 + $0xaa] sm:$0xff]
      %v2516 = vld [vmem:[#allocation2 + $0xb2] sm:$0xff]
      %v2517 = vld [vmem:[#allocation2 + $0xc2] sm:$0xff]
      %v2518 = vld [vmem:[#allocation2 + $0xca] sm:$0xff]
      %v2519 = vld [vmem:[#allocation2 + $0xda] sm:$0xff]
      %v2520 = vld [vmem:[#allocation2 + $0xe2] sm:$0xff]
      %v2521 = vld [vmem:[#allocation2 + $0xf2] sm:$0xff]
      %v2522 = vld [vmem:[#allocation2 + $0xfa] sm:$0xff]
      %v2523 = vld [vmem:[#allocation2 + $0x10a] sm:$0xff]
      %v2524 = vld [vmem:[#allocation2 + $0x112] sm:$0xff]
      %v2525 = vld [vmem:[#allocation2 + $0x122] sm:$0xff]
      %v2526 = vld [vmem:[#allocation2 + $0x12a] sm:$0xff]
      %v2527 = vld [vmem:[#allocation2 + $0x13a] sm:$0xff]
      %v2528 = vld [vmem:[#allocation2 + $0x142] sm:$0xff]
      %v2529 = vld [vmem:[#allocation2 + $0x152] sm:$0xff]
      %v2530 = vld [vmem:[#allocation2 + $0x15a] sm:$0xff]
      %v2531 = vld [vmem:[#allocation2 + $0x16a] sm:$0xff]
      %v2532 = vld [vmem:[#allocation2 + $0x172] sm:$0xff]
      %2565 = vrot.lane.b32.xlu0 %v2501, 8
      %v2566 = vpop.permute.xlu0 %2565
      %2567 = vrot.lane.b32.xlu0 %v2502, 8
      %v2568 = vpop.permute.xlu0 %2567
      %2569 = vrot.lane.b32.xlu0 %v2503, 8
      %v2570 = vpop.permute.xlu0 %2569
      %2571 = vrot.lane.b32.xlu0 %v2504, 8
      %v2572 = vpop.permute.xlu0 %2571
      %2573 = vrot.lane.b32.xlu0 %v2505, 8
      %v2574 = vpop.permute.xlu0 %2573
      %2575 = vrot.lane.b32.xlu0 %v2506, 8
      %v2576 = vpop.permute.xlu0 %2575
      %2577 = vrot.lane.b32.xlu0 %v2507, 8
      %v2578 = vpop.permute.xlu0 %2577
      %2579 = vrot.lane.b32.xlu0 %v2508, 8
      %v2580 = vpop.permute.xlu0 %2579
      %2581 = vrot.lane.b32.xlu0 %v2509, 8
      %v2582 = vpop.permute.xlu0 %2581
      %2583 = vrot.lane.b32.xlu0 %v2510, 8
      %v2584 = vpop.permute.xlu0 %2583
      %2585 = vrot.lane.b32.xlu0 %v2511, 8
      %v2586 = vpop.permute.xlu0 %2585
      %2587 = vrot.lane.b32.xlu0 %v2512, 8
      %v2588 = vpop.permute.xlu0 %2587
      %2589 = vrot.lane.b32.xlu0 %v2513, 8
      %v2590 = vpop.permute.xlu0 %2589
      %2591 = vrot.lane.b32.xlu0 %v2514, 8
      %v2592 = vpop.permute.xlu0 %2591
      %2593 = vrot.lane.b32.xlu0 %v2515, 8
      %v2594 = vpop.permute.xlu0 %2593
      %2595 = vrot.lane.b32.xlu0 %v2516, 8
      %v2596 = vpop.permute.xlu0 %2595
      %2597 = vrot.lane.b32.xlu0 %v2517, 8
      %v2598 = vpop.permute.xlu0 %2597
      %2599 = vrot.lane.b32.xlu0 %v2518, 8
      %v2600 = vpop.permute.xlu0 %2599
      %2601 = vrot.lane.b32.xlu0 %v2519, 8
      %v2602 = vpop.permute.xlu0 %2601
      %2603 = vrot.lane.b32.xlu0 %v2520, 8
      %v2604 = vpop.permute.xlu0 %2603
      %2605 = vrot.lane.b32.xlu0 %v2521, 8
      %v2606 = vpop.permute.xlu0 %2605
      %2607 = vrot.lane.b32.xlu0 %v2522, 8
      %v2608 = vpop.permute.xlu0 %2607
      %2609 = vrot.lane.b32.xlu0 %v2523, 8
      %v2610 = vpop.permute.xlu0 %2609
      %2611 = vrot.lane.b32.xlu0 %v2524, 8
      %v2612 = vpop.permute.xlu0 %2611
      %2613 = vrot.lane.b32.xlu0 %v2525, 8
      %v2614 = vpop.permute.xlu0 %2613
      %2615 = vrot.lane.b32.xlu0 %v2526, 8
      %v2616 = vpop.permute.xlu0 %2615
      %2617 = vrot.lane.b32.xlu0 %v2527, 8
      %v2618 = vpop.permute.xlu0 %2617
      %2619 = vrot.lane.b32.xlu0 %v2528, 8
      %v2620 = vpop.permute.xlu0 %2619
      %2621 = vrot.lane.b32.xlu0 %v2529, 8
      %v2622 = vpop.permute.xlu0 %2621
      %2623 = vrot.lane.b32.xlu0 %v2530, 8
      %v2624 = vpop.permute.xlu0 %2623
      %2625 = vrot.lane.b32.xlu0 %v2531, 8
      %v2626 = vpop.permute.xlu0 %2625
      %2627 = vrot.lane.b32.xlu0 %v2532, 8
      %v2628 = vpop.permute.xlu0 %2627
      %2661 = vst.msk [vmem:[#allocation3] sm:$0xff] %vm736, %v2566
      %2662 = vst.msk [vmem:[#allocation3 + $0x8] sm:$0xff] %vm736, %v2568
      %2663 = vst.msk [vmem:[#allocation3 + $0x10] sm:$0xff] %vm736, %v2570
      %2664 = vst.msk [vmem:[#allocation3 + $0x18] sm:$0xff] %vm736, %v2572
      %2665 = vst.msk [vmem:[#allocation3 + $0x20] sm:$0xff] %vm736, %v2574
      %2666 = vst.msk [vmem:[#allocation3 + $0x28] sm:$0xff] %vm736, %v2576
      %2667 = vst.msk [vmem:[#allocation3 + $0x30] sm:$0xff] %vm736, %v2578
      %2668 = vst.msk [vmem:[#allocation3 + $0x38] sm:$0xff] %vm736, %v2580
      %2669 = vst.msk [vmem:[#allocation3 + $0x40] sm:$0xff] %vm736, %v2582
      %2670 = vst.msk [vmem:[#allocation3 + $0x48] sm:$0xff] %vm736, %v2584
      %2671 = vst.msk [vmem:[#allocation3 + $0x50] sm:$0xff] %vm736, %v2586
      %2672 = vst.msk [vmem:[#allocation3 + $0x58] sm:$0xff] %vm736, %v2588
      %2673 = vst.msk [vmem:[#allocation3 + $0x60] sm:$0xff] %vm736, %v2590
      %2674 = vst.msk [vmem:[#allocation3 + $0x68] sm:$0xff] %vm736, %v2592
      %2675 = vst.msk [vmem:[#allocation3 + $0x70] sm:$0xff] %vm736, %v2594
      %2676 = vst.msk [vmem:[#allocation3 + $0x78] sm:$0xff] %vm736, %v2596
      %2677 = vst.msk [vmem:[#allocation3 + $0x80] sm:$0xff] %vm736, %v2598
      %2678 = vst.msk [vmem:[#allocation3 + $0x88] sm:$0xff] %vm736, %v2600
      %2679 = vst.msk [vmem:[#allocation3 + $0x90] sm:$0xff] %vm736, %v2602
      %2680 = vst.msk [vmem:[#allocation3 + $0x98] sm:$0xff] %vm736, %v2604
      %2681 = vst.msk [vmem:[#allocation3 + $0xa0] sm:$0xff] %vm736, %v2606
      %2682 = vst.msk [vmem:[#allocation3 + $0xa8] sm:$0xff] %vm736, %v2608
      %2683 = vst.msk [vmem:[#allocation3 + $0xb0] sm:$0xff] %vm736, %v2610
      %2684 = vst.msk [vmem:[#allocation3 + $0xb8] sm:$0xff] %vm736, %v2612
      %2685 = vst.msk [vmem:[#allocation3 + $0xc0] sm:$0xff] %vm736, %v2614
      %2686 = vst.msk [vmem:[#allocation3 + $0xc8] sm:$0xff] %vm736, %v2616
      %2687 = vst.msk [vmem:[#allocation3 + $0xd0] sm:$0xff] %vm736, %v2618
      %2688 = vst.msk [vmem:[#allocation3 + $0xd8] sm:$0xff] %vm736, %v2620
      %2689 = vst.msk [vmem:[#allocation3 + $0xe0] sm:$0xff] %vm736, %v2622
      %2690 = vst.msk [vmem:[#allocation3 + $0xe8] sm:$0xff] %vm736, %v2624
      %2691 = vst.msk [vmem:[#allocation3 + $0xf0] sm:$0xff] %vm736, %v2626
      %2692 = vst.msk [vmem:[#allocation3 + $0xf8] sm:$0xff] %vm736, %v2628
      %v2693 = vld [vmem:[%s286] sm:$0xff]
      %v2694 = vld [vmem:[%s286 + $0x8] sm:$0xff]
      %v2695 = vld [vmem:[%s286 + $0x18] sm:$0xff]
      %v2696 = vld [vmem:[%s286 + $0x20] sm:$0xff]
      %v2697 = vld [vmem:[%s286 + $0x30] sm:$0xff]
      %v2698 = vld [vmem:[%s286 + $0x38] sm:$0xff]
      %v2699 = vld [vmem:[%s286 + $0x48] sm:$0xff]
      %v2700 = vld [vmem:[%s286 + $0x50] sm:$0xff]
      %v2701 = vld [vmem:[%s286 + $0x60] sm:$0xff]
      %v2702 = vld [vmem:[%s286 + $0x68] sm:$0xff]
      %v2703 = vld [vmem:[%s286 + $0x78] sm:$0xff]
      %v2704 = vld [vmem:[%s286 + $0x80] sm:$0xff]
      %v2705 = vld [vmem:[%s286 + $0x90] sm:$0xff]
      %v2706 = vld [vmem:[%s286 + $0x98] sm:$0xff]
      %v2707 = vld [vmem:[%s286 + $0xa8] sm:$0xff]
      %v2708 = vld [vmem:[%s286 + $0xb0] sm:$0xff]
      %v2709 = vld [vmem:[%s286 + $0xc0] sm:$0xff]
      %v2710 = vld [vmem:[%s286 + $0xc8] sm:$0xff]
      %v2711 = vld [vmem:[%s286 + $0xd8] sm:$0xff]
      %v2712 = vld [vmem:[%s286 + $0xe0] sm:$0xff]
      %v2713 = vld [vmem:[%s286 + $0xf0] sm:$0xff]
      %v2714 = vld [vmem:[%s286 + $0xf8] sm:$0xff]
      %v2715 = vld [vmem:[%s286 + $0x108] sm:$0xff]
      %v2716 = vld [vmem:[%s286 + $0x110] sm:$0xff]
      %v2717 = vld [vmem:[%s286 + $0x120] sm:$0xff]
      %v2718 = vld [vmem:[%s286 + $0x128] sm:$0xff]
      %v2719 = vld [vmem:[%s286 + $0x138] sm:$0xff]
      %v2720 = vld [vmem:[%s286 + $0x140] sm:$0xff]
      %v2721 = vld [vmem:[%s286 + $0x150] sm:$0xff]
      %v2722 = vld [vmem:[%s286 + $0x158] sm:$0xff]
      %v2723 = vld [vmem:[%s286 + $0x168] sm:$0xff]
      %v2724 = vld [vmem:[%s286 + $0x170] sm:$0xff]
      %2757 = vrot.lane.b32.xlu0 %v2693, 12
      %v2758 = vpop.permute.xlu0 %2757
      %2759 = vrot.lane.b32.xlu0 %v2694, 12
      %v2760 = vpop.permute.xlu0 %2759
      %2761 = vrot.lane.b32.xlu0 %v2695, 12
      %v2762 = vpop.permute.xlu0 %2761
      %2763 = vrot.lane.b32.xlu0 %v2696, 12
      %v2764 = vpop.permute.xlu0 %2763
      %2765 = vrot.lane.b32.xlu0 %v2697, 12
      %v2766 = vpop.permute.xlu0 %2765
      %2767 = vrot.lane.b32.xlu0 %v2698, 12
      %v2768 = vpop.permute.xlu0 %2767
      %2769 = vrot.lane.b32.xlu0 %v2699, 12
      %v2770 = vpop.permute.xlu0 %2769
      %2771 = vrot.lane.b32.xlu0 %v2700, 12
      %v2772 = vpop.permute.xlu0 %2771
      %2773 = vrot.lane.b32.xlu0 %v2701, 12
      %v2774 = vpop.permute.xlu0 %2773
      %2775 = vrot.lane.b32.xlu0 %v2702, 12
      %v2776 = vpop.permute.xlu0 %2775
      %2777 = vrot.lane.b32.xlu0 %v2703, 12
      %v2778 = vpop.permute.xlu0 %2777
      %2779 = vrot.lane.b32.xlu0 %v2704, 12
      %v2780 = vpop.permute.xlu0 %2779
      %2781 = vrot.lane.b32.xlu0 %v2705, 12
      %v2782 = vpop.permute.xlu0 %2781
      %2783 = vrot.lane.b32.xlu0 %v2706, 12
      %v2784 = vpop.permute.xlu0 %2783
      %2785 = vrot.lane.b32.xlu0 %v2707, 12
      %v2786 = vpop.permute.xlu0 %2785
      %2787 = vrot.lane.b32.xlu0 %v2708, 12
      %v2788 = vpop.permute.xlu0 %2787
      %2789 = vrot.lane.b32.xlu0 %v2709, 12
      %v2790 = vpop.permute.xlu0 %2789
      %2791 = vrot.lane.b32.xlu0 %v2710, 12
      %v2792 = vpop.permute.xlu0 %2791
      %2793 = vrot.lane.b32.xlu0 %v2711, 12
      %v2794 = vpop.permute.xlu0 %2793
      %2795 = vrot.lane.b32.xlu0 %v2712, 12
      %v2796 = vpop.permute.xlu0 %2795
      %2797 = vrot.lane.b32.xlu0 %v2713, 12
      %v2798 = vpop.permute.xlu0 %2797
      %2799 = vrot.lane.b32.xlu0 %v2714, 12
      %v2800 = vpop.permute.xlu0 %2799
      %2801 = vrot.lane.b32.xlu0 %v2715, 12
      %v2802 = vpop.permute.xlu0 %2801
      %2803 = vrot.lane.b32.xlu0 %v2716, 12
      %v2804 = vpop.permute.xlu0 %2803
      %2805 = vrot.lane.b32.xlu0 %v2717, 12
      %v2806 = vpop.permute.xlu0 %2805
      %2807 = vrot.lane.b32.xlu0 %v2718, 12
      %v2808 = vpop.permute.xlu0 %2807
      %2809 = vrot.lane.b32.xlu0 %v2719, 12
      %v2810 = vpop.permute.xlu0 %2809
      %2811 = vrot.lane.b32.xlu0 %v2720, 12
      %v2812 = vpop.permute.xlu0 %2811
      %2813 = vrot.lane.b32.xlu0 %v2721, 12
      %v2814 = vpop.permute.xlu0 %2813
      %2815 = vrot.lane.b32.xlu0 %v2722, 12
      %v2816 = vpop.permute.xlu0 %2815
      %2817 = vrot.lane.b32.xlu0 %v2723, 12
      %v2818 = vpop.permute.xlu0 %2817
      %2819 = vrot.lane.b32.xlu0 %v2724, 12
      %v2820 = vpop.permute.xlu0 %2819
      %2853 = vst.msk [vmem:[#allocation3] sm:$0xff] %vm929, %v2758
      %2854 = vst.msk [vmem:[#allocation3 + $0x8] sm:$0xff] %vm929, %v2760
      %2855 = vst.msk [vmem:[#allocation3 + $0x10] sm:$0xff] %vm929, %v2762
      %2856 = vst.msk [vmem:[#allocation3 + $0x18] sm:$0xff] %vm929, %v2764
      %2857 = vst.msk [vmem:[#allocation3 + $0x20] sm:$0xff] %vm929, %v2766
      %2858 = vst.msk [vmem:[#allocation3 + $0x28] sm:$0xff] %vm929, %v2768
      %2859 = vst.msk [vmem:[#allocation3 + $0x30] sm:$0xff] %vm929, %v2770
      %2860 = vst.msk [vmem:[#allocation3 + $0x38] sm:$0xff] %vm929, %v2772
      %2861 = vst.msk [vmem:[#allocation3 + $0x40] sm:$0xff] %vm929, %v2774
      %2862 = vst.msk [vmem:[#allocation3 + $0x48] sm:$0xff] %vm929, %v2776
      %2863 = vst.msk [vmem:[#allocation3 + $0x50] sm:$0xff] %vm929, %v2778
      %2864 = vst.msk [vmem:[#allocation3 + $0x58] sm:$0xff] %vm929, %v2780
      %2865 = vst.msk [vmem:[#allocation3 + $0x60] sm:$0xff] %vm929, %v2782
      %2866 = vst.msk [vmem:[#allocation3 + $0x68] sm:$0xff] %vm929, %v2784
      %2867 = vst.msk [vmem:[#allocation3 + $0x70] sm:$0xff] %vm929, %v2786
      %2868 = vst.msk [vmem:[#allocation3 + $0x78] sm:$0xff] %vm929, %v2788
      %2869 = vst.msk [vmem:[#allocation3 + $0x80] sm:$0xff] %vm929, %v2790
      %2870 = vst.msk [vmem:[#allocation3 + $0x88] sm:$0xff] %vm929, %v2792
      %2871 = vst.msk [vmem:[#allocation3 + $0x90] sm:$0xff] %vm929, %v2794
      %2872 = vst.msk [vmem:[#allocation3 + $0x98] sm:$0xff] %vm929, %v2796
      %2873 = vst.msk [vmem:[#allocation3 + $0xa0] sm:$0xff] %vm929, %v2798
      %2874 = vst.msk [vmem:[#allocation3 + $0xa8] sm:$0xff] %vm929, %v2800
      %2875 = vst.msk [vmem:[#allocation3 + $0xb0] sm:$0xff] %vm929, %v2802
      %2876 = vst.msk [vmem:[#allocation3 + $0xb8] sm:$0xff] %vm929, %v2804
      %2877 = vst.msk [vmem:[#allocation3 + $0xc0] sm:$0xff] %vm929, %v2806
      %2878 = vst.msk [vmem:[#allocation3 + $0xc8] sm:$0xff] %vm929, %v2808
      %2879 = vst.msk [vmem:[#allocation3 + $0xd0] sm:$0xff] %vm929, %v2810
      %2880 = vst.msk [vmem:[#allocation3 + $0xd8] sm:$0xff] %vm929, %v2812
      %2881 = vst.msk [vmem:[#allocation3 + $0xe0] sm:$0xff] %vm929, %v2814
      %2882 = vst.msk [vmem:[#allocation3 + $0xe8] sm:$0xff] %vm929, %v2816
      %2883 = vst.msk [vmem:[#allocation3 + $0xf0] sm:$0xff] %vm929, %v2818
      %2884 = vst.msk [vmem:[#allocation3 + $0xf8] sm:$0xff] %vm929, %v2820
      %v2885 = vld [vmem:[%s286 + $0x1] sm:$0xff]
      %v2886 = vld [vmem:[%s286 + $0x9] sm:$0xff]
      %v2887 = vld [vmem:[%s286 + $0x19] sm:$0xff]
      %v2888 = vld [vmem:[%s286 + $0x21] sm:$0xff]
      %v2889 = vld [vmem:[%s286 + $0x31] sm:$0xff]
      %v2890 = vld [vmem:[%s286 + $0x39] sm:$0xff]
      %v2891 = vld [vmem:[%s286 + $0x49] sm:$0xff]
      %v2892 = vld [vmem:[%s286 + $0x51] sm:$0xff]
      %v2893 = vld [vmem:[%s286 + $0x61] sm:$0xff]
      %v2894 = vld [vmem:[%s286 + $0x69] sm:$0xff]
      %v2895 = vld [vmem:[%s286 + $0x79] sm:$0xff]
      %v2896 = vld [vmem:[%s286 + $0x81] sm:$0xff]
      %v2897 = vld [vmem:[%s286 + $0x91] sm:$0xff]
      %v2898 = vld [vmem:[%s286 + $0x99] sm:$0xff]
      %v2899 = vld [vmem:[%s286 + $0xa9] sm:$0xff]
      %v2900 = vld [vmem:[%s286 + $0xb1] sm:$0xff]
      %v2901 = vld [vmem:[%s286 + $0xc1] sm:$0xff]
      %v2902 = vld [vmem:[%s286 + $0xc9] sm:$0xff]
      %v2903 = vld [vmem:[%s286 + $0xd9] sm:$0xff]
      %v2904 = vld [vmem:[%s286 + $0xe1] sm:$0xff]
      %v2905 = vld [vmem:[%s286 + $0xf1] sm:$0xff]
      %v2906 = vld [vmem:[%s286 + $0xf9] sm:$0xff]
      %v2907 = vld [vmem:[%s286 + $0x109] sm:$0xff]
      %v2908 = vld [vmem:[%s286 + $0x111] sm:$0xff]
      %v2909 = vld [vmem:[%s286 + $0x121] sm:$0xff]
      %v2910 = vld [vmem:[%s286 + $0x129] sm:$0xff]
      %v2911 = vld [vmem:[%s286 + $0x139] sm:$0xff]
      %v2912 = vld [vmem:[%s286 + $0x141] sm:$0xff]
      %v2913 = vld [vmem:[%s286 + $0x151] sm:$0xff]
      %v2914 = vld [vmem:[%s286 + $0x159] sm:$0xff]
      %v2915 = vld [vmem:[%s286 + $0x169] sm:$0xff]
      %v2916 = vld [vmem:[%s286 + $0x171] sm:$0xff]
      %2949 = vrot.lane.b32.xlu0 %v2885, 16
      %v2950 = vpop.permute.xlu0 %2949
      %2951 = vrot.lane.b32.xlu0 %v2886, 16
      %v2952 = vpop.permute.xlu0 %2951
      %2953 = vrot.lane.b32.xlu0 %v2887, 16
      %v2954 = vpop.permute.xlu0 %2953
      %2955 = vrot.lane.b32.xlu0 %v2888, 16
      %v2956 = vpop.permute.xlu0 %2955
      %2957 = vrot.lane.b32.xlu0 %v2889, 16
      %v2958 = vpop.permute.xlu0 %2957
      %2959 = vrot.lane.b32.xlu0 %v2890, 16
      %v2960 = vpop.permute.xlu0 %2959
      %2961 = vrot.lane.b32.xlu0 %v2891, 16
      %v2962 = vpop.permute.xlu0 %2961
      %2963 = vrot.lane.b32.xlu0 %v2892, 16
      %v2964 = vpop.permute.xlu0 %2963
      %2965 = vrot.lane.b32.xlu0 %v2893, 16
      %v2966 = vpop.permute.xlu0 %2965
      %2967 = vrot.lane.b32.xlu0 %v2894, 16
      %v2968 = vpop.permute.xlu0 %2967
      %2969 = vrot.lane.b32.xlu0 %v2895, 16
      %v2970 = vpop.permute.xlu0 %2969
      %2971 = vrot.lane.b32.xlu0 %v2896, 16
      %v2972 = vpop.permute.xlu0 %2971
      %2973 = vrot.lane.b32.xlu0 %v2897, 16
      %v2974 = vpop.permute.xlu0 %2973
      %2975 = vrot.lane.b32.xlu0 %v2898, 16
      %v2976 = vpop.permute.xlu0 %2975
      %2977 = vrot.lane.b32.xlu0 %v2899, 16
      %v2978 = vpop.permute.xlu0 %2977
      %2979 = vrot.lane.b32.xlu0 %v2900, 16
      %v2980 = vpop.permute.xlu0 %2979
      %2981 = vrot.lane.b32.xlu0 %v2901, 16
      %v2982 = vpop.permute.xlu0 %2981
      %2983 = vrot.lane.b32.xlu0 %v2902, 16
      %v2984 = vpop.permute.xlu0 %2983
      %2985 = vrot.lane.b32.xlu0 %v2903, 16
      %v2986 = vpop.permute.xlu0 %2985
      %2987 = vrot.lane.b32.xlu0 %v2904, 16
      %v2988 = vpop.permute.xlu0 %2987
      %2989 = vrot.lane.b32.xlu0 %v2905, 16
      %v2990 = vpop.permute.xlu0 %2989
      %2991 = vrot.lane.b32.xlu0 %v2906, 16
      %v2992 = vpop.permute.xlu0 %2991
      %2993 = vrot.lane.b32.xlu0 %v2907, 16
      %v2994 = vpop.permute.xlu0 %2993
      %2995 = vrot.lane.b32.xlu0 %v2908, 16
      %v2996 = vpop.permute.xlu0 %2995
      %2997 = vrot.lane.b32.xlu0 %v2909, 16
      %v2998 = vpop.permute.xlu0 %2997
      %2999 = vrot.lane.b32.xlu0 %v2910, 16
      %v3000 = vpop.permute.xlu0 %2999
      %3001 = vrot.lane.b32.xlu0 %v2911, 16
      %v3002 = vpop.permute.xlu0 %3001
      %3003 = vrot.lane.b32.xlu0 %v2912, 16
      %v3004 = vpop.permute.xlu0 %3003
      %3005 = vrot.lane.b32.xlu0 %v2913, 16
      %v3006 = vpop.permute.xlu0 %3005
      %3007 = vrot.lane.b32.xlu0 %v2914, 16
      %v3008 = vpop.permute.xlu0 %3007
      %3009 = vrot.lane.b32.xlu0 %v2915, 16
      %v3010 = vpop.permute.xlu0 %3009
      %3011 = vrot.lane.b32.xlu0 %v2916, 16
      %v3012 = vpop.permute.xlu0 %3011
      %3045 = vst.msk [vmem:[#allocation3] sm:$0xff] %vm1122, %v2950
      %3046 = vst.msk [vmem:[#allocation3 + $0x8] sm:$0xff] %vm1122, %v2952
      %3047 = vst.msk [vmem:[#allocation3 + $0x10] sm:$0xff] %vm1122, %v2954
      %3048 = vst.msk [vmem:[#allocation3 + $0x18] sm:$0xff] %vm1122, %v2956
      %3049 = vst.msk [vmem:[#allocation3 + $0x20] sm:$0xff] %vm1122, %v2958
      %3050 = vst.msk [vmem:[#allocation3 + $0x28] sm:$0xff] %vm1122, %v2960
      %3051 = vst.msk [vmem:[#allocation3 + $0x30] sm:$0xff] %vm1122, %v2962
      %3052 = vst.msk [vmem:[#allocation3 + $0x38] sm:$0xff] %vm1122, %v2964
      %3053 = vst.msk [vmem:[#allocation3 + $0x40] sm:$0xff] %vm1122, %v2966
      %3054 = vst.msk [vmem:[#allocation3 + $0x48] sm:$0xff] %vm1122, %v2968
      %3055 = vst.msk [vmem:[#allocation3 + $0x50] sm:$0xff] %vm1122, %v2970
      %3056 = vst.msk [vmem:[#allocation3 + $0x58] sm:$0xff] %vm1122, %v2972
      %3057 = vst.msk [vmem:[#allocation3 + $0x60] sm:$0xff] %vm1122, %v2974
      %3058 = vst.msk [vmem:[#allocation3 + $0x68] sm:$0xff] %vm1122, %v2976
      %3059 = vst.msk [vmem:[#allocation3 + $0x70] sm:$0xff] %vm1122, %v2978
      %3060 = vst.msk [vmem:[#allocation3 + $0x78] sm:$0xff] %vm1122, %v2980
      %3061 = vst.msk [vmem:[#allocation3 + $0x80] sm:$0xff] %vm1122, %v2982
      %3062 = vst.msk [vmem:[#allocation3 + $0x88] sm:$0xff] %vm1122, %v2984
      %3063 = vst.msk [vmem:[#allocation3 + $0x90] sm:$0xff] %vm1122, %v2986
      %3064 = vst.msk [vmem:[#allocation3 + $0x98] sm:$0xff] %vm1122, %v2988
      %3065 = vst.msk [vmem:[#allocation3 + $0xa0] sm:$0xff] %vm1122, %v2990
      %3066 = vst.msk [vmem:[#allocation3 + $0xa8] sm:$0xff] %vm1122, %v2992
      %3067 = vst.msk [vmem:[#allocation3 + $0xb0] sm:$0xff] %vm1122, %v2994
      %3068 = vst.msk [vmem:[#allocation3 + $0xb8] sm:$0xff] %vm1122, %v2996
      %3069 = vst.msk [vmem:[#allocation3 + $0xc0] sm:$0xff] %vm1122, %v2998
      %3070 = vst.msk [vmem:[#allocation3 + $0xc8] sm:$0xff] %vm1122, %v3000
      %3071 = vst.msk [vmem:[#allocation3 + $0xd0] sm:$0xff] %vm1122, %v3002
      %3072 = vst.msk [vmem:[#allocation3 + $0xd8] sm:$0xff] %vm1122, %v3004
      %3073 = vst.msk [vmem:[#allocation3 + $0xe0] sm:$0xff] %vm1122, %v3006
      %3074 = vst.msk [vmem:[#allocation3 + $0xe8] sm:$0xff] %vm1122, %v3008
      %3075 = vst.msk [vmem:[#allocation3 + $0xf0] sm:$0xff] %vm1122, %v3010
      %3076 = vst.msk [vmem:[#allocation3 + $0xf8] sm:$0xff] %vm1122, %v3012
      %v3077 = vld [vmem:[%s286 + $0x2] sm:$0xff]
      %v3078 = vld [vmem:[%s286 + $0xa] sm:$0xff]
      %v3079 = vld [vmem:[%s286 + $0x1a] sm:$0xff]
      %v3080 = vld [vmem:[%s286 + $0x22] sm:$0xff]
      %v3081 = vld [vmem:[%s286 + $0x32] sm:$0xff]
      %v3082 = vld [vmem:[%s286 + $0x3a] sm:$0xff]
      %v3083 = vld [vmem:[%s286 + $0x4a] sm:$0xff]
      %v3084 = vld [vmem:[%s286 + $0x52] sm:$0xff]
      %v3085 = vld [vmem:[%s286 + $0x62] sm:$0xff]
      %v3086 = vld [vmem:[%s286 + $0x6a] sm:$0xff]
      %v3087 = vld [vmem:[%s286 + $0x7a] sm:$0xff]
      %v3088 = vld [vmem:[%s286 + $0x82] sm:$0xff]
      %v3089 = vld [vmem:[%s286 + $0x92] sm:$0xff]
      %v3090 = vld [vmem:[%s286 + $0x9a] sm:$0xff]
      %v3091 = vld [vmem:[%s286 + $0xaa] sm:$0xff]
      %v3092 = vld [vmem:[%s286 + $0xb2] sm:$0xff]
      %v3093 = vld [vmem:[%s286 + $0xc2] sm:$0xff]
      %v3094 = vld [vmem:[%s286 + $0xca] sm:$0xff]
      %v3095 = vld [vmem:[%s286 + $0xda] sm:$0xff]
      %v3096 = vld [vmem:[%s286 + $0xe2] sm:$0xff]
      %v3097 = vld [vmem:[%s286 + $0xf2] sm:$0xff]
      %v3098 = vld [vmem:[%s286 + $0xfa] sm:$0xff]
      %v3099 = vld [vmem:[%s286 + $0x10a] sm:$0xff]
      %v3100 = vld [vmem:[%s286 + $0x112] sm:$0xff]
      %v3101 = vld [vmem:[%s286 + $0x122] sm:$0xff]
      %v3102 = vld [vmem:[%s286 + $0x12a] sm:$0xff]
      %v3103 = vld [vmem:[%s286 + $0x13a] sm:$0xff]
      %v3104 = vld [vmem:[%s286 + $0x142] sm:$0xff]
      %v3105 = vld [vmem:[%s286 + $0x152] sm:$0xff]
      %v3106 = vld [vmem:[%s286 + $0x15a] sm:$0xff]
      %v3107 = vld [vmem:[%s286 + $0x16a] sm:$0xff]
      %v3108 = vld [vmem:[%s286 + $0x172] sm:$0xff]
      %3141 = vrot.lane.b32.xlu0 %v3077, 20
      %v3142 = vpop.permute.xlu0 %3141
      %3143 = vrot.lane.b32.xlu0 %v3078, 20
      %v3144 = vpop.permute.xlu0 %3143
      %3145 = vrot.lane.b32.xlu0 %v3079, 20
      %v3146 = vpop.permute.xlu0 %3145
      %3147 = vrot.lane.b32.xlu0 %v3080, 20
      %v3148 = vpop.permute.xlu0 %3147
      %3149 = vrot.lane.b32.xlu0 %v3081, 20
      %v3150 = vpop.permute.xlu0 %3149
      %3151 = vrot.lane.b32.xlu0 %v3082, 20
      %v3152 = vpop.permute.xlu0 %3151
      %3153 = vrot.lane.b32.xlu0 %v3083, 20
      %v3154 = vpop.permute.xlu0 %3153
      %3155 = vrot.lane.b32.xlu0 %v3084, 20
      %v3156 = vpop.permute.xlu0 %3155
      %3157 = vrot.lane.b32.xlu0 %v3085, 20
      %v3158 = vpop.permute.xlu0 %3157
      %3159 = vrot.lane.b32.xlu0 %v3086, 20
      %v3160 = vpop.permute.xlu0 %3159
      %3161 = vrot.lane.b32.xlu0 %v3087, 20
      %v3162 = vpop.permute.xlu0 %3161
      %3163 = vrot.lane.b32.xlu0 %v3088, 20
      %v3164 = vpop.permute.xlu0 %3163
      %3165 = vrot.lane.b32.xlu0 %v3089, 20
      %v3166 = vpop.permute.xlu0 %3165
      %3167 = vrot.lane.b32.xlu0 %v3090, 20
      %v3168 = vpop.permute.xlu0 %3167
      %3169 = vrot.lane.b32.xlu0 %v3091, 20
      %v3170 = vpop.permute.xlu0 %3169
      %3171 = vrot.lane.b32.xlu0 %v3092, 20
      %v3172 = vpop.permute.xlu0 %3171
      %3173 = vrot.lane.b32.xlu0 %v3093, 20
      %v3174 = vpop.permute.xlu0 %3173
      %3175 = vrot.lane.b32.xlu0 %v3094, 20
      %v3176 = vpop.permute.xlu0 %3175
      %3177 = vrot.lane.b32.xlu0 %v3095, 20
      %v3178 = vpop.permute.xlu0 %3177
      %3179 = vrot.lane.b32.xlu0 %v3096, 20
      %v3180 = vpop.permute.xlu0 %3179
      %3181 = vrot.lane.b32.xlu0 %v3097, 20
      %v3182 = vpop.permute.xlu0 %3181
      %3183 = vrot.lane.b32.xlu0 %v3098, 20
      %v3184 = vpop.permute.xlu0 %3183
      %3185 = vrot.lane.b32.xlu0 %v3099, 20
      %v3186 = vpop.permute.xlu0 %3185
      %3187 = vrot.lane.b32.xlu0 %v3100, 20
      %v3188 = vpop.permute.xlu0 %3187
      %3189 = vrot.lane.b32.xlu0 %v3101, 20
      %v3190 = vpop.permute.xlu0 %3189
      %3191 = vrot.lane.b32.xlu0 %v3102, 20
      %v3192 = vpop.permute.xlu0 %3191
      %3193 = vrot.lane.b32.xlu0 %v3103, 20
      %v3194 = vpop.permute.xlu0 %3193
      %3195 = vrot.lane.b32.xlu0 %v3104, 20
      %v3196 = vpop.permute.xlu0 %3195
      %3197 = vrot.lane.b32.xlu0 %v3105, 20
      %v3198 = vpop.permute.xlu0 %3197
      %3199 = vrot.lane.b32.xlu0 %v3106, 20
      %v3200 = vpop.permute.xlu0 %3199
      %3201 = vrot.lane.b32.xlu0 %v3107, 20
      %v3202 = vpop.permute.xlu0 %3201
      %3203 = vrot.lane.b32.xlu0 %v3108, 20
      %v3204 = vpop.permute.xlu0 %3203
      %3237 = vst.msk [vmem:[#allocation3] sm:$0xff] %vm1315, %v3142
      %3238 = vst.msk [vmem:[#allocation3 + $0x8] sm:$0xff] %vm1315, %v3144
      %3239 = vst.msk [vmem:[#allocation3 + $0x10] sm:$0xff] %vm1315, %v3146
      %3240 = vst.msk [vmem:[#allocation3 + $0x18] sm:$0xff] %vm1315, %v3148
      %3241 = vst.msk [vmem:[#allocation3 + $0x20] sm:$0xff] %vm1315, %v3150
      %3242 = vst.msk [vmem:[#allocation3 + $0x28] sm:$0xff] %vm1315, %v3152
      %3243 = vst.msk [vmem:[#allocation3 + $0x30] sm:$0xff] %vm1315, %v3154
      %3244 = vst.msk [vmem:[#allocation3 + $0x38] sm:$0xff] %vm1315, %v3156
      %3245 = vst.msk [vmem:[#allocation3 + $0x40] sm:$0xff] %vm1315, %v3158
      %3246 = vst.msk [vmem:[#allocation3 + $0x48] sm:$0xff] %vm1315, %v3160
      %3247 = vst.msk [vmem:[#allocation3 + $0x50] sm:$0xff] %vm1315, %v3162
      %3248 = vst.msk [vmem:[#allocation3 + $0x58] sm:$0xff] %vm1315, %v3164
      %3249 = vst.msk [vmem:[#allocation3 + $0x60] sm:$0xff] %vm1315, %v3166
      %3250 = vst.msk [vmem:[#allocation3 + $0x68] sm:$0xff] %vm1315, %v3168
      %3251 = vst.msk [vmem:[#allocation3 + $0x70] sm:$0xff] %vm1315, %v3170
      %3252 = vst.msk [vmem:[#allocation3 + $0x78] sm:$0xff] %vm1315, %v3172
      %3253 = vst.msk [vmem:[#allocation3 + $0x80] sm:$0xff] %vm1315, %v3174
      %3254 = vst.msk [vmem:[#allocation3 + $0x88] sm:$0xff] %vm1315, %v3176
      %3255 = vst.msk [vmem:[#allocation3 + $0x90] sm:$0xff] %vm1315, %v3178
      %3256 = vst.msk [vmem:[#allocation3 + $0x98] sm:$0xff] %vm1315, %v3180
      %3257 = vst.msk [vmem:[#allocation3 + $0xa0] sm:$0xff] %vm1315, %v3182
      %3258 = vst.msk [vmem:[#allocation3 + $0xa8] sm:$0xff] %vm1315, %v3184
      %3259 = vst.msk [vmem:[#allocation3 + $0xb0] sm:$0xff] %vm1315, %v3186
      %3260 = vst.msk [vmem:[#allocation3 + $0xb8] sm:$0xff] %vm1315, %v3188
      %3261 = vst.msk [vmem:[#allocation3 + $0xc0] sm:$0xff] %vm1315, %v3190
      %3262 = vst.msk [vmem:[#allocation3 + $0xc8] sm:$0xff] %vm1315, %v3192
      %3263 = vst.msk [vmem:[#allocation3 + $0xd0] sm:$0xff] %vm1315, %v3194
      %3264 = vst.msk [vmem:[#allocation3 + $0xd8] sm:$0xff] %vm1315, %v3196
      %3265 = vst.msk [vmem:[#allocation3 + $0xe0] sm:$0xff] %vm1315, %v3198
      %3266 = vst.msk [vmem:[#allocation3 + $0xe8] sm:$0xff] %vm1315, %v3200
      %3267 = vst.msk [vmem:[#allocation3 + $0xf0] sm:$0xff] %vm1315, %v3202
      %3268 = vst.msk [vmem:[#allocation3 + $0xf8] sm:$0xff] %vm1315, %v3204
      %v3269 = vld [vmem:[%s1348] sm:$0xff]
      %v3270 = vld [vmem:[%s1348 + $0x8] sm:$0xff]
      %v3271 = vld [vmem:[%s1348 + $0x18] sm:$0xff]
      %v3272 = vld [vmem:[%s1348 + $0x20] sm:$0xff]
      %v3273 = vld [vmem:[%s1348 + $0x30] sm:$0xff]
      %v3274 = vld [vmem:[%s1348 + $0x38] sm:$0xff]
      %v3275 = vld [vmem:[%s1348 + $0x48] sm:$0xff]
      %v3276 = vld [vmem:[%s1348 + $0x50] sm:$0xff]
      %v3277 = vld [vmem:[%s1348 + $0x60] sm:$0xff]
      %v3278 = vld [vmem:[%s1348 + $0x68] sm:$0xff]
      %v3279 = vld [vmem:[%s1348 + $0x78] sm:$0xff]
      %v3280 = vld [vmem:[%s1348 + $0x80] sm:$0xff]
      %v3281 = vld [vmem:[%s1348 + $0x90] sm:$0xff]
      %v3282 = vld [vmem:[%s1348 + $0x98] sm:$0xff]
      %v3283 = vld [vmem:[%s1348 + $0xa8] sm:$0xff]
      %v3284 = vld [vmem:[%s1348 + $0xb0] sm:$0xff]
      %v3285 = vld [vmem:[%s1348 + $0xc0] sm:$0xff]
      %v3286 = vld [vmem:[%s1348 + $0xc8] sm:$0xff]
      %v3287 = vld [vmem:[%s1348 + $0xd8] sm:$0xff]
      %v3288 = vld [vmem:[%s1348 + $0xe0] sm:$0xff]
      %v3289 = vld [vmem:[%s1348 + $0xf0] sm:$0xff]
      %v3290 = vld [vmem:[%s1348 + $0xf8] sm:$0xff]
      %v3291 = vld [vmem:[%s1348 + $0x108] sm:$0xff]
      %v3292 = vld [vmem:[%s1348 + $0x110] sm:$0xff]
      %v3293 = vld [vmem:[%s1348 + $0x120] sm:$0xff]
      %v3294 = vld [vmem:[%s1348 + $0x128] sm:$0xff]
      %v3295 = vld [vmem:[%s1348 + $0x138] sm:$0xff]
      %v3296 = vld [vmem:[%s1348 + $0x140] sm:$0xff]
      %v3297 = vld [vmem:[%s1348 + $0x150] sm:$0xff]
      %v3298 = vld [vmem:[%s1348 + $0x158] sm:$0xff]
      %v3299 = vld [vmem:[%s1348 + $0x168] sm:$0xff]
      %v3300 = vld [vmem:[%s1348 + $0x170] sm:$0xff]
      %3333 = vrot.lane.b32.xlu0 %v3269, 24
      %v3334 = vpop.permute.xlu0 %3333
      %3335 = vrot.lane.b32.xlu0 %v3270, 24
      %v3336 = vpop.permute.xlu0 %3335
      %3337 = vrot.lane.b32.xlu0 %v3271, 24
      %v3338 = vpop.permute.xlu0 %3337
      %3339 = vrot.lane.b32.xlu0 %v3272, 24
      %v3340 = vpop.permute.xlu0 %3339
      %3341 = vrot.lane.b32.xlu0 %v3273, 24
      %v3342 = vpop.permute.xlu0 %3341
      %3343 = vrot.lane.b32.xlu0 %v3274, 24
      %v3344 = vpop.permute.xlu0 %3343
      %3345 = vrot.lane.b32.xlu0 %v3275, 24
      %v3346 = vpop.permute.xlu0 %3345
      %3347 = vrot.lane.b32.xlu0 %v3276, 24
      %v3348 = vpop.permute.xlu0 %3347
      %3349 = vrot.lane.b32.xlu0 %v3277, 24
      %v3350 = vpop.permute.xlu0 %3349
      %3351 = vrot.lane.b32.xlu0 %v3278, 24
      %v3352 = vpop.permute.xlu0 %3351
      %3353 = vrot.lane.b32.xlu0 %v3279, 24
      %v3354 = vpop.permute.xlu0 %3353
      %3355 = vrot.lane.b32.xlu0 %v3280, 24
      %v3356 = vpop.permute.xlu0 %3355
      %3357 = vrot.lane.b32.xlu0 %v3281, 24
      %v3358 = vpop.permute.xlu0 %3357
      %3359 = vrot.lane.b32.xlu0 %v3282, 24
      %v3360 = vpop.permute.xlu0 %3359
      %3361 = vrot.lane.b32.xlu0 %v3283, 24
      %v3362 = vpop.permute.xlu0 %3361
      %3363 = vrot.lane.b32.xlu0 %v3284, 24
      %v3364 = vpop.permute.xlu0 %3363
      %3365 = vrot.lane.b32.xlu0 %v3285, 24
      %v3366 = vpop.permute.xlu0 %3365
      %3367 = vrot.lane.b32.xlu0 %v3286, 24
      %v3368 = vpop.permute.xlu0 %3367
      %3369 = vrot.lane.b32.xlu0 %v3287, 24
      %v3370 = vpop.permute.xlu0 %3369
      %3371 = vrot.lane.b32.xlu0 %v3288, 24
      %v3372 = vpop.permute.xlu0 %3371
      %3373 = vrot.lane.b32.xlu0 %v3289, 24
      %v3374 = vpop.permute.xlu0 %3373
      %3375 = vrot.lane.b32.xlu0 %v3290, 24
      %v3376 = vpop.permute.xlu0 %3375
      %3377 = vrot.lane.b32.xlu0 %v3291, 24
      %v3378 = vpop.permute.xlu0 %3377
      %3379 = vrot.lane.b32.xlu0 %v3292, 24
      %v3380 = vpop.permute.xlu0 %3379
      %3381 = vrot.lane.b32.xlu0 %v3293, 24
      %v3382 = vpop.permute.xlu0 %3381
      %3383 = vrot.lane.b32.xlu0 %v3294, 24
      %v3384 = vpop.permute.xlu0 %3383
      %3385 = vrot.lane.b32.xlu0 %v3295, 24
      %v3386 = vpop.permute.xlu0 %3385
      %3387 = vrot.lane.b32.xlu0 %v3296, 24
      %v3388 = vpop.permute.xlu0 %3387
      %3389 = vrot.lane.b32.xlu0 %v3297, 24
      %v3390 = vpop.permute.xlu0 %3389
      %3391 = vrot.lane.b32.xlu0 %v3298, 24
      %v3392 = vpop.permute.xlu0 %3391
      %3393 = vrot.lane.b32.xlu0 %v3299, 24
      %v3394 = vpop.permute.xlu0 %3393
      %3395 = vrot.lane.b32.xlu0 %v3300, 24
      %v3396 = vpop.permute.xlu0 %3395
      %3429 = vst.msk [vmem:[#allocation3] sm:$0xff] %vm1509, %v3334
      %3430 = vst.msk [vmem:[#allocation3 + $0x8] sm:$0xff] %vm1509, %v3336
      %3431 = vst.msk [vmem:[#allocation3 + $0x10] sm:$0xff] %vm1509, %v3338
      %3432 = vst.msk [vmem:[#allocation3 + $0x18] sm:$0xff] %vm1509, %v3340
      %3433 = vst.msk [vmem:[#allocation3 + $0x20] sm:$0xff] %vm1509, %v3342
      %3434 = vst.msk [vmem:[#allocation3 + $0x28] sm:$0xff] %vm1509, %v3344
      %3435 = vst.msk [vmem:[#allocation3 + $0x30] sm:$0xff] %vm1509, %v3346
      %3436 = vst.msk [vmem:[#allocation3 + $0x38] sm:$0xff] %vm1509, %v3348
      %3437 = vst.msk [vmem:[#allocation3 + $0x40] sm:$0xff] %vm1509, %v3350
      %3438 = vst.msk [vmem:[#allocation3 + $0x48] sm:$0xff] %vm1509, %v3352
      %3439 = vst.msk [vmem:[#allocation3 + $0x50] sm:$0xff] %vm1509, %v3354
      %3440 = vst.msk [vmem:[#allocation3 + $0x58] sm:$0xff] %vm1509, %v3356
      %3441 = vst.msk [vmem:[#allocation3 + $0x60] sm:$0xff] %vm1509, %v3358
      %3442 = vst.msk [vmem:[#allocation3 + $0x68] sm:$0xff] %vm1509, %v3360
      %3443 = vst.msk [vmem:[#allocation3 + $0x70] sm:$0xff] %vm1509, %v3362
      %3444 = vst.msk [vmem:[#allocation3 + $0x78] sm:$0xff] %vm1509, %v3364
      %3445 = vst.msk [vmem:[#allocation3 + $0x80] sm:$0xff] %vm1509, %v3366
      %3446 = vst.msk [vmem:[#allocation3 + $0x88] sm:$0xff] %vm1509, %v3368
      %3447 = vst.msk [vmem:[#allocation3 + $0x90] sm:$0xff] %vm1509, %v3370
      %3448 = vst.msk [vmem:[#allocation3 + $0x98] sm:$0xff] %vm1509, %v3372
      %3449 = vst.msk [vmem:[#allocation3 + $0xa0] sm:$0xff] %vm1509, %v3374
      %3450 = vst.msk [vmem:[#allocation3 + $0xa8] sm:$0xff] %vm1509, %v3376
      %3451 = vst.msk [vmem:[#allocation3 + $0xb0] sm:$0xff] %vm1509, %v3378
      %3452 = vst.msk [vmem:[#allocation3 + $0xb8] sm:$0xff] %vm1509, %v3380
      %3453 = vst.msk [vmem:[#allocation3 + $0xc0] sm:$0xff] %vm1509, %v3382
      %3454 = vst.msk [vmem:[#allocation3 + $0xc8] sm:$0xff] %vm1509, %v3384
      %3455 = vst.msk [vmem:[#allocation3 + $0xd0] sm:$0xff] %vm1509, %v3386
      %3456 = vst.msk [vmem:[#allocation3 + $0xd8] sm:$0xff] %vm1509, %v3388
      %3457 = vst.msk [vmem:[#allocation3 + $0xe0] sm:$0xff] %vm1509, %v3390
      %3458 = vst.msk [vmem:[#allocation3 + $0xe8] sm:$0xff] %vm1509, %v3392
      %3459 = vst.msk [vmem:[#allocation3 + $0xf0] sm:$0xff] %vm1509, %v3394
      %3460 = vst.msk [vmem:[#allocation3 + $0xf8] sm:$0xff] %vm1509, %v3396
      %v3461 = vld [vmem:[%s1348 + $0x1] sm:$0xff]
      %v3462 = vld [vmem:[%s1348 + $0x9] sm:$0xff]
      %v3463 = vld [vmem:[%s1348 + $0x19] sm:$0xff]
      %v3464 = vld [vmem:[%s1348 + $0x21] sm:$0xff]
      %v3465 = vld [vmem:[%s1348 + $0x31] sm:$0xff]
      %v3466 = vld [vmem:[%s1348 + $0x39] sm:$0xff]
      %v3467 = vld [vmem:[%s1348 + $0x49] sm:$0xff]
      %v3468 = vld [vmem:[%s1348 + $0x51] sm:$0xff]
      %v3469 = vld [vmem:[%s1348 + $0x61] sm:$0xff]
      %v3470 = vld [vmem:[%s1348 + $0x69] sm:$0xff]
      %v3471 = vld [vmem:[%s1348 + $0x79] sm:$0xff]
      %v3472 = vld [vmem:[%s1348 + $0x81] sm:$0xff]
      %v3473 = vld [vmem:[%s1348 + $0x91] sm:$0xff]
      %v3474 = vld [vmem:[%s1348 + $0x99] sm:$0xff]
      %v3475 = vld [vmem:[%s1348 + $0xa9] sm:$0xff]
      %v3476 = vld [vmem:[%s1348 + $0xb1] sm:$0xff]
      %v3477 = vld [vmem:[%s1348 + $0xc1] sm:$0xff]
      %v3478 = vld [vmem:[%s1348 + $0xc9] sm:$0xff]
      %v3479 = vld [vmem:[%s1348 + $0xd9] sm:$0xff]
      %v3480 = vld [vmem:[%s1348 + $0xe1] sm:$0xff]
      %v3481 = vld [vmem:[%s1348 + $0xf1] sm:$0xff]
      %v3482 = vld [vmem:[%s1348 + $0xf9] sm:$0xff]
      %v3483 = vld [vmem:[%s1348 + $0x109] sm:$0xff]
      %v3484 = vld [vmem:[%s1348 + $0x111] sm:$0xff]
      %v3485 = vld [vmem:[%s1348 + $0x121] sm:$0xff]
      %v3486 = vld [vmem:[%s1348 + $0x129] sm:$0xff]
      %v3487 = vld [vmem:[%s1348 + $0x139] sm:$0xff]
      %v3488 = vld [vmem:[%s1348 + $0x141] sm:$0xff]
      %v3489 = vld [vmem:[%s1348 + $0x151] sm:$0xff]
      %v3490 = vld [vmem:[%s1348 + $0x159] sm:$0xff]
      %v3491 = vld [vmem:[%s1348 + $0x169] sm:$0xff]
      %v3492 = vld [vmem:[%s1348 + $0x171] sm:$0xff]
      %3525 = vrot.lane.b32.xlu0 %v3461, 28
      %v3526 = vpop.permute.xlu0 %3525
      %3527 = vrot.lane.b32.xlu0 %v3462, 28
      %v3528 = vpop.permute.xlu0 %3527
      %3529 = vrot.lane.b32.xlu0 %v3463, 28
      %v3530 = vpop.permute.xlu0 %3529
      %3531 = vrot.lane.b32.xlu0 %v3464, 28
      %v3532 = vpop.permute.xlu0 %3531
      %3533 = vrot.lane.b32.xlu0 %v3465, 28
      %v3534 = vpop.permute.xlu0 %3533
      %3535 = vrot.lane.b32.xlu0 %v3466, 28
      %v3536 = vpop.permute.xlu0 %3535
      %3537 = vrot.lane.b32.xlu0 %v3467, 28
      %v3538 = vpop.permute.xlu0 %3537
      %3539 = vrot.lane.b32.xlu0 %v3468, 28
      %v3540 = vpop.permute.xlu0 %3539
      %3541 = vrot.lane.b32.xlu0 %v3469, 28
      %v3542 = vpop.permute.xlu0 %3541
      %3543 = vrot.lane.b32.xlu0 %v3470, 28
      %v3544 = vpop.permute.xlu0 %3543
      %3545 = vrot.lane.b32.xlu0 %v3471, 28
      %v3546 = vpop.permute.xlu0 %3545
      %3547 = vrot.lane.b32.xlu0 %v3472, 28
      %v3548 = vpop.permute.xlu0 %3547
      %3549 = vrot.lane.b32.xlu0 %v3473, 28
      %v3550 = vpop.permute.xlu0 %3549
      %3551 = vrot.lane.b32.xlu0 %v3474, 28
      %v3552 = vpop.permute.xlu0 %3551
      %3553 = vrot.lane.b32.xlu0 %v3475, 28
      %v3554 = vpop.permute.xlu0 %3553
      %3555 = vrot.lane.b32.xlu0 %v3476, 28
      %v3556 = vpop.permute.xlu0 %3555
      %3557 = vrot.lane.b32.xlu0 %v3477, 28
      %v3558 = vpop.permute.xlu0 %3557
      %3559 = vrot.lane.b32.xlu0 %v3478, 28
      %v3560 = vpop.permute.xlu0 %3559
      %3561 = vrot.lane.b32.xlu0 %v3479, 28
      %v3562 = vpop.permute.xlu0 %3561
      %3563 = vrot.lane.b32.xlu0 %v3480, 28
      %v3564 = vpop.permute.xlu0 %3563
      %3565 = vrot.lane.b32.xlu0 %v3481, 28
      %v3566 = vpop.permute.xlu0 %3565
      %3567 = vrot.lane.b32.xlu0 %v3482, 28
      %v3568 = vpop.permute.xlu0 %3567
      %3569 = vrot.lane.b32.xlu0 %v3483, 28
      %v3570 = vpop.permute.xlu0 %3569
      %3571 = vrot.lane.b32.xlu0 %v3484, 28
      %v3572 = vpop.permute.xlu0 %3571
      %3573 = vrot.lane.b32.xlu0 %v3485, 28
      %v3574 = vpop.permute.xlu0 %3573
      %3575 = vrot.lane.b32.xlu0 %v3486, 28
      %v3576 = vpop.permute.xlu0 %3575
      %3577 = vrot.lane.b32.xlu0 %v3487, 28
      %v3578 = vpop.permute.xlu0 %3577
      %3579 = vrot.lane.b32.xlu0 %v3488, 28
      %v3580 = vpop.permute.xlu0 %3579
      %3581 = vrot.lane.b32.xlu0 %v3489, 28
      %v3582 = vpop.permute.xlu0 %3581
      %3583 = vrot.lane.b32.xlu0 %v3490, 28
      %v3584 = vpop.permute.xlu0 %3583
      %3585 = vrot.lane.b32.xlu0 %v3491, 28
      %v3586 = vpop.permute.xlu0 %3585
      %3587 = vrot.lane.b32.xlu0 %v3492, 28
      %v3588 = vpop.permute.xlu0 %3587
      %3621 = vst.msk [vmem:[#allocation3] sm:$0xff] %vm1702, %v3526
      %3622 = vst.msk [vmem:[#allocation3 + $0x8] sm:$0xff] %vm1702, %v3528
      %3623 = vst.msk [vmem:[#allocation3 + $0x10] sm:$0xff] %vm1702, %v3530
      %3624 = vst.msk [vmem:[#allocation3 + $0x18] sm:$0xff] %vm1702, %v3532
      %3625 = vst.msk [vmem:[#allocation3 + $0x20] sm:$0xff] %vm1702, %v3534
      %3626 = vst.msk [vmem:[#allocation3 + $0x28] sm:$0xff] %vm1702, %v3536
      %3627 = vst.msk [vmem:[#allocation3 + $0x30] sm:$0xff] %vm1702, %v3538
      %3628 = vst.msk [vmem:[#allocation3 + $0x38] sm:$0xff] %vm1702, %v3540
      %3629 = vst.msk [vmem:[#allocation3 + $0x40] sm:$0xff] %vm1702, %v3542
      %3630 = vst.msk [vmem:[#allocation3 + $0x48] sm:$0xff] %vm1702, %v3544
      %3631 = vst.msk [vmem:[#allocation3 + $0x50] sm:$0xff] %vm1702, %v3546
      %3632 = vst.msk [vmem:[#allocation3 + $0x58] sm:$0xff] %vm1702, %v3548
      %3633 = vst.msk [vmem:[#allocation3 + $0x60] sm:$0xff] %vm1702, %v3550
      %3634 = vst.msk [vmem:[#allocation3 + $0x68] sm:$0xff] %vm1702, %v3552
      %3635 = vst.msk [vmem:[#allocation3 + $0x70] sm:$0xff] %vm1702, %v3554
      %3636 = vst.msk [vmem:[#allocation3 + $0x78] sm:$0xff] %vm1702, %v3556
      %3637 = vst.msk [vmem:[#allocation3 + $0x80] sm:$0xff] %vm1702, %v3558
      %3638 = vst.msk [vmem:[#allocation3 + $0x88] sm:$0xff] %vm1702, %v3560
      %3639 = vst.msk [vmem:[#allocation3 + $0x90] sm:$0xff] %vm1702, %v3562
      %3640 = vst.msk [vmem:[#allocation3 + $0x98] sm:$0xff] %vm1702, %v3564
      %3641 = vst.msk [vmem:[#allocation3 + $0xa0] sm:$0xff] %vm1702, %v3566
      %3642 = vst.msk [vmem:[#allocation3 + $0xa8] sm:$0xff] %vm1702, %v3568
      %3643 = vst.msk [vmem:[#allocation3 + $0xb0] sm:$0xff] %vm1702, %v3570
      %3644 = vst.msk [vmem:[#allocation3 + $0xb8] sm:$0xff] %vm1702, %v3572
      %3645 = vst.msk [vmem:[#allocation3 + $0xc0] sm:$0xff] %vm1702, %v3574
      %3646 = vst.msk [vmem:[#allocation3 + $0xc8] sm:$0xff] %vm1702, %v3576
      %3647 = vst.msk [vmem:[#allocation3 + $0xd0] sm:$0xff] %vm1702, %v3578
      %3648 = vst.msk [vmem:[#allocation3 + $0xd8] sm:$0xff] %vm1702, %v3580
      %3649 = vst.msk [vmem:[#allocation3 + $0xe0] sm:$0xff] %vm1702, %v3582
      %3650 = vst.msk [vmem:[#allocation3 + $0xe8] sm:$0xff] %vm1702, %v3584
      %3651 = vst.msk [vmem:[#allocation3 + $0xf0] sm:$0xff] %vm1702, %v3586
      %3652 = vst.msk [vmem:[#allocation3 + $0xf8] sm:$0xff] %vm1702, %v3588
      %v3653 = vld [vmem:[%s1348 + $0x2] sm:$0xff]
      %v3654 = vld [vmem:[%s1348 + $0xa] sm:$0xff]
      %v3655 = vld [vmem:[%s1348 + $0x1a] sm:$0xff]
      %v3656 = vld [vmem:[%s1348 + $0x22] sm:$0xff]
      %v3657 = vld [vmem:[%s1348 + $0x32] sm:$0xff]
      %v3658 = vld [vmem:[%s1348 + $0x3a] sm:$0xff]
      %v3659 = vld [vmem:[%s1348 + $0x4a] sm:$0xff]
      %v3660 = vld [vmem:[%s1348 + $0x52] sm:$0xff]
      %v3661 = vld [vmem:[%s1348 + $0x62] sm:$0xff]
      %v3662 = vld [vmem:[%s1348 + $0x6a] sm:$0xff]
      %v3663 = vld [vmem:[%s1348 + $0x7a] sm:$0xff]
      %v3664 = vld [vmem:[%s1348 + $0x82] sm:$0xff]
      %v3665 = vld [vmem:[%s1348 + $0x92] sm:$0xff]
      %v3666 = vld [vmem:[%s1348 + $0x9a] sm:$0xff]
      %v3667 = vld [vmem:[%s1348 + $0xaa] sm:$0xff]
      %v3668 = vld [vmem:[%s1348 + $0xb2] sm:$0xff]
      %v3669 = vld [vmem:[%s1348 + $0xc2] sm:$0xff]
      %v3670 = vld [vmem:[%s1348 + $0xca] sm:$0xff]
      %v3671 = vld [vmem:[%s1348 + $0xda] sm:$0xff]
      %v3672 = vld [vmem:[%s1348 + $0xe2] sm:$0xff]
      %v3673 = vld [vmem:[%s1348 + $0xf2] sm:$0xff]
      %v3674 = vld [vmem:[%s1348 + $0xfa] sm:$0xff]
      %v3675 = vld [vmem:[%s1348 + $0x10a] sm:$0xff]
      %v3676 = vld [vmem:[%s1348 + $0x112] sm:$0xff]
      %v3677 = vld [vmem:[%s1348 + $0x122] sm:$0xff]
      %v3678 = vld [vmem:[%s1348 + $0x12a] sm:$0xff]
      %v3679 = vld [vmem:[%s1348 + $0x13a] sm:$0xff]
      %v3680 = vld [vmem:[%s1348 + $0x142] sm:$0xff]
      %v3681 = vld [vmem:[%s1348 + $0x152] sm:$0xff]
      %v3682 = vld [vmem:[%s1348 + $0x15a] sm:$0xff]
      %v3683 = vld [vmem:[%s1348 + $0x16a] sm:$0xff]
      %v3684 = vld [vmem:[%s1348 + $0x172] sm:$0xff]
      %3717 = vrot.lane.b32.xlu0 %v3653, 32
      %v3718 = vpop.permute.xlu0 %3717
      %3719 = vrot.lane.b32.xlu0 %v3654, 32
      %v3720 = vpop.permute.xlu0 %3719
      %3721 = vrot.lane.b32.xlu0 %v3655, 32
      %v3722 = vpop.permute.xlu0 %3721
      %3723 = vrot.lane.b32.xlu0 %v3656, 32
      %v3724 = vpop.permute.xlu0 %3723
      %3725 = vrot.lane.b32.xlu0 %v3657, 32
      %v3726 = vpop.permute.xlu0 %3725
      %3727 = vrot.lane.b32.xlu0 %v3658, 32
      %v3728 = vpop.permute.xlu0 %3727
      %3729 = vrot.lane.b32.xlu0 %v3659, 32
      %v3730 = vpop.permute.xlu0 %3729
      %3731 = vrot.lane.b32.xlu0 %v3660, 32
      %v3732 = vpop.permute.xlu0 %3731
      %3733 = vrot.lane.b32.xlu0 %v3661, 32
      %v3734 = vpop.permute.xlu0 %3733
      %3735 = vrot.lane.b32.xlu0 %v3662, 32
      %v3736 = vpop.permute.xlu0 %3735
      %3737 = vrot.lane.b32.xlu0 %v3663, 32
      %v3738 = vpop.permute.xlu0 %3737
      %3739 = vrot.lane.b32.xlu0 %v3664, 32
      %v3740 = vpop.permute.xlu0 %3739
      %3741 = vrot.lane.b32.xlu0 %v3665, 32
      %v3742 = vpop.permute.xlu0 %3741
      %3743 = vrot.lane.b32.xlu0 %v3666, 32
      %v3744 = vpop.permute.xlu0 %3743
      %3745 = vrot.lane.b32.xlu0 %v3667, 32
      %v3746 = vpop.permute.xlu0 %3745
      %3747 = vrot.lane.b32.xlu0 %v3668, 32
      %v3748 = vpop.permute.xlu0 %3747
      %3749 = vrot.lane.b32.xlu0 %v3669, 32
      %v3750 = vpop.permute.xlu0 %3749
      %3751 = vrot.lane.b32.xlu0 %v3670, 32
      %v3752 = vpop.permute.xlu0 %3751
      %3753 = vrot.lane.b32.xlu0 %v3671, 32
      %v3754 = vpop.permute.xlu0 %3753
      %3755 = vrot.lane.b32.xlu0 %v3672, 32
      %v3756 = vpop.permute.xlu0 %3755
      %3757 = vrot.lane.b32.xlu0 %v3673, 32
      %v3758 = vpop.permute.xlu0 %3757
      %3759 = vrot.lane.b32.xlu0 %v3674, 32
      %v3760 = vpop.permute.xlu0 %3759
      %3761 = vrot.lane.b32.xlu0 %v3675, 32
      %v3762 = vpop.permute.xlu0 %3761
      %3763 = vrot.lane.b32.xlu0 %v3676, 32
      %v3764 = vpop.permute.xlu0 %3763
      %3765 = vrot.lane.b32.xlu0 %v3677, 32
      %v3766 = vpop.permute.xlu0 %3765
      %3767 = vrot.lane.b32.xlu0 %v3678, 32
      %v3768 = vpop.permute.xlu0 %3767
      %3769 = vrot.lane.b32.xlu0 %v3679, 32
      %v3770 = vpop.permute.xlu0 %3769
      %3771 = vrot.lane.b32.xlu0 %v3680, 32
      %v3772 = vpop.permute.xlu0 %3771
      %3773 = vrot.lane.b32.xlu0 %v3681, 32
      %v3774 = vpop.permute.xlu0 %3773
      %3775 = vrot.lane.b32.xlu0 %v3682, 32
      %v3776 = vpop.permute.xlu0 %3775
      %3777 = vrot.lane.b32.xlu0 %v3683, 32
      %v3778 = vpop.permute.xlu0 %3777
      %3779 = vrot.lane.b32.xlu0 %v3684, 32
      %v3780 = vpop.permute.xlu0 %3779
      %3813 = vst.msk [vmem:[#allocation3] sm:$0xff] %vm1895, %v3718
      %3814 = vst.msk [vmem:[#allocation3 + $0x8] sm:$0xff] %vm1895, %v3720
      %3815 = vst.msk [vmem:[#allocation3 + $0x10] sm:$0xff] %vm1895, %v3722
      %3816 = vst.msk [vmem:[#allocation3 + $0x18] sm:$0xff] %vm1895, %v3724
      %3817 = vst.msk [vmem:[#allocation3 + $0x20] sm:$0xff] %vm1895, %v3726
      %3818 = vst.msk [vmem:[#allocation3 + $0x28] sm:$0xff] %vm1895, %v3728
      %3819 = vst.msk [vmem:[#allocation3 + $0x30] sm:$0xff] %vm1895, %v3730
      %3820 = vst.msk [vmem:[#allocation3 + $0x38] sm:$0xff] %vm1895, %v3732
      %3821 = vst.msk [vmem:[#allocation3 + $0x40] sm:$0xff] %vm1895, %v3734
      %3822 = vst.msk [vmem:[#allocation3 + $0x48] sm:$0xff] %vm1895, %v3736
      %3823 = vst.msk [vmem:[#allocation3 + $0x50] sm:$0xff] %vm1895, %v3738
      %3824 = vst.msk [vmem:[#allocation3 + $0x58] sm:$0xff] %vm1895, %v3740
      %3825 = vst.msk [vmem:[#allocation3 + $0x60] sm:$0xff] %vm1895, %v3742
      %3826 = vst.msk [vmem:[#allocation3 + $0x68] sm:$0xff] %vm1895, %v3744
      %3827 = vst.msk [vmem:[#allocation3 + $0x70] sm:$0xff] %vm1895, %v3746
      %3828 = vst.msk [vmem:[#allocation3 + $0x78] sm:$0xff] %vm1895, %v3748
      %3829 = vst.msk [vmem:[#allocation3 + $0x80] sm:$0xff] %vm1895, %v3750
      %3830 = vst.msk [vmem:[#allocation3 + $0x88] sm:$0xff] %vm1895, %v3752
      %3831 = vst.msk [vmem:[#allocation3 + $0x90] sm:$0xff] %vm1895, %v3754
      %3832 = vst.msk [vmem:[#allocation3 + $0x98] sm:$0xff] %vm1895, %v3756
      %3833 = vst.msk [vmem:[#allocation3 + $0xa0] sm:$0xff] %vm1895, %v3758
      %3834 = vst.msk [vmem:[#allocation3 + $0xa8] sm:$0xff] %vm1895, %v3760
      %3835 = vst.msk [vmem:[#allocation3 + $0xb0] sm:$0xff] %vm1895, %v3762
      %3836 = vst.msk [vmem:[#allocation3 + $0xb8] sm:$0xff] %vm1895, %v3764
      %3837 = vst.msk [vmem:[#allocation3 + $0xc0] sm:$0xff] %vm1895, %v3766
      %3838 = vst.msk [vmem:[#allocation3 + $0xc8] sm:$0xff] %vm1895, %v3768
      %3839 = vst.msk [vmem:[#allocation3 + $0xd0] sm:$0xff] %vm1895, %v3770
      %3840 = vst.msk [vmem:[#allocation3 + $0xd8] sm:$0xff] %vm1895, %v3772
      %3841 = vst.msk [vmem:[#allocation3 + $0xe0] sm:$0xff] %vm1895, %v3774
      %3842 = vst.msk [vmem:[#allocation3 + $0xe8] sm:$0xff] %vm1895, %v3776
      %3843 = vst.msk [vmem:[#allocation3 + $0xf0] sm:$0xff] %vm1895, %v3778
      %3844 = vst.msk [vmem:[#allocation3 + $0xf8] sm:$0xff] %vm1895, %v3780
      %v3845 = vld [vmem:[#allocation3] sm:$0xff]
      %v3846 = vld [vmem:[#allocation3 + $0x8] sm:$0xff]
      %v3847 = vld [vmem:[#allocation3 + $0x10] sm:$0xff]
      %v3848 = vld [vmem:[#allocation3 + $0x18] sm:$0xff]
      %v3849 = vld [vmem:[#allocation3 + $0x20] sm:$0xff]
      %v3850 = vld [vmem:[#allocation3 + $0x28] sm:$0xff]
      %v3851 = vld [vmem:[#allocation3 + $0x30] sm:$0xff]
      %v3852 = vld [vmem:[#allocation3 + $0x38] sm:$0xff]
      %v3853 = vld [vmem:[#allocation3 + $0x40] sm:$0xff]
      %v3854 = vld [vmem:[#allocation3 + $0x48] sm:$0xff]
      %v3855 = vld [vmem:[#allocation3 + $0x50] sm:$0xff]
      %v3856 = vld [vmem:[#allocation3 + $0x58] sm:$0xff]
      %v3857 = vld [vmem:[#allocation3 + $0x60] sm:$0xff]
      %v3858 = vld [vmem:[#allocation3 + $0x68] sm:$0xff]
      %v3859 = vld [vmem:[#allocation3 + $0x70] sm:$0xff]
      %v3860 = vld [vmem:[#allocation3 + $0x78] sm:$0xff]
      %v3861 = vld [vmem:[#allocation3 + $0x80] sm:$0xff]
      %v3862 = vld [vmem:[#allocation3 + $0x88] sm:$0xff]
      %v3863 = vld [vmem:[#allocation3 + $0x90] sm:$0xff]
      %v3864 = vld [vmem:[#allocation3 + $0x98] sm:$0xff]
      %v3865 = vld [vmem:[#allocation3 + $0xa0] sm:$0xff]
      %v3866 = vld [vmem:[#allocation3 + $0xa8] sm:$0xff]
      %v3867 = vld [vmem:[#allocation3 + $0xb0] sm:$0xff]
      %v3868 = vld [vmem:[#allocation3 + $0xb8] sm:$0xff]
      %v3869 = vld [vmem:[#allocation3 + $0xc0] sm:$0xff]
      %v3870 = vld [vmem:[#allocation3 + $0xc8] sm:$0xff]
      %v3871 = vld [vmem:[#allocation3 + $0xd0] sm:$0xff]
      %v3872 = vld [vmem:[#allocation3 + $0xd8] sm:$0xff]
      %v3873 = vld [vmem:[#allocation3 + $0xe0] sm:$0xff]
      %v3874 = vld [vmem:[#allocation3 + $0xe8] sm:$0xff]
      %v3875 = vld [vmem:[#allocation3 + $0xf0] sm:$0xff]
      %v3876 = vld [vmem:[#allocation3 + $0xf8] sm:$0xff]
      %v3877 = vld [vmem:[%s2] sm:$0xff]
      %v3878 = vld [vmem:[%s2 + $0x8] sm:$0xff]
      %v3879 = vld [vmem:[%s2 + $0x10] sm:$0xff]
      %v3880 = vld [vmem:[%s2 + $0x18] sm:$0xff]
      %v3881 = vld [vmem:[%s2 + $0x20] sm:$0xf]
      %v3882 = vld [vmem:[%s3 + $0x1] sm:$0x1]
      %v3883 = vperm.slane %v3882, 0
      %v3885 = vsel %vm1967, %v3845, 0
      %v3888 = vsel %vm1967, %v3846, 0
      %v3891 = vsel %vm1967, %v3847, 0
      %v3894 = vsel %vm1967, %v3848, 0
      %v3897 = vsel %vm1967, %v3849, 0
      %v3900 = vsel %vm1967, %v3850, 0
      %v3903 = vsel %vm1967, %v3851, 0
      %v3906 = vsel %vm1967, %v3852, 0
      %v3909 = vsel %vm1967, %v3853, 0
      %v3912 = vsel %vm1967, %v3854, 0
      %v3915 = vsel %vm1967, %v3855, 0
      %v3918 = vsel %vm1967, %v3856, 0
      %v3921 = vsel %vm1967, %v3857, 0
      %v3924 = vsel %vm1967, %v3858, 0
      %v3927 = vsel %vm1967, %v3859, 0
      %v3930 = vsel %vm1967, %v3860, 0
      %v3933 = vsel %vm1967, %v3861, 0
      %v3936 = vsel %vm1967, %v3862, 0
      %v3939 = vsel %vm1967, %v3863, 0
      %v3942 = vsel %vm1967, %v3864, 0
      %v3945 = vsel %vm1967, %v3865, 0
      %v3948 = vsel %vm1967, %v3866, 0
      %v3951 = vsel %vm1967, %v3867, 0
      %v3954 = vsel %vm1967, %v3868, 0
      %v3957 = vsel %vm1967, %v3869, 0
      %v3960 = vsel %vm1967, %v3870, 0
      %v3963 = vsel %vm1967, %v3871, 0
      %v3966 = vsel %vm1967, %v3872, 0
      %v3969 = vsel %vm1967, %v3873, 0
      %v3972 = vsel %vm1967, %v3874, 0
      %v3975 = vsel %vm1967, %v3875, 0
      %v3978 = vsel %vm1967, %v3876, 0
      %v3981 = vsel %vm2064, %v3881, 0
      %3983 = vmatpush.msra.mxu0 0.0
      %3984 = vmatpush.msra.mxu0 0.0
      %3985 = vmatpush.msra.mxu0 0.0
      %3986 = vmatpush.msra.mxu0 0.0
      %3987 = vmatpush.msra.mxu0 0.0
      %3988 = vmatpush.msra.mxu0 0.0
      %3989 = vmatpush.msra.mxu0 0.0
      %3990 = vmatpush.msra.mxu0 0.0
      %3991 = vmatpush.msra.mxu0 0.0
      %3992 = vmatpush.msra.mxu0 0.0
      %3993 = vmatpush.msra.mxu0 0.0
      %3994 = vmatpush.msra.mxu0 %v3981
      %3995 = vmatpush.msra.mxu0 %v3880
      %3996 = vmatpush.msra.mxu0 %v3879
      %3997 = vmatpush.msra.mxu0 %v3878
      %3998 = vmatpush.msra.mxu0 %v3877
      %3999 = vmatmul.f32.gmra.mxu0 %v3885
      %v4000 = vpop.f32.mrf.mxu0
      %v4001 = vadd.f32 %v3883, %v4000
      %4002 = vmatmul.f32.gmra.mxu0 %v3888
      %v4003 = vpop.f32.mrf.mxu0
      %v4004 = vadd.f32 %v3883, %v4003
      %4005 = vmatmul.f32.gmra.mxu0 %v3891
      %v4006 = vpop.f32.mrf.mxu0
      %v4007 = vadd.f32 %v3883, %v4006
      %4008 = vmatmul.f32.gmra.mxu0 %v3894
      %v4009 = vpop.f32.mrf.mxu0
      %v4010 = vadd.f32 %v3883, %v4009
      %4011 = vmatmul.f32.gmra.mxu0 %v3897
      %v4012 = vpop.f32.mrf.mxu0
      %v4013 = vadd.f32 %v3883, %v4012
      %4014 = vmatmul.f32.gmra.mxu0 %v3900
      %v4015 = vpop.f32.mrf.mxu0
      %v4016 = vadd.f32 %v3883, %v4015
      %4017 = vmatmul.f32.gmra.mxu0 %v3903
      %v4018 = vpop.f32.mrf.mxu0
      %v4019 = vadd.f32 %v3883, %v4018
      %4020 = vmatmul.f32.gmra.mxu0 %v3906
      %v4021 = vpop.f32.mrf.mxu0
      %v4022 = vadd.f32 %v3883, %v4021
      %4023 = vmatmul.f32.gmra.mxu0 %v3909
      %v4024 = vpop.f32.mrf.mxu0
      %v4025 = vadd.f32 %v3883, %v4024
      %4026 = vmatmul.f32.gmra.mxu0 %v3912
      %v4027 = vpop.f32.mrf.mxu0
      %v4028 = vadd.f32 %v3883, %v4027
      %4029 = vmatmul.f32.gmra.mxu0 %v3915
      %v4030 = vpop.f32.mrf.mxu0
      %v4031 = vadd.f32 %v3883, %v4030
      %4032 = vmatmul.f32.gmra.mxu0 %v3918
      %v4033 = vpop.f32.mrf.mxu0
      %v4034 = vadd.f32 %v3883, %v4033
      %4035 = vmatmul.f32.gmra.mxu0 %v3921
      %v4036 = vpop.f32.mrf.mxu0
      %v4037 = vadd.f32 %v3883, %v4036
      %4038 = vmatmul.f32.gmra.mxu0 %v3924
      %v4039 = vpop.f32.mrf.mxu0
      %v4040 = vadd.f32 %v3883, %v4039
      %4041 = vmatmul.f32.gmra.mxu0 %v3927
      %v4042 = vpop.f32.mrf.mxu0
      %v4043 = vadd.f32 %v3883, %v4042
      %4044 = vmatmul.f32.gmra.mxu0 %v3930
      %v4045 = vpop.f32.mrf.mxu0
      %v4046 = vadd.f32 %v3883, %v4045
      %4047 = vmatmul.f32.gmra.mxu0 %v3933
      %v4048 = vpop.f32.mrf.mxu0
      %v4049 = vadd.f32 %v3883, %v4048
      %4050 = vmatmul.f32.gmra.mxu0 %v3936
      %v4051 = vpop.f32.mrf.mxu0
      %v4052 = vadd.f32 %v3883, %v4051
      %4053 = vmatmul.f32.gmra.mxu0 %v3939
      %v4054 = vpop.f32.mrf.mxu0
      %v4055 = vadd.f32 %v3883, %v4054
      %4056 = vmatmul.f32.gmra.mxu0 %v3942
      %v4057 = vpop.f32.mrf.mxu0
      %v4058 = vadd.f32 %v3883, %v4057
      %4059 = vmatmul.f32.gmra.mxu0 %v3945
      %v4060 = vpop.f32.mrf.mxu0
      %v4061 = vadd.f32 %v3883, %v4060
      %4062 = vmatmul.f32.gmra.mxu0 %v3948
      %v4063 = vpop.f32.mrf.mxu0
      %v4064 = vadd.f32 %v3883, %v4063
      %4065 = vmatmul.f32.gmra.mxu0 %v3951
      %v4066 = vpop.f32.mrf.mxu0
      %v4067 = vadd.f32 %v3883, %v4066
      %4068 = vmatmul.f32.gmra.mxu0 %v3954
      %v4069 = vpop.f32.mrf.mxu0
      %v4070 = vadd.f32 %v3883, %v4069
      %4071 = vmatmul.f32.gmra.mxu0 %v3957
      %v4072 = vpop.f32.mrf.mxu0
      %v4073 = vadd.f32 %v3883, %v4072
      %4074 = vmatmul.f32.gmra.mxu0 %v3960
      %v4075 = vpop.f32.mrf.mxu0
      %v4076 = vadd.f32 %v3883, %v4075
      %4077 = vmatmul.f32.gmra.mxu0 %v3963
      %v4078 = vpop.f32.mrf.mxu0
      %v4079 = vadd.f32 %v3883, %v4078
      %4080 = vmatmul.f32.gmra.mxu0 %v3966
      %v4081 = vpop.f32.mrf.mxu0
      %v4082 = vadd.f32 %v3883, %v4081
      %4083 = vmatmul.f32.gmra.mxu0 %v3969
      %v4084 = vpop.f32.mrf.mxu0
      %v4085 = vadd.f32 %v3883, %v4084
      %4086 = vmatmul.f32.gmra.mxu0 %v3972
      %v4087 = vpop.f32.mrf.mxu0
      %v4088 = vadd.f32 %v3883, %v4087
      %4089 = vmatmul.f32.gmra.mxu0 %v3975
      %v4090 = vpop.f32.mrf.mxu0
      %v4091 = vadd.f32 %v3883, %v4090
      %4092 = vmatmul.f32.gmra.mxu0 %v3978
      %v4093 = vpop.f32.mrf.mxu0
      %v4094 = vadd.f32 %v3883, %v4093
      %4095 = vdwg.mxu0
      %v4096 = vadd.f32 %v4001, %v198
      %v4097 = vadd.f32 %v4004, %v199
      %v4098 = vadd.f32 %v4007, %v200
      %v4099 = vadd.f32 %v4010, %v201
      %v4100 = vadd.f32 %v4013, %v202
      %v4101 = vadd.f32 %v4016, %v203
      %v4102 = vadd.f32 %v4019, %v204
      %v4103 = vadd.f32 %v4022, %v205
      %v4104 = vadd.f32 %v4025, %v206
      %v4105 = vadd.f32 %v4028, %v207
      %v4106 = vadd.f32 %v4031, %v208
      %v4107 = vadd.f32 %v4034, %v209
      %v4108 = vadd.f32 %v4037, %v210
      %v4109 = vadd.f32 %v4040, %v211
      %v4110 = vadd.f32 %v4043, %v212
      %v4111 = vadd.f32 %v4046, %v213
      %v4112 = vadd.f32 %v4049, %v214
      %v4113 = vadd.f32 %v4052, %v215
      %v4114 = vadd.f32 %v4055, %v216
      %v4115 = vadd.f32 %v4058, %v217
      %v4116 = vadd.f32 %v4061, %v218
      %v4117 = vadd.f32 %v4064, %v219
      %v4118 = vadd.f32 %v4067, %v220
      %v4119 = vadd.f32 %v4070, %v221
      %v4120 = vadd.f32 %v4073, %v222
      %v4121 = vadd.f32 %v4076, %v223
      %v4122 = vadd.f32 %v4079, %v224
      %v4123 = vadd.f32 %v4082, %v225
      %v4124 = vadd.f32 %v4085, %v226
      %v4125 = vadd.f32 %v4088, %v227
      %v4126 = vadd.f32 %v4091, %v228
      %v4127 = vadd.f32 %v4094, %v229
      %v4128 = vmax.f32 %v4096, 0.0
      %v4129 = vmax.f32 %v4097, 0.0
      %v4130 = vmax.f32 %v4098, 0.0
      %v4131 = vmax.f32 %v4099, 0.0
      %v4132 = vmax.f32 %v4100, 0.0
      %v4133 = vmax.f32 %v4101, 0.0
      %v4134 = vmax.f32 %v4102, 0.0
      %v4135 = vmax.f32 %v4103, 0.0
      %v4136 = vmax.f32 %v4104, 0.0
      %v4137 = vmax.f32 %v4105, 0.0
      %v4138 = vmax.f32 %v4106, 0.0
      %v4139 = vmax.f32 %v4107, 0.0
      %v4140 = vmax.f32 %v4108, 0.0
      %v4141 = vmax.f32 %v4109, 0.0
      %v4142 = vmax.f32 %v4110, 0.0
      %v4143 = vmax.f32 %v4111, 0.0
      %v4144 = vmax.f32 %v4112, 0.0
      %v4145 = vmax.f32 %v4113, 0.0
      %v4146 = vmax.f32 %v4114, 0.0
      %v4147 = vmax.f32 %v4115, 0.0
      %v4148 = vmax.f32 %v4116, 0.0
      %v4149 = vmax.f32 %v4117, 0.0
      %v4150 = vmax.f32 %v4118, 0.0
      %v4151 = vmax.f32 %v4119, 0.0
      %v4152 = vmax.f32 %v4120, 0.0
      %v4153 = vmax.f32 %v4121, 0.0
      %v4154 = vmax.f32 %v4122, 0.0
      %v4155 = vmax.f32 %v4123, 0.0
      %v4156 = vmax.f32 %v4124, 0.0
      %v4157 = vmax.f32 %v4125, 0.0
      %v4158 = vmax.f32 %v4126, 0.0
      %v4159 = vmax.f32 %v4127, 0.0
      %4160 = vst.msk [vmem:[%s197] sm:$0xff] %vm230, %v4128
      %4161 = vst.msk [vmem:[%s197 + $0x8] sm:$0xff] %vm230, %v4129
      %4162 = vst.msk [vmem:[%s197 + $0x10] sm:$0xff] %vm230, %v4130
      %4163 = vst.msk [vmem:[%s197 + $0x18] sm:$0xff] %vm230, %v4131
      %4164 = vst.msk [vmem:[%s197 + $0x20] sm:$0xff] %vm230, %v4132
      %4165 = vst.msk [vmem:[%s197 + $0x28] sm:$0xff] %vm230, %v4133
      %4166 = vst.msk [vmem:[%s197 + $0x30] sm:$0xff] %vm230, %v4134
      %4167 = vst.msk [vmem:[%s197 + $0x38] sm:$0xff] %vm230, %v4135
      %4168 = vst.msk [vmem:[%s197 + $0x40] sm:$0xff] %vm230, %v4136
      %4169 = vst.msk [vmem:[%s197 + $0x48] sm:$0xff] %vm230, %v4137
      %4170 = vst.msk [vmem:[%s197 + $0x50] sm:$0xff] %vm230, %v4138
      %4171 = vst.msk [vmem:[%s197 + $0x58] sm:$0xff] %vm230, %v4139
      %4172 = vst.msk [vmem:[%s197 + $0x60] sm:$0xff] %vm230, %v4140
      %4173 = vst.msk [vmem:[%s197 + $0x68] sm:$0xff] %vm230, %v4141
      %4174 = vst.msk [vmem:[%s197 + $0x70] sm:$0xff] %vm230, %v4142
      %4175 = vst.msk [vmem:[%s197 + $0x78] sm:$0xff] %vm230, %v4143
      %4176 = vst.msk [vmem:[%s197 + $0x80] sm:$0xff] %vm230, %v4144
      %4177 = vst.msk [vmem:[%s197 + $0x88] sm:$0xff] %vm230, %v4145
      %4178 = vst.msk [vmem:[%s197 + $0x90] sm:$0xff] %vm230, %v4146
      %4179 = vst.msk [vmem:[%s197 + $0x98] sm:$0xff] %vm230, %v4147
      %4180 = vst.msk [vmem:[%s197 + $0xa0] sm:$0xff] %vm230, %v4148
      %4181 = vst.msk [vmem:[%s197 + $0xa8] sm:$0xff] %vm230, %v4149
      %4182 = vst.msk [vmem:[%s197 + $0xb0] sm:$0xff] %vm230, %v4150
      %4183 = vst.msk [vmem:[%s197 + $0xb8] sm:$0xff] %vm230, %v4151
      %4184 = vst.msk [vmem:[%s197 + $0xc0] sm:$0xff] %vm230, %v4152
      %4185 = vst.msk [vmem:[%s197 + $0xc8] sm:$0xff] %vm230, %v4153
      %4186 = vst.msk [vmem:[%s197 + $0xd0] sm:$0xff] %vm230, %v4154
      %4187 = vst.msk [vmem:[%s197 + $0xd8] sm:$0xff] %vm230, %v4155
      %4188 = vst.msk [vmem:[%s197 + $0xe0] sm:$0xff] %vm230, %v4156
      %4189 = vst.msk [vmem:[%s197 + $0xe8] sm:$0xff] %vm230, %v4157
      %4190 = vst.msk [vmem:[%s197 + $0xf0] sm:$0xff] %vm230, %v4158
      %4191 = vst.msk [vmem:[%s197 + $0xf8] sm:$0xff] %vm230, %v4159
      %p4192 = scmp.lt.s32.totalorder %s15, 1
      %s4193 = scalar_select %p4192, %s15, 1
      %s4194 = smul.addr %s4193, 32
      %s4195 = smul.addr %s4194, 8
      %s4196 = scalar_lea.vmem %s4, %s4195
      // Predicated region
      $region37: #{tpu_custom_call.1} parent=35 // pred_check
        %p4197 = pneg %p122
      $region38: #{tpu_custom_call.1} parent=35 // pred_check_branch
        %4199 = sbr.rel (%p4197) target = $region40
      $region39: #{tpu_custom_call.1} parent=35 // pred_region
        _
      $region40: #{tpu_custom_call.1} parent=35 // pred_fallthru
        _
    $region36: #{tpu_custom_call.1} parent=5 // pred_fallthru
      _
    %p4200 = scmp.le.s32.totalorder 2, %s10
    // Predicated region
    $region41: #{tpu_custom_call.1} parent=5 // pred_check
      %p4201 = pneg %p4200
    $region42: #{tpu_custom_call.1} parent=5 // pred_check_branch
      %4203 = sbr.rel (%p4201) target = $region44
    $region43: #{tpu_custom_call.1} parent=5 // pred_region
      %s4204 = ssub.s32 %s10, 2
      // Predicated region
      $region45: #{tpu_custom_call.1} parent=43 // pred_check
        %p4205 = pneg %p128
      $region46: #{tpu_custom_call.1} parent=43 // pred_check_branch
        %4207 = sbr.rel (%p4205) target = $region48
      $region47: #{tpu_custom_call.1} parent=43 // pred_region
        %p4208 = scmp.lt.s32.totalorder %s16, 1
        %s4209 = scalar_select %p4208, %s16, 1
        %s4210 = smul.addr %s4209, 32
        %s4211 = smul.addr %s4210, 8
        %s4212 = scalar_lea.vmem %s4, %s4211
      $region48: #{tpu_custom_call.1} parent=43 // pred_fallthru
        _
    $region44: #{tpu_custom_call.1} parent=5 // pred_fallthru
      _
  $region6: #{tpu_custom_call.1} parent=0 // loop_footer
    %s14 = sadd.s32 1, %s10
  $region7: #{tpu_custom_call.1} parent=0 // loop_footer_branch
    %9 = sbr.rel target = $region3
  $region8: #{tpu_custom_call.1} parent=0 // loop_exit
    _

</llo_original>
